<compile_context>
chip_gen: v6e
topology: v6e:2x2x1
jax: 0.10.0
libtpu: 0.0.40
codegen_flags: <defaults>
</compile_context>

<pallas_src>
import functools

import jax
import jax.numpy as jnp
from jax.experimental import pallas as pl
from jax.experimental.pallas import tpu as pltpu


def _round_up(x, m):
    return ((x + m - 1) // m) * m


def _cdiv(a, b):
    return (a + b - 1) // b


_WL = 8          # left-pad columns of the stride>1 scratch (sublane align)
_GUARD = 8       # guard rows of the stride==1 flat scratch
_CHUNK_PIX = 512  # target pixels (matmul M) per in-kernel compute chunk


# ---------------------------------------------------------------------------
# Fused kernel.  One grid step = one image; all intermediates stay in VMEM.
# ---------------------------------------------------------------------------
def _fused_block_kernel(x_ref, w1_ref, b1_ref, w2_ref, b2_ref, w3_ref, b3_ref,
                        o_ref, zbuf_ref, *, H, W, Ho, Wo, stride, residual,
                        rows_a, rows_b):
    cdt = w1_ref.dtype                      # MXU compute dtype (bf16 / f32)
    C2p = w1_ref.shape[1]                   # lane-padded hidden width
    w1v, w3v = w1_ref[...], w3_ref[...]
    b1v, b2v, b3v = b1_ref[...], b2_ref[...], b3_ref[...]

    # ---- zero only the scratch halo (interior fully overwritten below) ----
    if stride == 1:
        G = _GUARD
        zrows = zbuf_ref.shape[0]
        zbuf_ref[0:G + W, :] = jnp.zeros((G + W, C2p), cdt)          # guard+top
        tail = G + (H + 1) * W
        zbuf_ref[tail:zrows, :] = jnp.zeros((zrows - tail, C2p), cdt)  # bottom+guard
    else:
        Wt = zbuf_ref.shape[1]
        zbuf_ref[0:1, :, :] = jnp.zeros((1, Wt, C2p), cdt)
        zbuf_ref[H + 1:H + 2, :, :] = jnp.zeros((1, Wt, C2p), cdt)
        zbuf_ref[:, _WL - 1:_WL, :] = jnp.zeros((H + 2, 1, C2p), cdt)
        zbuf_ref[:, _WL + W:_WL + W + 1, :] = jnp.zeros((H + 2, 1, C2p), cdt)

    # ---- phase A: conv1 (1x1) + BN + ReLU, row-chunked into the scratch ----
    for ci in range(_cdiv(H, rows_a)):
        i0 = ci * rows_a
        ni = min(rows_a, H - i0)
        xa = x_ref[i0 * W:(i0 + ni) * W, :]
        z1 = jnp.dot(xa.astype(cdt), w1v, preferred_element_type=jnp.float32)
        z1 = jnp.maximum(z1 + b1v, 0.0).astype(cdt)
        if stride == 1:
            s0 = _GUARD + (i0 + 1) * W
            zbuf_ref[s0:s0 + ni * W, :] = z1
        else:
            zbuf_ref[1 + i0:1 + i0 + ni, _WL:_WL + W, :] = z1.reshape(ni, W, C2p)

    # ---- phase B: conv2 (implicit GEMM) + BN + ReLU, conv3 + BN (+x), store
    for co in range(_cdiv(Ho, rows_b)):
        r0 = co * rows_b
        nr = min(rows_b, Ho - r0)
        M2 = nr * Wo

        if stride == 1:
            # Each tap's LHS is a contiguous (M2, C2p) slice of the flat
            # scratch; kw=0 / kw=2 contributions are masked on the image's
            # left / right edge columns (the "virtual" zero padding).
            accL = accC = accR = None
            for kh in range(3):
                row0 = _GUARD + (r0 + kh) * W
                for kw in range(3):
                    start = row0 + kw - 1
                    d = jnp.dot(zbuf_ref[start:start + M2, :],
                                w2_ref[kh * 3 + kw],
                                preferred_element_type=jnp.float32)
                    if kw == 0:
                        accL = d if accL is None else accL + d
                    elif kw == 1:
                        accC = d if accC is None else accC + d
                    else:
                        accR = d if accR is None else accR + d
            col = jax.lax.broadcasted_iota(jnp.int32, (nr, W, 1), 1)
            col = col.reshape(M2, 1)
            z2 = (accC + jnp.where(col != 0, accL, 0.0)
                       + jnp.where(col != W - 1, accR, 0.0))
        else:
            acc = None
            for kh in range(3):
                for kw in range(3):
                    patch = zbuf_ref[pl.ds(r0 * stride + kh, nr, stride=stride),
                                     pl.ds(_WL - 1 + kw, Wo, stride=stride), :]
                    d = jnp.dot(patch.reshape(M2, C2p), w2_ref[kh * 3 + kw],
                                preferred_element_type=jnp.float32)
                    acc = d if acc is None else acc + d
            z2 = acc

        z2 = jnp.maximum(z2 + b2v, 0.0).astype(cdt)
        z3 = jnp.dot(z2, w3v, preferred_element_type=jnp.float32) + b3v
        if residual:
            z3 = z3 + x_ref[r0 * W:r0 * W + M2, :].astype(jnp.float32)
        o_ref[r0 * Wo:r0 * Wo + M2, :] = z3.astype(o_ref.dtype)


# ---------------------------------------------------------------------------
# One-time parameter preparation: fold inference-mode BN into weights, pad
# channels to lane multiples, cast to the MXU compute dtype.
# ---------------------------------------------------------------------------
def prepare_block_params(params, *, compute_dtype=jnp.bfloat16):
    w1, w2, w3 = params["w1"], params["w2"], params["w3"]
    C2, C = w1.shape[0], w1.shape[1]
    out_ch = w3.shape[0]
    Cp = _round_up(C, 128)
    C2p = _round_up(C2, 128)
    out_chp = _round_up(out_ch, 128)

    # conv1: (C2, C, 1, 1) OIHW -> (Cp, C2p), BN scale folded into columns.
    w1m = w1.reshape(C2, C).T * params["s1"][None, :]
    w1m = jnp.pad(w1m, ((0, Cp - C), (0, C2p - C2))).astype(compute_dtype)
    b1 = jnp.pad(params["b1"].reshape(1, C2),
                 ((0, 0), (0, C2p - C2))).astype(jnp.float32)

    # conv2: (C2, C2, 3, 3) OIHW -> 9 per-tap (C2p, C2p) matrices.
    w2m = jnp.transpose(w2, (2, 3, 1, 0)) * params["s2"][None, None, None, :]
    w2m = w2m.reshape(9, C2, C2)
    w2m = jnp.pad(w2m, ((0, 0), (0, C2p - C2), (0, C2p - C2)))
    w2m = w2m.astype(compute_dtype)
    b2 = jnp.pad(params["b2"].reshape(1, C2),
                 ((0, 0), (0, C2p - C2))).astype(jnp.float32)

    # conv3: (out, C2, 1, 1) OIHW -> (C2p, out_chp), BN scale folded in.
    w3m = w3.reshape(out_ch, C2).T * params["s3"][None, :]
    w3m = jnp.pad(w3m, ((0, C2p - C2), (0, out_chp - out_ch)))
    w3m = w3m.astype(compute_dtype)
    b3 = jnp.pad(params["b3"].reshape(1, out_ch),
                 ((0, 0), (0, out_chp - out_ch))).astype(jnp.float32)

    # out_ch is a plain Python int: pass `prep` by closure (not as a traced
    # jit argument) so it stays static.
    return dict(w1=w1m, b1=b1, w2=w2m, b2=b2, w3=w3m, b3=b3, out_ch=out_ch)


# ---------------------------------------------------------------------------
# NHWC-native forward (preferred entry point).
# ---------------------------------------------------------------------------
def residual_block_forward_nhwc(x_nhwc, prep, stride):
    N, H, W, C = x_nhwc.shape
    Cp, C2p = prep["w1"].shape
    out_chp = prep["w3"].shape[1]
    out_ch = prep["out_ch"]
    act_dtype = prep["w1"].dtype
    residual = (C == out_ch) and (stride == 1)

    Ho = (H - 1) // stride + 1
    Wo = (W - 1) // stride + 1

    x = x_nhwc.reshape(N, H * W, C)
    if C != Cp:
        x = jnp.pad(x, ((0, 0), (0, 0), (0, Cp - C)))
    if x.dtype != act_dtype:
        x = x.astype(act_dtype)     # carry activations in bf16 through HBM

    rows_a = max(1, min(H, _CHUNK_PIX // max(W, 1)))
    rows_b = max(1, min(Ho, _CHUNK_PIX // max(Wo, 1)))

    if stride == 1:
        scratch = pltpu.VMEM((_GUARD + (H + 2) * W + _GUARD, C2p), act_dtype)
        scratch_elems = (_GUARD * 2 + (H + 2) * W) * C2p
    else:
        scratch = pltpu.VMEM((H + 2, W + _WL + 1, C2p), act_dtype)
        scratch_elems = (H + 2) * (W + _WL + 1) * C2p

    kernel = functools.partial(
        _fused_block_kernel, H=H, W=W, Ho=Ho, Wo=Wo, stride=stride,
        residual=residual, rows_a=rows_a, rows_b=rows_b)

    act_bytes = jnp.dtype(act_dtype).itemsize
    wt_elems = Cp * C2p + 9 * C2p * C2p + C2p * out_chp
    est = (2 * H * W * Cp * act_bytes            # input block, double-buffered
           + 2 * Ho * Wo * out_chp * act_bytes   # output block, double-buffered
           + 2 * wt_elems * act_bytes            # weights
           + scratch_elems * act_bytes           # conv1 scratch
           + 8 * rows_b * max(Wo, 1) * max(C2p, out_chp) * 4  # f32 chunk temps
           + (4 << 20))
    try:
        cap = int(getattr(pltpu.get_tpu_info(), "vmem_capacity_bytes",
                          64 << 20))
    except Exception:                                    # pragma: no cover
        cap = 64 << 20
    vmem_limit = int(min(max(est, 32 << 20), cap - (2 << 20)))

    flops = 2 * N * (H * W * Cp * C2p + 9 * Ho * Wo * C2p * C2p
                     + Ho * Wo * C2p * out_chp)
    bytes_accessed = ((N * H * W * Cp + N * Ho * Wo * out_chp) * act_bytes
                      + wt_elems * act_bytes)
    try:
        cost = pl.CostEstimate(flops=flops, transcendentals=0,
                               bytes_accessed=bytes_accessed)
    except Exception:                                    # pragma: no cover
        cost = None

    out = pl.pallas_call(
        kernel,
        out_shape=jax.ShapeDtypeStruct((N, Ho * Wo, out_chp), act_dtype),
        grid=(N,),
        in_specs=[
            pl.BlockSpec((None, H * W, Cp), lambda b: (b, 0, 0)),
            pl.BlockSpec((Cp, C2p), lambda b: (0, 0)),
            pl.BlockSpec((1, C2p), lambda b: (0, 0)),
            pl.BlockSpec((9, C2p, C2p), lambda b: (0, 0, 0)),
            pl.BlockSpec((1, C2p), lambda b: (0, 0)),
            pl.BlockSpec((C2p, out_chp), lambda b: (0, 0)),
            pl.BlockSpec((1, out_chp), lambda b: (0, 0)),
        ],
        out_specs=pl.BlockSpec((None, Ho * Wo, out_chp), lambda b: (b, 0, 0)),
        scratch_shapes=[scratch],
        compiler_params=pltpu.CompilerParams(
            dimension_semantics=("parallel",),
            vmem_limit_bytes=vmem_limit),
        cost_estimate=cost,
    )(x, prep["w1"], prep["b1"], prep["w2"], prep["b2"],
      prep["w3"], prep["b3"])

    if out_ch != out_chp:
        out = out[:, :, :out_ch]
    return out.reshape(N, Ho, Wo, out_ch)


# ---------------------------------------------------------------------------
# PyTorch-NCHW compatibility wrapper.
# TODO(synk): keep the whole encoder in NHWC (and bf16) so these two boundary
#             transposes (one full HBM round-trip each) disappear.
# ---------------------------------------------------------------------------
def residual_block_forward(x_nchw, prep, stride):
    x = jnp.transpose(x_nchw, (0, 2, 3, 1))
    y = residual_block_forward_nhwc(x, prep, stride)
    return jnp.transpose(y, (0, 3, 1, 2))


# ---------------------------------------------------------------------------
# Pure-JAX reference (correctness check)
# ---------------------------------------------------------------------------
def _reference_forward(x, p, stride, residual):
    def conv(z, w, s, pad):
        return jax.lax.conv_general_dilated(
            z, w, (s, s), ((pad, pad), (pad, pad)),
            dimension_numbers=("NCHW", "OIHW", "NCHW"))

    def bn(z, scale, bias):
        return z * scale[None, :, None, None] + bias[None, :, None, None]

    r = jnp.maximum(bn(conv(x, p["w1"], 1, 0), p["s1"], p["b1"]), 0.0)
    r = jnp.maximum(bn(conv(r, p["w2"], stride, 1), p["s2"], p["b2"]), 0.0)
    r = bn(conv(r, p["w3"], 1, 0), p["s3"], p["b3"])
    if residual:
        r = x + r
    return r


if __name__ == "__main__":
    root = jax.random.PRNGKey(0)
    k_par1, k_x1, k_par2, k_x2 = jax.random.split(root, 4)
    eps = 1e-5

    def make_params(key, in_ch, out_ch):
        C2 = 2 * in_ch
        ks = jax.random.split(key, 15)

        def bn_fold(kg, kb, km, kv, C):
            gamma = 1.0 + 0.1 * jax.random.normal(kg, (C,), jnp.float32)
            beta = 0.1 * jax.random.normal(kb, (C,), jnp.float32)
            mean = 0.1 * jax.random.normal(km, (C,), jnp.float32)
            var = jax.random.uniform(kv, (C,), jnp.float32,
                                     minval=0.5, maxval=1.5)
            scale = gamma / jnp.sqrt(var + eps)
            return scale, beta - mean * scale

        w1 = 0.1 * jax.random.normal(ks[0], (C2, in_ch, 1, 1), jnp.float32)
        w2 = 0.1 * jax.random.normal(ks[1], (C2, C2, 3, 3), jnp.float32)
        w3 = 0.1 * jax.random.normal(ks[2], (out_ch, C2, 1, 1), jnp.float32)
        s1, b1 = bn_fold(ks[3], ks[4], ks[5], ks[6], C2)
        s2, b2 = bn_fold(ks[7], ks[8], ks[9], ks[10], C2)
        s3, b3 = bn_fold(ks[11], ks[12], ks[13], ks[14], out_ch)
        return dict(w1=w1, w2=w2, w3=w3, s1=s1, b1=b1, s2=s2, b2=b2,
                    s3=s3, b3=b3)

    # --- block 1: in==out, stride 1 (residual branch active) ---------------
    N, in_ch, out_ch, s, H, W = 2, 4, 4, 1, 16, 16
    params = make_params(k_par1, in_ch, out_ch)
    x = jax.random.normal(k_x1, (N, in_ch, H, W), jnp.float32)
    residual = (in_ch == out_ch) and (s == 1)

    prep32 = prepare_block_params(params, compute_dtype=jnp.float32)
    out32 = jax.block_until_ready(
        jax.jit(lambda t: residual_block_forward(t, prep32, s))(x))
    ref = _reference_forward(x, params, s, residual)
    assert out32.shape == ref.shape
    assert jnp.allclose(out32, ref, atol=1e-4, rtol=1e-4), "f32 mismatch"

    prep16 = prepare_block_params(params, compute_dtype=jnp.bfloat16)
    out16 = jax.block_until_ready(
        jax.jit(lambda t: residual_block_forward(t, prep16, s))(x))
    params16 = dict(params)
    for k in ("w1", "w2", "w3"):
        params16[k] = params[k].astype(jnp.bfloat16).astype(jnp.float32)
    x16 = x.astype(jnp.bfloat16).astype(jnp.float32)
    ref16 = _reference_forward(x16, params16, s, residual)
    assert jnp.allclose(out16.astype(jnp.float32), ref16,
                        atol=3e-2, rtol=3e-2), "bf16 mismatch"

    # --- block 2: stride 2, channel change (no residual branch) ------------
    N2, in2, out2, s2_, H2, W2 = 2, 4, 6, 2, 16, 16
    params2 = make_params(k_par2, in2, out2)
    x2 = jax.random.normal(k_x2, (N2, in2, H2, W2), jnp.float32)

    prep2 = prepare_block_params(params2, compute_dtype=jnp.float32)
    out2v = jax.block_until_ready(
        jax.jit(lambda t: residual_block_forward(t, prep2, s2_))(x2))
    ref2 = _reference_forward(x2, params2, s2_, False)
    assert out2v.shape == ref2.shape
    assert jnp.allclose(out2v, ref2, atol=1e-4, rtol=1e-4), "stride-2 mismatch"

    print("KERNEL_OK")
</pallas_src>

<mosaic_0001>
module attributes {stable_mosaic.version = 11 : i64} {
  func.func @_fused_block_kernel(%arg0: i32, %arg1: memref<1x256x128xf32, #tpu.memory_space<vmem>>, %arg2: memref<128x128xf32, #tpu.memory_space<vmem>>, %arg3: memref<1x128xf32, #tpu.memory_space<vmem>>, %arg4: memref<9x128x128xf32, #tpu.memory_space<vmem>>, %arg5: memref<1x128xf32, #tpu.memory_space<vmem>>, %arg6: memref<128x128xf32, #tpu.memory_space<vmem>>, %arg7: memref<1x128xf32, #tpu.memory_space<vmem>>, %arg8: memref<1x256x128xf32, #tpu.memory_space<vmem>>, %arg9: memref<304x128xf32, #tpu.memory_space<vmem>>) attributes {dimension_semantics = [#tpu.dimension_semantics<parallel>], iteration_bounds = array<i64: 2>, scalar_prefetch = 0 : i64, scratch_operands = 1 : i64, tpu.core_type = #tpu.core_type<tc>, window_params = [{transform_indices = @transform_0, window_bounds = array<i64: 1, 256, 128>}, {pipeline_mode = #tpu.pipeline_mode<synchronous>, transform_indices = @transform_1, window_bounds = array<i64: 128, 128>}, {pipeline_mode = #tpu.pipeline_mode<synchronous>, transform_indices = @transform_2, window_bounds = array<i64: 1, 128>}, {pipeline_mode = #tpu.pipeline_mode<synchronous>, transform_indices = @transform_3, window_bounds = array<i64: 9, 128, 128>}, {pipeline_mode = #tpu.pipeline_mode<synchronous>, transform_indices = @transform_4, window_bounds = array<i64: 1, 128>}, {pipeline_mode = #tpu.pipeline_mode<synchronous>, transform_indices = @transform_5, window_bounds = array<i64: 128, 128>}, {pipeline_mode = #tpu.pipeline_mode<synchronous>, transform_indices = @transform_6, window_bounds = array<i64: 1, 128>}, {transform_indices = @transform_7, window_bounds = array<i64: 1, 256, 128>}]} {
    %c0 = arith.constant 0 : index
    %c0_0 = arith.constant 0 : index
    %0 = vector.load %arg2[%c0, %c0_0] : memref<128x128xf32, #tpu.memory_space<vmem>>, vector<128x128xf32>
    %c0_1 = arith.constant 0 : index
    %c0_2 = arith.constant 0 : index
    %1 = vector.load %arg6[%c0_1, %c0_2] : memref<128x128xf32, #tpu.memory_space<vmem>>, vector<128x128xf32>
    %c0_3 = arith.constant 0 : index
    %c0_4 = arith.constant 0 : index
    %2 = vector.load %arg3[%c0_3, %c0_4] : memref<1x128xf32, #tpu.memory_space<vmem>>, vector<1x128xf32>
    %c0_5 = arith.constant 0 : index
    %c0_6 = arith.constant 0 : index
    %3 = vector.load %arg5[%c0_5, %c0_6] : memref<1x128xf32, #tpu.memory_space<vmem>>, vector<1x128xf32>
    %c0_7 = arith.constant 0 : index
    %c0_8 = arith.constant 0 : index
    %4 = vector.load %arg7[%c0_7, %c0_8] : memref<1x128xf32, #tpu.memory_space<vmem>>, vector<1x128xf32>
    %cst = arith.constant 0.000000e+00 : f32
    %5 = vector.broadcast %cst : f32 to vector<24x128xf32>
    %c0_9 = arith.constant 0 : index
    %c0_10 = arith.constant 0 : index
    %6 = vector.load %arg9[%c0_9, %c0_10] : memref<304x128xf32, #tpu.memory_space<vmem>>, vector<24x128xf32>
    tpu.vector_store %arg9[%c0_9, %c0_10], %5 {strides = array<i32>} : memref<304x128xf32, #tpu.memory_space<vmem>>, vector<24x128xf32>,
    %cst_11 = arith.constant 0.000000e+00 : f32
    %7 = vector.broadcast %cst_11 : f32 to vector<24x128xf32>
    %c280 = arith.constant 280 : index
    %c0_12 = arith.constant 0 : index
    %8 = vector.load %arg9[%c280, %c0_12] : memref<304x128xf32, #tpu.memory_space<vmem>>, vector<24x128xf32>
    tpu.vector_store %arg9[%c280, %c0_12], %7 {strides = array<i32>} : memref<304x128xf32, #tpu.memory_space<vmem>>, vector<24x128xf32>,
    %c0_13 = arith.constant 0 : index
    %c0_14 = arith.constant 0 : index
    %c0_15 = arith.constant 0 : index
    %9 = vector.load %arg1[%c0_13, %c0_14, %c0_15] : memref<1x256x128xf32, #tpu.memory_space<vmem>>, vector<1x256x128xf32>
    %10 = vector.shape_cast %9 : vector<1x256x128xf32> to vector<256x128xf32>
    %cst_16 = arith.constant dense<0.000000e+00> : vector<256x128xf32>
    %11 = tpu.matmul %10, %0, %cst_16 {dimension_numbers = #tpu.dot_dimension_numbers<[1], [0], [0], [1], [0, 0, 1, 1], [], []>} : vector<256x128xf32>, vector<128x128xf32>, vector<256x128xf32> -> vector<256x128xf32>
    %12 = vector.broadcast %2 : vector<1x128xf32> to vector<256x128xf32>
    %13 = arith.addf %11, %12 : vector<256x128xf32>
    %cst_17 = arith.constant 0.000000e+00 : f32
    %14 = vector.broadcast %cst_17 : f32 to vector<256x128xf32>
    %15 = arith.maximumf %13, %14 : vector<256x128xf32>
    %c24 = arith.constant 24 : index
    %c0_18 = arith.constant 0 : index
    %16 = vector.load %arg9[%c24, %c0_18] : memref<304x128xf32, #tpu.memory_space<vmem>>, vector<256x128xf32>
    tpu.vector_store %arg9[%c24, %c0_18], %15 {strides = array<i32>} : memref<304x128xf32, #tpu.memory_space<vmem>>, vector<256x128xf32>,
    %c7 = arith.constant 7 : index
    %c0_19 = arith.constant 0 : index
    %17 = vector.load %arg9[%c7, %c0_19] : memref<304x128xf32, #tpu.memory_space<vmem>>, vector<256x128xf32>
    %c0_20 = arith.constant 0 : index
    %c0_21 = arith.constant 0 : index
    %c0_22 = arith.constant 0 : index
    %18 = vector.load %arg4[%c0_20, %c0_21, %c0_22] : memref<9x128x128xf32, #tpu.memory_space<vmem>>, vector<1x128x128xf32>
    %19 = vector.shape_cast %18 : vector<1x128x128xf32> to vector<128x128xf32>
    %cst_23 = arith.constant dense<0.000000e+00> : vector<256x128xf32>
    %20 = tpu.matmul %17, %19, %cst_23 {dimension_numbers = #tpu.dot_dimension_numbers<[1], [0], [0], [1], [0, 0, 1, 1], [], []>} : vector<256x128xf32>, vector<128x128xf32>, vector<256x128xf32> -> vector<256x128xf32>
    %c8 = arith.constant 8 : index
    %c0_24 = arith.constant 0 : index
    %21 = vector.load %arg9[%c8, %c0_24] : memref<304x128xf32, #tpu.memory_space<vmem>>, vector<256x128xf32>
    %c1 = arith.constant 1 : index
    %c0_25 = arith.constant 0 : index
    %c0_26 = arith.constant 0 : index
    %22 = vector.load %arg4[%c1, %c0_25, %c0_26] : memref<9x128x128xf32, #tpu.memory_space<vmem>>, vector<1x128x128xf32>
    %23 = vector.shape_cast %22 : vector<1x128x128xf32> to vector<128x128xf32>
    %cst_27 = arith.constant dense<0.000000e+00> : vector<256x128xf32>
    %24 = tpu.matmul %21, %23, %cst_27 {dimension_numbers = #tpu.dot_dimension_numbers<[1], [0], [0], [1], [0, 0, 1, 1], [], []>} : vector<256x128xf32>, vector<128x128xf32>, vector<256x128xf32> -> vector<256x128xf32>
    %c9 = arith.constant 9 : index
    %c0_28 = arith.constant 0 : index
    %25 = vector.load %arg9[%c9, %c0_28] : memref<304x128xf32, #tpu.memory_space<vmem>>, vector<256x128xf32>
    %c2 = arith.constant 2 : index
    %c0_29 = arith.constant 0 : index
    %c0_30 = arith.constant 0 : index
    %26 = vector.load %arg4[%c2, %c0_29, %c0_30] : memref<9x128x128xf32, #tpu.memory_space<vmem>>, vector<1x128x128xf32>
    %27 = vector.shape_cast %26 : vector<1x128x128xf32> to vector<128x128xf32>
    %cst_31 = arith.constant dense<0.000000e+00> : vector<256x128xf32>
    %28 = tpu.matmul %25, %27, %cst_31 {dimension_numbers = #tpu.dot_dimension_numbers<[1], [0], [0], [1], [0, 0, 1, 1], [], []>} : vector<256x128xf32>, vector<128x128xf32>, vector<256x128xf32> -> vector<256x128xf32>
    %c23 = arith.constant 23 : index
    %c0_32 = arith.constant 0 : index
    %29 = vector.load %arg9[%c23, %c0_32] : memref<304x128xf32, #tpu.memory_space<vmem>>, vector<256x128xf32>
    %c3 = arith.constant 3 : index
    %c0_33 = arith.constant 0 : index
    %c0_34 = arith.constant 0 : index
    %30 = vector.load %arg4[%c3, %c0_33, %c0_34] : memref<9x128x128xf32, #tpu.memory_space<vmem>>, vector<1x128x128xf32>
    %31 = vector.shape_cast %30 : vector<1x128x128xf32> to vector<128x128xf32>
    %cst_35 = arith.constant dense<0.000000e+00> : vector<256x128xf32>
    %32 = tpu.matmul %29, %31, %cst_35 {dimension_numbers = #tpu.dot_dimension_numbers<[1], [0], [0], [1], [0, 0, 1, 1], [], []>} : vector<256x128xf32>, vector<128x128xf32>, vector<256x128xf32> -> vector<256x128xf32>
    %33 = arith.addf %20, %32 : vector<256x128xf32>
    %c24_36 = arith.constant 24 : index
    %c0_37 = arith.constant 0 : index
    %34 = vector.load %arg9[%c24_36, %c0_37] : memref<304x128xf32, #tpu.memory_space<vmem>>, vector<256x128xf32>
    %c4 = arith.constant 4 : index
    %c0_38 = arith.constant 0 : index
    %c0_39 = arith.constant 0 : index
    %35 = vector.load %arg4[%c4, %c0_38, %c0_39] : memref<9x128x128xf32, #tpu.memory_space<vmem>>, vector<1x128x128xf32>
    %36 = vector.shape_cast %35 : vector<1x128x128xf32> to vector<128x128xf32>
    %cst_40 = arith.constant dense<0.000000e+00> : vector<256x128xf32>
    %37 = tpu.matmul %34, %36, %cst_40 {dimension_numbers = #tpu.dot_dimension_numbers<[1], [0], [0], [1], [0, 0, 1, 1], [], []>} : vector<256x128xf32>, vector<128x128xf32>, vector<256x128xf32> -> vector<256x128xf32>
    %38 = arith.addf %24, %37 : vector<256x128xf32>
    %c25 = arith.constant 25 : index
    %c0_41 = arith.constant 0 : index
    %39 = vector.load %arg9[%c25, %c0_41] : memref<304x128xf32, #tpu.memory_space<vmem>>, vector<256x128xf32>
    %c5 = arith.constant 5 : index
    %c0_42 = arith.constant 0 : index
    %c0_43 = arith.constant 0 : index
    %40 = vector.load %arg4[%c5, %c0_42, %c0_43] : memref<9x128x128xf32, #tpu.memory_space<vmem>>, vector<1x128x128xf32>
    %41 = vector.shape_cast %40 : vector<1x128x128xf32> to vector<128x128xf32>
    %cst_44 = arith.constant dense<0.000000e+00> : vector<256x128xf32>
    %42 = tpu.matmul %39, %41, %cst_44 {dimension_numbers = #tpu.dot_dimension_numbers<[1], [0], [0], [1], [0, 0, 1, 1], [], []>} : vector<256x128xf32>, vector<128x128xf32>, vector<256x128xf32> -> vector<256x128xf32>
    %43 = arith.addf %28, %42 : vector<256x128xf32>
    %c39 = arith.constant 39 : index
    %c0_45 = arith.constant 0 : index
    %44 = vector.load %arg9[%c39, %c0_45] : memref<304x128xf32, #tpu.memory_space<vmem>>, vector<256x128xf32>
    %c6 = arith.constant 6 : index
    %c0_46 = arith.constant 0 : index
    %c0_47 = arith.constant 0 : index
    %45 = vector.load %arg4[%c6, %c0_46, %c0_47] : memref<9x128x128xf32, #tpu.memory_space<vmem>>, vector<1x128x128xf32>
    %46 = vector.shape_cast %45 : vector<1x128x128xf32> to vector<128x128xf32>
    %cst_48 = arith.constant dense<0.000000e+00> : vector<256x128xf32>
    %47 = tpu.matmul %44, %46, %cst_48 {dimension_numbers = #tpu.dot_dimension_numbers<[1], [0], [0], [1], [0, 0, 1, 1], [], []>} : vector<256x128xf32>, vector<128x128xf32>, vector<256x128xf32> -> vector<256x128xf32>
    %48 = arith.addf %33, %47 : vector<256x128xf32>
    %c40 = arith.constant 40 : index
    %c0_49 = arith.constant 0 : index
    %49 = vector.load %arg9[%c40, %c0_49] : memref<304x128xf32, #tpu.memory_space<vmem>>, vector<256x128xf32>
    %c7_50 = arith.constant 7 : index
    %c0_51 = arith.constant 0 : index
    %c0_52 = arith.constant 0 : index
    %50 = vector.load %arg4[%c7_50, %c0_51, %c0_52] : memref<9x128x128xf32, #tpu.memory_space<vmem>>, vector<1x128x128xf32>
    %51 = vector.shape_cast %50 : vector<1x128x128xf32> to vector<128x128xf32>
    %cst_53 = arith.constant dense<0.000000e+00> : vector<256x128xf32>
    %52 = tpu.matmul %49, %51, %cst_53 {dimension_numbers = #tpu.dot_dimension_numbers<[1], [0], [0], [1], [0, 0, 1, 1], [], []>} : vector<256x128xf32>, vector<128x128xf32>, vector<256x128xf32> -> vector<256x128xf32>
    %53 = arith.addf %38, %52 : vector<256x128xf32>
    %c41 = arith.constant 41 : index
    %c0_54 = arith.constant 0 : index
    %54 = vector.load %arg9[%c41, %c0_54] : memref<304x128xf32, #tpu.memory_space<vmem>>, vector<256x128xf32>
    %c8_55 = arith.constant 8 : index
    %c0_56 = arith.constant 0 : index
    %c0_57 = arith.constant 0 : index
    %55 = vector.load %arg4[%c8_55, %c0_56, %c0_57] : memref<9x128x128xf32, #tpu.memory_space<vmem>>, vector<1x128x128xf32>
    %56 = vector.shape_cast %55 : vector<1x128x128xf32> to vector<128x128xf32>
    %cst_58 = arith.constant dense<0.000000e+00> : vector<256x128xf32>
    %57 = tpu.matmul %54, %56, %cst_58 {dimension_numbers = #tpu.dot_dimension_numbers<[1], [0], [0], [1], [0, 0, 1, 1], [], []>} : vector<256x128xf32>, vector<128x128xf32>, vector<256x128xf32> -> vector<256x128xf32>
    %58 = arith.addf %43, %57 : vector<256x128xf32>
    %59 = tpu.iota {dimensions = array<i32: 1>} : vector<16x16x1xi32>
    %60 = vector.shape_cast %59 : vector<16x16x1xi32> to vector<256x1xi32>
    %c0_i32 = arith.constant 0 : i32
    %61 = vector.broadcast %c0_i32 : i32 to vector<256x1xi32>
    %62 = arith.cmpi ne, %60, %61 : vector<256x1xi32>
    %cst_59 = arith.constant 0.000000e+00 : f32
    %63 = vector.shape_cast %62 : vector<256x1xi1> to vector<256x1xi1>
    %64 = vector.broadcast %63 : vector<256x1xi1> to vector<256x128xi1>
    %65 = vector.broadcast %cst_59 : f32 to vector<256x128xf32>
    %66 = arith.select %64, %48, %65 : vector<256x128xi1>, vector<256x128xf32>
    %67 = arith.addf %53, %66 : vector<256x128xf32>
    %c15_i32 = arith.constant 15 : i32
    %68 = vector.broadcast %c15_i32 : i32 to vector<256x1xi32>
    %69 = arith.cmpi ne, %60, %68 : vector<256x1xi32>
    %cst_60 = arith.constant 0.000000e+00 : f32
    %70 = vector.shape_cast %69 : vector<256x1xi1> to vector<256x1xi1>
    %71 = vector.broadcast %70 : vector<256x1xi1> to vector<256x128xi1>
    %72 = vector.broadcast %cst_60 : f32 to vector<256x128xf32>
    %73 = arith.select %71, %58, %72 : vector<256x128xi1>, vector<256x128xf32>
    %74 = arith.addf %67, %73 : vector<256x128xf32>
    %75 = vector.broadcast %3 : vector<1x128xf32> to vector<256x128xf32>
    %76 = arith.addf %74, %75 : vector<256x128xf32>
    %cst_61 = arith.constant 0.000000e+00 : f32
    %77 = vector.broadcast %cst_61 : f32 to vector<256x128xf32>
    %78 = arith.maximumf %76, %77 : vector<256x128xf32>
    %cst_62 = arith.constant dense<0.000000e+00> : vector<256x128xf32>
    %79 = tpu.matmul %78, %1, %cst_62 {dimension_numbers = #tpu.dot_dimension_numbers<[1], [0], [0], [1], [0, 0, 1, 1], [], []>} : vector<256x128xf32>, vector<128x128xf32>, vector<256x128xf32> -> vector<256x128xf32>
    %80 = vector.broadcast %4 : vector<1x128xf32> to vector<256x128xf32>
    %81 = arith.addf %79, %80 : vector<256x128xf32>
    %c0_63 = arith.constant 0 : index
    %c0_64 = arith.constant 0 : index
    %c0_65 = arith.constant 0 : index
    %82 = vector.load %arg1[%c0_63, %c0_64, %c0_65] : memref<1x256x128xf32, #tpu.memory_space<vmem>>, vector<1x256x128xf32>
    %83 = vector.shape_cast %82 : vector<1x256x128xf32> to vector<256x128xf32>
    %84 = arith.addf %81, %83 : vector<256x128xf32>
    %c0_66 = arith.constant 0 : index
    %c0_67 = arith.constant 0 : index
    %c0_68 = arith.constant 0 : index
    %85 = vector.load %arg8[%c0_66, %c0_67, %c0_68] : memref<1x256x128xf32, #tpu.memory_space<vmem>>, vector<1x256x128xf32>
    %86 = vector.shape_cast %85 : vector<1x256x128xf32> to vector<256x128xf32>
    %87 = vector.shape_cast %84 : vector<256x128xf32> to vector<1x256x128xf32>
    tpu.vector_store %arg8[%c0_66, %c0_67, %c0_68], %87 {strides = array<i32>} : memref<1x256x128xf32, #tpu.memory_space<vmem>>, vector<1x256x128xf32>,
    return
  }
  func.func @transform_0(%arg0: i32) -> (i32, i32, i32) {
    %c0_i32 = arith.constant 0 : i32
    %c0_i32_0 = arith.constant 0 : i32
    %c0_i32_1 = arith.constant 0 : i32
    return %arg0, %c0_i32, %c0_i32_0 : i32, i32, i32
  }
  func.func @transform_1(%arg0: i32) -> (i32, i32) {
    %c0_i32 = arith.constant 0 : i32
    %c0_i32_0 = arith.constant 0 : i32
    %c0_i32_1 = arith.constant 0 : i32
    return %c0_i32, %c0_i32_0 : i32, i32
  }
  func.func @transform_2(%arg0: i32) -> (i32, i32) {
    %c0_i32 = arith.constant 0 : i32
    %c0_i32_0 = arith.constant 0 : i32
    %c0_i32_1 = arith.constant 0 : i32
    return %c0_i32, %c0_i32_0 : i32, i32
  }
  func.func @transform_3(%arg0: i32) -> (i32, i32, i32) {
    %c0_i32 = arith.constant 0 : i32
    %c0_i32_0 = arith.constant 0 : i32
    %c0_i32_1 = arith.constant 0 : i32
    %c0_i32_2 = arith.constant 0 : i32
    return %c0_i32, %c0_i32_0, %c0_i32_1 : i32, i32, i32
  }
  func.func @transform_4(%arg0: i32) -> (i32, i32) {
    %c0_i32 = arith.constant 0 : i32
    %c0_i32_0 = arith.constant 0 : i32
    %c0_i32_1 = arith.constant 0 : i32
    return %c0_i32, %c0_i32_0 : i32, i32
  }
  func.func @transform_5(%arg0: i32) -> (i32, i32) {
    %c0_i32 = arith.constant 0 : i32
    %c0_i32_0 = arith.constant 0 : i32
    %c0_i32_1 = arith.constant 0 : i32
    return %c0_i32, %c0_i32_0 : i32, i32
  }
  func.func @transform_6(%arg0: i32) -> (i32, i32) {
    %c0_i32 = arith.constant 0 : i32
    %c0_i32_0 = arith.constant 0 : i32
    %c0_i32_1 = arith.constant 0 : i32
    return %c0_i32, %c0_i32_0 : i32, i32
  }
  func.func @transform_7(%arg0: i32) -> (i32, i32, i32) {
    %c0_i32 = arith.constant 0 : i32
    %c0_i32_0 = arith.constant 0 : i32
    %c0_i32_1 = arith.constant 0 : i32
    return %arg0, %c0_i32, %c0_i32_0 : i32, i32, i32
  }
}

</mosaic_0001>

<llo_original>
// kernel: _lambda_.1
$region0: #{_lambda_.1}
  #allocation0 [shape = 'u32[]', space=smem, size = 0x4, offset = 0x4, fixed_abs, tag = 'smem constant byte address 0x4 - core index']
  #allocation1 [shape = 'u32[144,128]{1,0:T(1,128)}', space=vmem, size = 0x12000, scoped, tag = 'internal scratch']
  #allocation2 [shape = 'f32[304,128]{1,0:T(8,128)}', space=vmem, size = 0x26000, scoped, tag = 'scratch operand']
  %s0 = inlined_call_operand.vmem [shape: f32[2,256,128], index: 0, kind: input, shape index: {}]
  %s1 = inlined_call_operand.vmem [shape: f32[128,128], index: 1, kind: input, shape index: {}]
  %s2 = inlined_call_operand.vmem [shape: f32[1,128], index: 2, kind: input, shape index: {}]
  %s3 = inlined_call_operand.vmem [shape: f32[9,128,128], index: 3, kind: input, shape index: {}]
  %s4 = inlined_call_operand.vmem [shape: f32[1,128], index: 4, kind: input, shape index: {}]
  %s5 = inlined_call_operand.vmem [shape: f32[128,128], index: 5, kind: input, shape index: {}]
  %s6 = inlined_call_operand.vmem [shape: f32[1,128], index: 6, kind: input, shape index: {}]
  %s7 = inlined_call_operand.vmem [shape: f32[2,256,128], index: 7, kind: output, shape index: {}]
  %s8 = sld [smem:[#allocation0]]
  $region61: #{_lambda_.1} parent=0
    _
  %s10 = ssub.s32 1, %s8
  %s11 = scalar_select 0, %s10, %s8
  loop: start=0, step=1, limit=4
  $region2: #{_lambda_.1} parent=0 // loop_pre_header
    _
  $region3: #{_lambda_.1} parent=0 // loop_header
    %s13 = sphi 0, %s17
    %p14 = scmp.ge.s32.totalorder %s13, 4
    %s23 = sphi 0, %s25
    %s26 = sphi 0, %s23
    %s27 = sphi 0, %s26
    %s43 = sphi 0, %s27
    %s47 = sphi 0, %s47
    %s49 = sphi 0, %s47
    %s50 = sphi 0, %s49
    %s64 = sphi 0, %s50
    %s68 = sphi 0, %s68
    %s70 = sphi 0, %s68
    %s71 = sphi 0, %s70
    %s85 = sphi 0, %s71
    %s89 = sphi 0, %s89
    %s91 = sphi 0, %s89
    %s92 = sphi 0, %s91
    %s106 = sphi 0, %s92
    %s110 = sphi 0, %s110
    %s112 = sphi 0, %s110
    %s113 = sphi 0, %s112
    %s127 = sphi 0, %s113
    %s131 = sphi 0, %s131
    %s133 = sphi 0, %s131
    %s134 = sphi 0, %s133
    %s148 = sphi 0, %s134
    %s152 = sphi 0, %s152
    %s154 = sphi 0, %s152
    %s155 = sphi 0, %s154
    %s169 = sphi 0, %s155
    %s175 = sphi 0, %s177
    %s178 = sphi 0, %s175
    %s179 = sphi 0, %s178
    %s195 = sphi 0, %s179
  $region4: #{_lambda_.1} parent=0 // loop_header_branch
    %16 = sbr.rel (%p14) target = $region8
  $region5: #{_lambda_.1} parent=0 // loop_body
    %s18 = ssub.s32 %s13, 1
    %s19 = ssub.s32 %s13, 2
    %s20 = sadd.s32 %s13, 1
    %s21 = ssub.s32 %s13, %s20
    %p22 = scmp.eq.s32.totalorder %s21, 0
    %s24 = sadd.s32 %s23, 1
    %s25 = scalar_select %p22, %s23, %s24
    %p28 = pneg %p22
    %p29 = scmp.eq.s32.totalorder %s13, 1
    %p30 = por %p28, %p29
    %p31 = scmp.ne.s32.totalorder %s23, %s26
    %p32 = scmp.eq.s32.totalorder %s13, 0
    %p33 = por %p31, %p32
    %p34 = scmp.ne.s32.totalorder %s23, %s26
    %p35 = scmp.eq.s32.totalorder %s18, 1
    %p36 = por %p34, %p35
    %p37 = scmp.ne.s32.totalorder %s26, %s27
    %p38 = scmp.eq.s32.totalorder %s18, 0
    %p39 = por %p37, %p38
    %p40 = scmp.ne.s32.totalorder %s26, %s27
    %p41 = scmp.eq.s32.totalorder %s19, 1
    %p42 = por %p40, %p41
    %p44 = scmp.ne.s32.totalorder %s27, %s43
    %p45 = scmp.eq.s32.totalorder %s19, 0
    %p46 = por %p44, %p45
    %s48 = sadd.s32 %s47, 1
    %p51 = scmp.eq.s32.totalorder %s13, 1
    %p52 = scmp.ne.s32.totalorder %s47, %s49
    %p53 = scmp.eq.s32.totalorder %s13, 0
    %p54 = por %p52, %p53
    %p55 = scmp.ne.s32.totalorder %s47, %s49
    %p56 = scmp.eq.s32.totalorder %s18, 1
    %p57 = por %p55, %p56
    %p58 = scmp.ne.s32.totalorder %s49, %s50
    %p59 = scmp.eq.s32.totalorder %s18, 0
    %p60 = por %p58, %p59
    %p61 = scmp.ne.s32.totalorder %s49, %s50
    %p62 = scmp.eq.s32.totalorder %s19, 1
    %p63 = por %p61, %p62
    %p65 = scmp.ne.s32.totalorder %s50, %s64
    %p66 = scmp.eq.s32.totalorder %s19, 0
    %p67 = por %p65, %p66
    %s69 = sadd.s32 %s68, 1
    %p72 = scmp.eq.s32.totalorder %s13, 1
    %p73 = scmp.ne.s32.totalorder %s68, %s70
    %p74 = scmp.eq.s32.totalorder %s13, 0
    %p75 = por %p73, %p74
    %p76 = scmp.ne.s32.totalorder %s68, %s70
    %p77 = scmp.eq.s32.totalorder %s18, 1
    %p78 = por %p76, %p77
    %p79 = scmp.ne.s32.totalorder %s70, %s71
    %p80 = scmp.eq.s32.totalorder %s18, 0
    %p81 = por %p79, %p80
    %p82 = scmp.ne.s32.totalorder %s70, %s71
    %p83 = scmp.eq.s32.totalorder %s19, 1
    %p84 = por %p82, %p83
    %p86 = scmp.ne.s32.totalorder %s71, %s85
    %p87 = scmp.eq.s32.totalorder %s19, 0
    %p88 = por %p86, %p87
    %s90 = sadd.s32 %s89, 1
    %p93 = scmp.eq.s32.totalorder %s13, 1
    %p94 = scmp.ne.s32.totalorder %s89, %s91
    %p95 = scmp.eq.s32.totalorder %s13, 0
    %p96 = por %p94, %p95
    %p97 = scmp.ne.s32.totalorder %s89, %s91
    %p98 = scmp.eq.s32.totalorder %s18, 1
    %p99 = por %p97, %p98
    %p100 = scmp.ne.s32.totalorder %s91, %s92
    %p101 = scmp.eq.s32.totalorder %s18, 0
    %p102 = por %p100, %p101
    %p103 = scmp.ne.s32.totalorder %s91, %s92
    %p104 = scmp.eq.s32.totalorder %s19, 1
    %p105 = por %p103, %p104
    %p107 = scmp.ne.s32.totalorder %s92, %s106
    %p108 = scmp.eq.s32.totalorder %s19, 0
    %p109 = por %p107, %p108
    %s111 = sadd.s32 %s110, 1
    %p114 = scmp.eq.s32.totalorder %s13, 1
    %p115 = scmp.ne.s32.totalorder %s110, %s112
    %p116 = scmp.eq.s32.totalorder %s13, 0
    %p117 = por %p115, %p116
    %p118 = scmp.ne.s32.totalorder %s110, %s112
    %p119 = scmp.eq.s32.totalorder %s18, 1
    %p120 = por %p118, %p119
    %p121 = scmp.ne.s32.totalorder %s112, %s113
    %p122 = scmp.eq.s32.totalorder %s18, 0
    %p123 = por %p121, %p122
    %p124 = scmp.ne.s32.totalorder %s112, %s113
    %p125 = scmp.eq.s32.totalorder %s19, 1
    %p126 = por %p124, %p125
    %p128 = scmp.ne.s32.totalorder %s113, %s127
    %p129 = scmp.eq.s32.totalorder %s19, 0
    %p130 = por %p128, %p129
    %s132 = sadd.s32 %s131, 1
    %p135 = scmp.eq.s32.totalorder %s13, 1
    %p136 = scmp.ne.s32.totalorder %s131, %s133
    %p137 = scmp.eq.s32.totalorder %s13, 0
    %p138 = por %p136, %p137
    %p139 = scmp.ne.s32.totalorder %s131, %s133
    %p140 = scmp.eq.s32.totalorder %s18, 1
    %p141 = por %p139, %p140
    %p142 = scmp.ne.s32.totalorder %s133, %s134
    %p143 = scmp.eq.s32.totalorder %s18, 0
    %p144 = por %p142, %p143
    %p145 = scmp.ne.s32.totalorder %s133, %s134
    %p146 = scmp.eq.s32.totalorder %s19, 1
    %p147 = por %p145, %p146
    %p149 = scmp.ne.s32.totalorder %s134, %s148
    %p150 = scmp.eq.s32.totalorder %s19, 0
    %p151 = por %p149, %p150
    %s153 = sadd.s32 %s152, 1
    %p156 = scmp.eq.s32.totalorder %s13, 1
    %p157 = scmp.ne.s32.totalorder %s152, %s154
    %p158 = scmp.eq.s32.totalorder %s13, 0
    %p159 = por %p157, %p158
    %p160 = scmp.ne.s32.totalorder %s152, %s154
    %p161 = scmp.eq.s32.totalorder %s18, 1
    %p162 = por %p160, %p161
    %p163 = scmp.ne.s32.totalorder %s154, %s155
    %p164 = scmp.eq.s32.totalorder %s18, 0
    %p165 = por %p163, %p164
    %p166 = scmp.ne.s32.totalorder %s154, %s155
    %p167 = scmp.eq.s32.totalorder %s19, 1
    %p168 = por %p166, %p167
    %p170 = scmp.ne.s32.totalorder %s155, %s169
    %p171 = scmp.eq.s32.totalorder %s19, 0
    %p172 = por %p170, %p171
    %s173 = ssub.s32 %s13, %s20
    %p174 = scmp.eq.s32.totalorder %s173, 0
    %s176 = sadd.s32 %s175, 1
    %s177 = scalar_select %p174, %s175, %s176
    %p180 = pneg %p174
    %p181 = scmp.eq.s32.totalorder %s13, 1
    %p182 = por %p180, %p181
    %p183 = scmp.ne.s32.totalorder %s175, %s178
    %p184 = scmp.eq.s32.totalorder %s13, 0
    %p185 = por %p183, %p184
    %p186 = scmp.ne.s32.totalorder %s175, %s178
    %p187 = scmp.eq.s32.totalorder %s18, 1
    %p188 = por %p186, %p187
    %p189 = scmp.ne.s32.totalorder %s178, %s179
    %p190 = scmp.eq.s32.totalorder %s18, 0
    %p191 = por %p189, %p190
    %p192 = scmp.ne.s32.totalorder %s178, %s179
    %p193 = scmp.eq.s32.totalorder %s19, 1
    %p194 = por %p192, %p193
    %p196 = scmp.ne.s32.totalorder %s179, %s195
    %p197 = scmp.eq.s32.totalorder %s19, 0
    %p198 = por %p196, %p197
    %p199 = scmp.le.s32.totalorder 1, %s13
    %p200 = scmp.lt.s32.totalorder %s13, 3
    %p201 = pnand %p199, %p200
    %p202 = pneg %p201
    // Predicated region
    $region9: #{_lambda_.1} parent=5 // pred_check
      _
    $region10: #{_lambda_.1} parent=5 // pred_check_branch
      %204 = sbr.rel (%p201) target = $region12
    $region11: #{_lambda_.1} parent=5 // pred_region
      %s205 = ssub.s32 %s13, 1
      // Predicated region
      $region13: #{_lambda_.1} parent=11 // pred_check
        %p206 = pneg %p60
      $region14: #{_lambda_.1} parent=11 // pred_check_branch
        %208 = sbr.rel (%p206) target = $region16
      $region15: #{_lambda_.1} parent=11 // pred_region
        _
      $region16: #{_lambda_.1} parent=11 // pred_fallthru
        _
      // Predicated region
      $region17: #{_lambda_.1} parent=11 // pred_check
        %p209 = pneg %p81
      $region18: #{_lambda_.1} parent=11 // pred_check_branch
        %211 = sbr.rel (%p209) target = $region20
      $region19: #{_lambda_.1} parent=11 // pred_region
        _
      $region20: #{_lambda_.1} parent=11 // pred_fallthru
        _
      // Predicated region
      $region21: #{_lambda_.1} parent=11 // pred_check
        %p212 = pneg %p102
      $region22: #{_lambda_.1} parent=11 // pred_check_branch
        %214 = sbr.rel (%p212) target = $region24
      $region23: #{_lambda_.1} parent=11 // pred_region
        _
      $region24: #{_lambda_.1} parent=11 // pred_fallthru
        _
      // Predicated region
      $region25: #{_lambda_.1} parent=11 // pred_check
        %p215 = pneg %p123
      $region26: #{_lambda_.1} parent=11 // pred_check_branch
        %217 = sbr.rel (%p215) target = $region28
      $region27: #{_lambda_.1} parent=11 // pred_region
        _
      $region28: #{_lambda_.1} parent=11 // pred_fallthru
        _
      // Predicated region
      $region29: #{_lambda_.1} parent=11 // pred_check
        %p218 = pneg %p144
      $region30: #{_lambda_.1} parent=11 // pred_check_branch
        %220 = sbr.rel (%p218) target = $region32
      $region31: #{_lambda_.1} parent=11 // pred_region
        _
      $region32: #{_lambda_.1} parent=11 // pred_fallthru
        _
      // Predicated region
      $region33: #{_lambda_.1} parent=11 // pred_check
        %p221 = pneg %p165
      $region34: #{_lambda_.1} parent=11 // pred_check_branch
        %223 = sbr.rel (%p221) target = $region36
      $region35: #{_lambda_.1} parent=11 // pred_region
        _
      $region36: #{_lambda_.1} parent=11 // pred_fallthru
        _
    $region12: #{_lambda_.1} parent=5 // pred_fallthru
      _
    %p224 = scmp.lt.s32.totalorder %s13, 2
    // Predicated region
    $region37: #{_lambda_.1} parent=5 // pred_check
      %p225 = pneg %p224
    $region38: #{_lambda_.1} parent=5 // pred_check_branch
      %227 = sbr.rel (%p225) target = $region40
    $region39: #{_lambda_.1} parent=5 // pred_region
      // Predicated region
      $region41: #{_lambda_.1} parent=39 // pred_check
        %p228 = pneg %p33
      $region42: #{_lambda_.1} parent=39 // pred_check_branch
        %230 = sbr.rel (%p228) target = $region44
      $region43: #{_lambda_.1} parent=39 // pred_region
        %p231 = scmp.lt.s32.totalorder %s13, 1
        %s232 = scalar_select %p231, %s13, 1
        %s233 = smul.addr %s232, 32
        %s234 = smul.addr %s233, 8
        %s235 = scalar_lea.vmem %s0, %s234
      $region44: #{_lambda_.1} parent=39 // pred_fallthru
        _
    $region40: #{_lambda_.1} parent=5 // pred_fallthru
      _
    %p236 = scmp.le.s32.totalorder 1, %s13
    %p237 = scmp.lt.s32.totalorder %s13, 3
    %p238 = pnand %p236, %p237
    %p239 = pneg %p238
    // Predicated region
    $region45: #{_lambda_.1} parent=5 // pred_check
      _
    $region46: #{_lambda_.1} parent=5 // pred_check_branch
      %241 = sbr.rel (%p238) target = $region48
    $region47: #{_lambda_.1} parent=5 // pred_region
      %s242 = ssub.s32 %s13, 1
      %p243 = scmp.lt.s32.totalorder %s18, 1
      %s244 = scalar_select %p243, %s18, 1
      %s245 = smul.addr %s244, 32
      %s246 = smul.addr %s245, 8
      %s247 = scalar_lea.vmem %s0, %s246
      %p248 = pneg %p39
      %p249 = pneg %p36
      %p250 = pneg %p60
      %p251 = pneg %p57
      %p252 = pneg %p81
      %p253 = pneg %p78
      %p254 = pneg %p102
      %p255 = pneg %p99
      %p256 = pneg %p123
      %p257 = pneg %p120
      %p258 = pneg %p144
      %p259 = pneg %p141
      %p260 = pneg %p165
      %p261 = pneg %p162
      %p262 = pneg %p191
      %p263 = pneg %p188
      %p264 = scmp.lt.s32.totalorder %s18, 1
      %s265 = scalar_select %p264, %s18, 1
      %s266 = smul.addr %s265, 32
      %s267 = smul.addr %s266, 8
      %s268 = scalar_lea.vmem %s7, %s267
      %p269 = scmp.lt.s32.totalorder %s18, 1
      %s270 = scalar_select %p269, %s18, 1
      %s271 = smul.addr %s270, 32
      %s272 = smul.addr %s271, 8
      %s273 = scalar_lea.vmem %s0, %s272
      %p274 = scmp.lt.s32.totalorder %s18, 1
      %s275 = scalar_select %p274, %s18, 1
      %s276 = smul.addr %s275, 32
      %s277 = smul.addr %s276, 8
      %s278 = scalar_lea.vmem %s7, %s277
      %v279 = vld [vmem:[%s1] sm:$0xff]
      %v280 = vld [vmem:[%s1 + $0x8] sm:$0xff]
      %v281 = vld [vmem:[%s1 + $0x10] sm:$0xff]
      %v282 = vld [vmem:[%s1 + $0x18] sm:$0xff]
      %v283 = vld [vmem:[%s1 + $0x20] sm:$0xff]
      %v284 = vld [vmem:[%s1 + $0x28] sm:$0xff]
      %v285 = vld [vmem:[%s1 + $0x30] sm:$0xff]
      %v286 = vld [vmem:[%s1 + $0x38] sm:$0xff]
      %v287 = vld [vmem:[%s1 + $0x40] sm:$0xff]
      %v288 = vld [vmem:[%s1 + $0x48] sm:$0xff]
      %v289 = vld [vmem:[%s1 + $0x50] sm:$0xff]
      %v290 = vld [vmem:[%s1 + $0x58] sm:$0xff]
      %v291 = vld [vmem:[%s1 + $0x60] sm:$0xff]
      %v292 = vld [vmem:[%s1 + $0x68] sm:$0xff]
      %v293 = vld [vmem:[%s1 + $0x70] sm:$0xff]
      %v294 = vld [vmem:[%s1 + $0x78] sm:$0xff]
      %v295 = vld [vmem:[%s5] sm:$0xff]
      %v296 = vld [vmem:[%s5 + $0x8] sm:$0xff]
      %v297 = vld [vmem:[%s5 + $0x10] sm:$0xff]
      %v298 = vld [vmem:[%s5 + $0x18] sm:$0xff]
      %v299 = vld [vmem:[%s5 + $0x20] sm:$0xff]
      %v300 = vld [vmem:[%s5 + $0x28] sm:$0xff]
      %v301 = vld [vmem:[%s5 + $0x30] sm:$0xff]
      %v302 = vld [vmem:[%s5 + $0x38] sm:$0xff]
      %v303 = vld [vmem:[%s5 + $0x40] sm:$0xff]
      %v304 = vld [vmem:[%s5 + $0x48] sm:$0xff]
      %v305 = vld [vmem:[%s5 + $0x50] sm:$0xff]
      %v306 = vld [vmem:[%s5 + $0x58] sm:$0xff]
      %v307 = vld [vmem:[%s5 + $0x60] sm:$0xff]
      %v308 = vld [vmem:[%s5 + $0x68] sm:$0xff]
      %v309 = vld [vmem:[%s5 + $0x70] sm:$0xff]
      %v310 = vld [vmem:[%s5 + $0x78] sm:$0xff]
      %v311 = vld [vmem:[%s2] sm:$0x1]
      %v312 = vld [vmem:[%s4] sm:$0x1]
      %v313 = vld [vmem:[%s6] sm:$0x1]
      %314 = vst [vmem:[#allocation2] sm:$0xff] 0.0
      %315 = vst [vmem:[#allocation2 + $0x8] sm:$0xff] 0.0
      %316 = vst [vmem:[#allocation2 + $0x10] sm:$0xff] 0.0
      %317 = vst [vmem:[#allocation2 + $0x118] sm:$0xff] 0.0
      %318 = vst [vmem:[#allocation2 + $0x120] sm:$0xff] 0.0
      %319 = vst [vmem:[#allocation2 + $0x128] sm:$0xff] 0.0
      %v320 = vld [vmem:[%s273] sm:$0xff]
      %v321 = vld [vmem:[%s273 + $0x8] sm:$0xff]
      %v322 = vld [vmem:[%s273 + $0x10] sm:$0xff]
      %v323 = vld [vmem:[%s273 + $0x18] sm:$0xff]
      %v324 = vld [vmem:[%s273 + $0x20] sm:$0xff]
      %v325 = vld [vmem:[%s273 + $0x28] sm:$0xff]
      %v326 = vld [vmem:[%s273 + $0x30] sm:$0xff]
      %v327 = vld [vmem:[%s273 + $0x38] sm:$0xff]
      %v328 = vld [vmem:[%s273 + $0x40] sm:$0xff]
      %v329 = vld [vmem:[%s273 + $0x48] sm:$0xff]
      %v330 = vld [vmem:[%s273 + $0x50] sm:$0xff]
      %v331 = vld [vmem:[%s273 + $0x58] sm:$0xff]
      %v332 = vld [vmem:[%s273 + $0x60] sm:$0xff]
      %v333 = vld [vmem:[%s273 + $0x68] sm:$0xff]
      %v334 = vld [vmem:[%s273 + $0x70] sm:$0xff]
      %v335 = vld [vmem:[%s273 + $0x78] sm:$0xff]
      %v336 = vld [vmem:[%s273 + $0x80] sm:$0xff]
      %v337 = vld [vmem:[%s273 + $0x88] sm:$0xff]
      %v338 = vld [vmem:[%s273 + $0x90] sm:$0xff]
      %v339 = vld [vmem:[%s273 + $0x98] sm:$0xff]
      %v340 = vld [vmem:[%s273 + $0xa0] sm:$0xff]
      %v341 = vld [vmem:[%s273 + $0xa8] sm:$0xff]
      %v342 = vld [vmem:[%s273 + $0xb0] sm:$0xff]
      %v343 = vld [vmem:[%s273 + $0xb8] sm:$0xff]
      %v344 = vld [vmem:[%s273 + $0xc0] sm:$0xff]
      %v345 = vld [vmem:[%s273 + $0xc8] sm:$0xff]
      %v346 = vld [vmem:[%s273 + $0xd0] sm:$0xff]
      %v347 = vld [vmem:[%s273 + $0xd8] sm:$0xff]
      %v348 = vld [vmem:[%s273 + $0xe0] sm:$0xff]
      %v349 = vld [vmem:[%s273 + $0xe8] sm:$0xff]
      %v350 = vld [vmem:[%s273 + $0xf0] sm:$0xff]
      %v351 = vld [vmem:[%s273 + $0xf8] sm:$0xff]
      %v353 = vlaneseq
      %v354 = vshrl.u32 %v353, 7
      %v355 = vsub.s32 0, %v354
      %v356 = vrot.slane %v311, %v355
      %358 = vmatprep.subr.mxu0 0.0
      %359 = vmatpush1.msra.mxu0 %v294
      %360 = vmatprep.subr.mxu0 0.0
      %361 = vmatpush1.msra.mxu0 %v293
      %362 = vmatprep.subr.mxu0 0.0
      %363 = vmatpush1.msra.mxu0 %v292
      %364 = vmatprep.subr.mxu0 0.0
      %365 = vmatpush1.msra.mxu0 %v291
      %366 = vmatprep.subr.mxu0 0.0
      %367 = vmatpush1.msra.mxu0 %v290
      %368 = vmatprep.subr.mxu0 0.0
      %369 = vmatpush1.msra.mxu0 %v289
      %370 = vmatprep.subr.mxu0 0.0
      %371 = vmatpush1.msra.mxu0 %v288
      %372 = vmatprep.subr.mxu0 0.0
      %373 = vmatpush1.msra.mxu0 %v287
      %374 = vmatprep.subr.mxu0 0.0
      %375 = vmatpush1.msra.mxu0 %v286
      %376 = vmatprep.subr.mxu0 0.0
      %377 = vmatpush1.msra.mxu0 %v285
      %378 = vmatprep.subr.mxu0 0.0
      %379 = vmatpush1.msra.mxu0 %v284
      %380 = vmatprep.subr.mxu0 0.0
      %381 = vmatpush1.msra.mxu0 %v283
      %382 = vmatprep.subr.mxu0 0.0
      %383 = vmatpush1.msra.mxu0 %v282
      %384 = vmatprep.subr.mxu0 0.0
      %385 = vmatpush1.msra.mxu0 %v281
      %386 = vmatprep.subr.mxu0 0.0
      %387 = vmatpush1.msra.mxu0 %v280
      %388 = vmatprep.subr.mxu0 0.0
      %389 = vmatpush1.msra.mxu0 %v279
      %390 = vmatprep.subr.mxu0 0.0
      %391 = vmatpush2.msra.mxu0 0.0
      %392 = vmatprep.subr.mxu0 0.0
      %393 = vmatpush2.msra.mxu0 0.0
      %394 = vmatprep.subr.mxu0 0.0
      %395 = vmatpush2.msra.mxu0 0.0
      %396 = vmatprep.subr.mxu0 0.0
      %397 = vmatpush2.msra.mxu0 0.0
      %398 = vmatprep.subr.mxu0 0.0
      %399 = vmatpush2.msra.mxu0 0.0
      %400 = vmatprep.subr.mxu0 0.0
      %401 = vmatpush2.msra.mxu0 0.0
      %402 = vmatprep.subr.mxu0 0.0
      %403 = vmatpush2.msra.mxu0 0.0
      %404 = vmatprep.subr.mxu0 0.0
      %405 = vmatpush2.msra.mxu0 0.0
      %406 = vmatprep.subr.mxu0 0.0
      %407 = vmatpush2.msra.mxu0 0.0
      %408 = vmatprep.subr.mxu0 0.0
      %409 = vmatpush2.msra.mxu0 0.0
      %410 = vmatprep.subr.mxu0 0.0
      %411 = vmatpush2.msra.mxu0 0.0
      %412 = vmatprep.subr.mxu0 0.0
      %413 = vmatpush2.msra.mxu0 0.0
      %414 = vmatprep.subr.mxu0 0.0
      %415 = vmatpush2.msra.mxu0 0.0
      %416 = vmatprep.subr.mxu0 0.0
      %417 = vmatpush2.msra.mxu0 0.0
      %418 = vmatprep.subr.mxu0 0.0
      %419 = vmatpush2.msra.mxu0 0.0
      %420 = vmatprep.subr.mxu0 0.0
      %421 = vmatpush2.msra.mxu0 0.0
      %422 = vmatprep.mubr.f32.mxu0 0.0
      %423 = vmatmul.mubr.f32.gmra.mxu0 %v320
      %v424 = vpop.f32.mrf.mxu0
      %v425 = vadd.f32 %v356, %v424
      %v426 = vpop.f32.mrf.mxu0
      %427 = vmatprep.mubr.f32.mxu0 0.0
      %428 = vmatmul.mubr.f32.gmra.mxu0 %v321
      %v429 = vpop.f32.mrf.mxu0
      %v430 = vadd.f32 %v356, %v429
      %v431 = vpop.f32.mrf.mxu0
      %432 = vmatprep.mubr.f32.mxu0 0.0
      %433 = vmatmul.mubr.f32.gmra.mxu0 %v322
      %v434 = vpop.f32.mrf.mxu0
      %v435 = vadd.f32 %v356, %v434
      %v436 = vpop.f32.mrf.mxu0
      %437 = vmatprep.mubr.f32.mxu0 0.0
      %438 = vmatmul.mubr.f32.gmra.mxu0 %v323
      %v439 = vpop.f32.mrf.mxu0
      %v440 = vadd.f32 %v356, %v439
      %v441 = vpop.f32.mrf.mxu0
      %442 = vmatprep.mubr.f32.mxu0 0.0
      %443 = vmatmul.mubr.f32.gmra.mxu0 %v324
      %v444 = vpop.f32.mrf.mxu0
      %v445 = vadd.f32 %v356, %v444
      %v446 = vpop.f32.mrf.mxu0
      %447 = vmatprep.mubr.f32.mxu0 0.0
      %448 = vmatmul.mubr.f32.gmra.mxu0 %v325
      %v449 = vpop.f32.mrf.mxu0
      %v450 = vadd.f32 %v356, %v449
      %v451 = vpop.f32.mrf.mxu0
      %452 = vmatprep.mubr.f32.mxu0 0.0
      %453 = vmatmul.mubr.f32.gmra.mxu0 %v326
      %v454 = vpop.f32.mrf.mxu0
      %v455 = vadd.f32 %v356, %v454
      %v456 = vpop.f32.mrf.mxu0
      %457 = vmatprep.mubr.f32.mxu0 0.0
      %458 = vmatmul.mubr.f32.gmra.mxu0 %v327
      %v459 = vpop.f32.mrf.mxu0
      %v460 = vadd.f32 %v356, %v459
      %v461 = vpop.f32.mrf.mxu0
      %462 = vmatprep.mubr.f32.mxu0 0.0
      %463 = vmatmul.mubr.f32.gmra.mxu0 %v328
      %v464 = vpop.f32.mrf.mxu0
      %v465 = vadd.f32 %v356, %v464
      %v466 = vpop.f32.mrf.mxu0
      %467 = vmatprep.mubr.f32.mxu0 0.0
      %468 = vmatmul.mubr.f32.gmra.mxu0 %v329
      %v469 = vpop.f32.mrf.mxu0
      %v470 = vadd.f32 %v356, %v469
      %v471 = vpop.f32.mrf.mxu0
      %472 = vmatprep.mubr.f32.mxu0 0.0
      %473 = vmatmul.mubr.f32.gmra.mxu0 %v330
      %v474 = vpop.f32.mrf.mxu0
      %v475 = vadd.f32 %v356, %v474
      %v476 = vpop.f32.mrf.mxu0
      %477 = vmatprep.mubr.f32.mxu0 0.0
      %478 = vmatmul.mubr.f32.gmra.mxu0 %v331
      %v479 = vpop.f32.mrf.mxu0
      %v480 = vadd.f32 %v356, %v479
      %v481 = vpop.f32.mrf.mxu0
      %482 = vmatprep.mubr.f32.mxu0 0.0
      %483 = vmatmul.mubr.f32.gmra.mxu0 %v332
      %v484 = vpop.f32.mrf.mxu0
      %v485 = vadd.f32 %v356, %v484
      %v486 = vpop.f32.mrf.mxu0
      %487 = vmatprep.mubr.f32.mxu0 0.0
      %488 = vmatmul.mubr.f32.gmra.mxu0 %v333
      %v489 = vpop.f32.mrf.mxu0
      %v490 = vadd.f32 %v356, %v489
      %v491 = vpop.f32.mrf.mxu0
      %492 = vmatprep.mubr.f32.mxu0 0.0
      %493 = vmatmul.mubr.f32.gmra.mxu0 %v334
      %v494 = vpop.f32.mrf.mxu0
      %v495 = vadd.f32 %v356, %v494
      %v496 = vpop.f32.mrf.mxu0
      %497 = vmatprep.mubr.f32.mxu0 0.0
      %498 = vmatmul.mubr.f32.gmra.mxu0 %v335
      %v499 = vpop.f32.mrf.mxu0
      %v500 = vadd.f32 %v356, %v499
      %v501 = vpop.f32.mrf.mxu0
      %502 = vmatprep.mubr.f32.mxu0 0.0
      %503 = vmatmul.mubr.f32.gmra.mxu0 %v336
      %v504 = vpop.f32.mrf.mxu0
      %v505 = vadd.f32 %v356, %v504
      %v506 = vpop.f32.mrf.mxu0
      %507 = vmatprep.mubr.f32.mxu0 0.0
      %508 = vmatmul.mubr.f32.gmra.mxu0 %v337
      %v509 = vpop.f32.mrf.mxu0
      %v510 = vadd.f32 %v356, %v509
      %v511 = vpop.f32.mrf.mxu0
      %512 = vmatprep.mubr.f32.mxu0 0.0
      %513 = vmatmul.mubr.f32.gmra.mxu0 %v338
      %v514 = vpop.f32.mrf.mxu0
      %v515 = vadd.f32 %v356, %v514
      %v516 = vpop.f32.mrf.mxu0
      %517 = vmatprep.mubr.f32.mxu0 0.0
      %518 = vmatmul.mubr.f32.gmra.mxu0 %v339
      %v519 = vpop.f32.mrf.mxu0
      %v520 = vadd.f32 %v356, %v519
      %v521 = vpop.f32.mrf.mxu0
      %522 = vmatprep.mubr.f32.mxu0 0.0
      %523 = vmatmul.mubr.f32.gmra.mxu0 %v340
      %v524 = vpop.f32.mrf.mxu0
      %v525 = vadd.f32 %v356, %v524
      %v526 = vpop.f32.mrf.mxu0
      %527 = vmatprep.mubr.f32.mxu0 0.0
      %528 = vmatmul.mubr.f32.gmra.mxu0 %v341
      %v529 = vpop.f32.mrf.mxu0
      %v530 = vadd.f32 %v356, %v529
      %v531 = vpop.f32.mrf.mxu0
      %532 = vmatprep.mubr.f32.mxu0 0.0
      %533 = vmatmul.mubr.f32.gmra.mxu0 %v342
      %v534 = vpop.f32.mrf.mxu0
      %v535 = vadd.f32 %v356, %v534
      %v536 = vpop.f32.mrf.mxu0
      %537 = vmatprep.mubr.f32.mxu0 0.0
      %538 = vmatmul.mubr.f32.gmra.mxu0 %v343
      %v539 = vpop.f32.mrf.mxu0
      %v540 = vadd.f32 %v356, %v539
      %v541 = vpop.f32.mrf.mxu0
      %542 = vmatprep.mubr.f32.mxu0 0.0
      %543 = vmatmul.mubr.f32.gmra.mxu0 %v344
      %v544 = vpop.f32.mrf.mxu0
      %v545 = vadd.f32 %v356, %v544
      %v546 = vpop.f32.mrf.mxu0
      %547 = vmatprep.mubr.f32.mxu0 0.0
      %548 = vmatmul.mubr.f32.gmra.mxu0 %v345
      %v549 = vpop.f32.mrf.mxu0
      %v550 = vadd.f32 %v356, %v549
      %v551 = vpop.f32.mrf.mxu0
      %552 = vmatprep.mubr.f32.mxu0 0.0
      %553 = vmatmul.mubr.f32.gmra.mxu0 %v346
      %v554 = vpop.f32.mrf.mxu0
      %v555 = vadd.f32 %v356, %v554
      %v556 = vpop.f32.mrf.mxu0
      %557 = vmatprep.mubr.f32.mxu0 0.0
      %558 = vmatmul.mubr.f32.gmra.mxu0 %v347
      %v559 = vpop.f32.mrf.mxu0
      %v560 = vadd.f32 %v356, %v559
      %v561 = vpop.f32.mrf.mxu0
      %562 = vmatprep.mubr.f32.mxu0 0.0
      %563 = vmatmul.mubr.f32.gmra.mxu0 %v348
      %v564 = vpop.f32.mrf.mxu0
      %v565 = vadd.f32 %v356, %v564
      %v566 = vpop.f32.mrf.mxu0
      %567 = vmatprep.mubr.f32.mxu0 0.0
      %568 = vmatmul.mubr.f32.gmra.mxu0 %v349
      %v569 = vpop.f32.mrf.mxu0
      %v570 = vadd.f32 %v356, %v569
      %v571 = vpop.f32.mrf.mxu0
      %572 = vmatprep.mubr.f32.mxu0 0.0
      %573 = vmatmul.mubr.f32.gmra.mxu0 %v350
      %v574 = vpop.f32.mrf.mxu0
      %v575 = vadd.f32 %v356, %v574
      %v576 = vpop.f32.mrf.mxu0
      %577 = vmatprep.mubr.f32.mxu0 0.0
      %578 = vmatmul.mubr.f32.gmra.mxu0 %v351
      %v579 = vpop.f32.mrf.mxu0
      %v580 = vadd.f32 %v356, %v579
      %v581 = vpop.f32.mrf.mxu0
      %582 = vdwg.mxu0
      %v583 = vmax.f32 %v425, 0.0
      %v584 = vmax.f32 %v430, 0.0
      %v585 = vmax.f32 %v435, 0.0
      %v586 = vmax.f32 %v440, 0.0
      %v587 = vmax.f32 %v445, 0.0
      %v588 = vmax.f32 %v450, 0.0
      %v589 = vmax.f32 %v455, 0.0
      %v590 = vmax.f32 %v460, 0.0
      %v591 = vmax.f32 %v465, 0.0
      %v592 = vmax.f32 %v470, 0.0
      %v593 = vmax.f32 %v475, 0.0
      %v594 = vmax.f32 %v480, 0.0
      %v595 = vmax.f32 %v485, 0.0
      %v596 = vmax.f32 %v490, 0.0
      %v597 = vmax.f32 %v495, 0.0
      %v598 = vmax.f32 %v500, 0.0
      %v599 = vmax.f32 %v505, 0.0
      %v600 = vmax.f32 %v510, 0.0
      %v601 = vmax.f32 %v515, 0.0
      %v602 = vmax.f32 %v520, 0.0
      %v603 = vmax.f32 %v525, 0.0
      %v604 = vmax.f32 %v530, 0.0
      %v605 = vmax.f32 %v535, 0.0
      %v606 = vmax.f32 %v540, 0.0
      %v607 = vmax.f32 %v545, 0.0
      %v608 = vmax.f32 %v550, 0.0
      %v609 = vmax.f32 %v555, 0.0
      %v610 = vmax.f32 %v560, 0.0
      %v611 = vmax.f32 %v565, 0.0
      %v612 = vmax.f32 %v570, 0.0
      %v613 = vmax.f32 %v575, 0.0
      %v614 = vmax.f32 %v580, 0.0
      %615 = vst [vmem:[#allocation2 + $0x18] sm:$0xff] %v583
      %616 = vst [vmem:[#allocation2 + $0x20] sm:$0xff] %v584
      %617 = vst [vmem:[#allocation2 + $0x28] sm:$0xff] %v585
      %618 = vst [vmem:[#allocation2 + $0x30] sm:$0xff] %v586
      %619 = vst [vmem:[#allocation2 + $0x38] sm:$0xff] %v587
      %620 = vst [vmem:[#allocation2 + $0x40] sm:$0xff] %v588
      %621 = vst [vmem:[#allocation2 + $0x48] sm:$0xff] %v589
      %622 = vst [vmem:[#allocation2 + $0x50] sm:$0xff] %v590
      %623 = vst [vmem:[#allocation2 + $0x58] sm:$0xff] %v591
      %624 = vst [vmem:[#allocation2 + $0x60] sm:$0xff] %v592
      %625 = vst [vmem:[#allocation2 + $0x68] sm:$0xff] %v593
      %626 = vst [vmem:[#allocation2 + $0x70] sm:$0xff] %v594
      %627 = vst [vmem:[#allocation2 + $0x78] sm:$0xff] %v595
      %628 = vst [vmem:[#allocation2 + $0x80] sm:$0xff] %v596
      %629 = vst [vmem:[#allocation2 + $0x88] sm:$0xff] %v597
      %630 = vst [vmem:[#allocation2 + $0x90] sm:$0xff] %v598
      %631 = vst [vmem:[#allocation2 + $0x98] sm:$0xff] %v599
      %632 = vst [vmem:[#allocation2 + $0xa0] sm:$0xff] %v600
      %633 = vst [vmem:[#allocation2 + $0xa8] sm:$0xff] %v601
      %634 = vst [vmem:[#allocation2 + $0xb0] sm:$0xff] %v602
      %635 = vst [vmem:[#allocation2 + $0xb8] sm:$0xff] %v603
      %636 = vst [vmem:[#allocation2 + $0xc0] sm:$0xff] %v604
      %637 = vst [vmem:[#allocation2 + $0xc8] sm:$0xff] %v605
      %638 = vst [vmem:[#allocation2 + $0xd0] sm:$0xff] %v606
      %639 = vst [vmem:[#allocation2 + $0xd8] sm:$0xff] %v607
      %640 = vst [vmem:[#allocation2 + $0xe0] sm:$0xff] %v608
      %641 = vst [vmem:[#allocation2 + $0xe8] sm:$0xff] %v609
      %642 = vst [vmem:[#allocation2 + $0xf0] sm:$0xff] %v610
      %643 = vst [vmem:[#allocation2 + $0xf8] sm:$0xff] %v611
      %644 = vst [vmem:[#allocation2 + $0x100] sm:$0xff] %v612
      %645 = vst [vmem:[#allocation2 + $0x108] sm:$0xff] %v613
      %646 = vst [vmem:[#allocation2 + $0x110] sm:$0xff] %v614
      %v647 = vld [vmem:[#allocation2 + $0x7] sm:$0xff]
      %v648 = vld [vmem:[#allocation2 + $0xf] sm:$0xff]
      %v649 = vld [vmem:[#allocation2 + $0x17] sm:$0xff]
      %v650 = vld [vmem:[#allocation2 + $0x1f] sm:$0xff]
      %v651 = vld [vmem:[#allocation2 + $0x27] sm:$0xff]
      %v652 = vld [vmem:[#allocation2 + $0x2f] sm:$0xff]
      %v653 = vld [vmem:[#allocation2 + $0x37] sm:$0xff]
      %v654 = vld [vmem:[#allocation2 + $0x3f] sm:$0xff]
      %v655 = vld [vmem:[#allocation2 + $0x47] sm:$0xff]
      %v656 = vld [vmem:[#allocation2 + $0x4f] sm:$0xff]
      %v657 = vld [vmem:[#allocation2 + $0x57] sm:$0xff]
      %v658 = vld [vmem:[#allocation2 + $0x5f] sm:$0xff]
      %v659 = vld [vmem:[#allocation2 + $0x67] sm:$0xff]
      %v660 = vld [vmem:[#allocation2 + $0x6f] sm:$0xff]
      %v661 = vld [vmem:[#allocation2 + $0x77] sm:$0xff]
      %v662 = vld [vmem:[#allocation2 + $0x7f] sm:$0xff]
      %v663 = vld [vmem:[#allocation2 + $0x87] sm:$0xff]
      %v664 = vld [vmem:[#allocation2 + $0x8f] sm:$0xff]
      %v665 = vld [vmem:[#allocation2 + $0x97] sm:$0xff]
      %v666 = vld [vmem:[#allocation2 + $0x9f] sm:$0xff]
      %v667 = vld [vmem:[#allocation2 + $0xa7] sm:$0xff]
      %v668 = vld [vmem:[#allocation2 + $0xaf] sm:$0xff]
      %v669 = vld [vmem:[#allocation2 + $0xb7] sm:$0xff]
      %v670 = vld [vmem:[#allocation2 + $0xbf] sm:$0xff]
      %v671 = vld [vmem:[#allocation2 + $0xc7] sm:$0xff]
      %v672 = vld [vmem:[#allocation2 + $0xcf] sm:$0xff]
      %v673 = vld [vmem:[#allocation2 + $0xd7] sm:$0xff]
      %v674 = vld [vmem:[#allocation2 + $0xdf] sm:$0xff]
      %v675 = vld [vmem:[#allocation2 + $0xe7] sm:$0xff]
      %v676 = vld [vmem:[#allocation2 + $0xef] sm:$0xff]
      %v677 = vld [vmem:[#allocation2 + $0xf7] sm:$0xff]
      %v678 = vld [vmem:[#allocation2 + $0xff] sm:$0xff]
      %v679 = vld [vmem:[%s3] sm:$0xff]
      %v680 = vld [vmem:[%s3 + $0x8] sm:$0xff]
      %v681 = vld [vmem:[%s3 + $0x10] sm:$0xff]
      %v682 = vld [vmem:[%s3 + $0x18] sm:$0xff]
      %v683 = vld [vmem:[%s3 + $0x20] sm:$0xff]
      %v684 = vld [vmem:[%s3 + $0x28] sm:$0xff]
      %v685 = vld [vmem:[%s3 + $0x30] sm:$0xff]
      %v686 = vld [vmem:[%s3 + $0x38] sm:$0xff]
      %v687 = vld [vmem:[%s3 + $0x40] sm:$0xff]
      %v688 = vld [vmem:[%s3 + $0x48] sm:$0xff]
      %v689 = vld [vmem:[%s3 + $0x50] sm:$0xff]
      %v690 = vld [vmem:[%s3 + $0x58] sm:$0xff]
      %v691 = vld [vmem:[%s3 + $0x60] sm:$0xff]
      %v692 = vld [vmem:[%s3 + $0x68] sm:$0xff]
      %v693 = vld [vmem:[%s3 + $0x70] sm:$0xff]
      %v694 = vld [vmem:[%s3 + $0x78] sm:$0xff]
      %v695 = vld [vmem:[#allocation2 + $0x8] sm:$0xff]
      %v696 = vld [vmem:[#allocation2 + $0x10] sm:$0xff]
      %v697 = vld [vmem:[#allocation2 + $0x18] sm:$0xff]
      %v698 = vld [vmem:[#allocation2 + $0x20] sm:$0xff]
      %v699 = vld [vmem:[#allocation2 + $0x28] sm:$0xff]
      %v700 = vld [vmem:[#allocation2 + $0x30] sm:$0xff]
      %v701 = vld [vmem:[#allocation2 + $0x38] sm:$0xff]
      %v702 = vld [vmem:[#allocation2 + $0x40] sm:$0xff]
      %v703 = vld [vmem:[#allocation2 + $0x48] sm:$0xff]
      %v704 = vld [vmem:[#allocation2 + $0x50] sm:$0xff]
      %v705 = vld [vmem:[#allocation2 + $0x58] sm:$0xff]
      %v706 = vld [vmem:[#allocation2 + $0x60] sm:$0xff]
      %v707 = vld [vmem:[#allocation2 + $0x68] sm:$0xff]
      %v708 = vld [vmem:[#allocation2 + $0x70] sm:$0xff]
      %v709 = vld [vmem:[#allocation2 + $0x78] sm:$0xff]
      %v710 = vld [vmem:[#allocation2 + $0x80] sm:$0xff]
      %v711 = vld [vmem:[#allocation2 + $0x88] sm:$0xff]
      %v712 = vld [vmem:[#allocation2 + $0x90] sm:$0xff]
      %v713 = vld [vmem:[#allocation2 + $0x98] sm:$0xff]
      %v714 = vld [vmem:[#allocation2 + $0xa0] sm:$0xff]
      %v715 = vld [vmem:[#allocation2 + $0xa8] sm:$0xff]
      %v716 = vld [vmem:[#allocation2 + $0xb0] sm:$0xff]
      %v717 = vld [vmem:[#allocation2 + $0xb8] sm:$0xff]
      %v718 = vld [vmem:[#allocation2 + $0xc0] sm:$0xff]
      %v719 = vld [vmem:[#allocation2 + $0xc8] sm:$0xff]
      %v720 = vld [vmem:[#allocation2 + $0xd0] sm:$0xff]
      %v721 = vld [vmem:[#allocation2 + $0xd8] sm:$0xff]
      %v722 = vld [vmem:[#allocation2 + $0xe0] sm:$0xff]
      %v723 = vld [vmem:[#allocation2 + $0xe8] sm:$0xff]
      %v724 = vld [vmem:[#allocation2 + $0xf0] sm:$0xff]
      %v725 = vld [vmem:[#allocation2 + $0xf8] sm:$0xff]
      %v726 = vld [vmem:[#allocation2 + $0x100] sm:$0xff]
      %s727 = scalar_lea.vmem %s3, 128
      %v728 = vld [vmem:[%s727] sm:$0xff]
      %v729 = vld [vmem:[%s727 + $0x8] sm:$0xff]
      %v730 = vld [vmem:[%s727 + $0x10] sm:$0xff]
      %v731 = vld [vmem:[%s727 + $0x18] sm:$0xff]
      %v732 = vld [vmem:[%s727 + $0x20] sm:$0xff]
      %v733 = vld [vmem:[%s727 + $0x28] sm:$0xff]
      %v734 = vld [vmem:[%s727 + $0x30] sm:$0xff]
      %v735 = vld [vmem:[%s727 + $0x38] sm:$0xff]
      %v736 = vld [vmem:[%s727 + $0x40] sm:$0xff]
      %v737 = vld [vmem:[%s727 + $0x48] sm:$0xff]
      %v738 = vld [vmem:[%s727 + $0x50] sm:$0xff]
      %v739 = vld [vmem:[%s727 + $0x58] sm:$0xff]
      %v740 = vld [vmem:[%s727 + $0x60] sm:$0xff]
      %v741 = vld [vmem:[%s727 + $0x68] sm:$0xff]
      %v742 = vld [vmem:[%s727 + $0x70] sm:$0xff]
      %v743 = vld [vmem:[%s727 + $0x78] sm:$0xff]
      %v744 = vld [vmem:[#allocation2 + $0x9] sm:$0xff]
      %v745 = vld [vmem:[#allocation2 + $0x11] sm:$0xff]
      %v746 = vld [vmem:[#allocation2 + $0x19] sm:$0xff]
      %v747 = vld [vmem:[#allocation2 + $0x21] sm:$0xff]
      %v748 = vld [vmem:[#allocation2 + $0x29] sm:$0xff]
      %v749 = vld [vmem:[#allocation2 + $0x31] sm:$0xff]
      %v750 = vld [vmem:[#allocation2 + $0x39] sm:$0xff]
      %v751 = vld [vmem:[#allocation2 + $0x41] sm:$0xff]
      %v752 = vld [vmem:[#allocation2 + $0x49] sm:$0xff]
      %v753 = vld [vmem:[#allocation2 + $0x51] sm:$0xff]
      %v754 = vld [vmem:[#allocation2 + $0x59] sm:$0xff]
      %v755 = vld [vmem:[#allocation2 + $0x61] sm:$0xff]
      %v756 = vld [vmem:[#allocation2 + $0x69] sm:$0xff]
      %v757 = vld [vmem:[#allocation2 + $0x71] sm:$0xff]
      %v758 = vld [vmem:[#allocation2 + $0x79] sm:$0xff]
      %v759 = vld [vmem:[#allocation2 + $0x81] sm:$0xff]
      %v760 = vld [vmem:[#allocation2 + $0x89] sm:$0xff]
      %v761 = vld [vmem:[#allocation2 + $0x91] sm:$0xff]
      %v762 = vld [vmem:[#allocation2 + $0x99] sm:$0xff]
      %v763 = vld [vmem:[#allocation2 + $0xa1] sm:$0xff]
      %v764 = vld [vmem:[#allocation2 + $0xa9] sm:$0xff]
      %v765 = vld [vmem:[#allocation2 + $0xb1] sm:$0xff]
      %v766 = vld [vmem:[#allocation2 + $0xb9] sm:$0xff]
      %v767 = vld [vmem:[#allocation2 + $0xc1] sm:$0xff]
      %v768 = vld [vmem:[#allocation2 + $0xc9] sm:$0xff]
      %v769 = vld [vmem:[#allocation2 + $0xd1] sm:$0xff]
      %v770 = vld [vmem:[#allocation2 + $0xd9] sm:$0xff]
      %v771 = vld [vmem:[#allocation2 + $0xe1] sm:$0xff]
      %v772 = vld [vmem:[#allocation2 + $0xe9] sm:$0xff]
      %v773 = vld [vmem:[#allocation2 + $0xf1] sm:$0xff]
      %v774 = vld [vmem:[#allocation2 + $0xf9] sm:$0xff]
      %v775 = vld [vmem:[#allocation2 + $0x101] sm:$0xff]
      %s776 = scalar_lea.vmem %s3, 256
      %v777 = vld [vmem:[%s776] sm:$0xff]
      %v778 = vld [vmem:[%s776 + $0x8] sm:$0xff]
      %v779 = vld [vmem:[%s776 + $0x10] sm:$0xff]
      %v780 = vld [vmem:[%s776 + $0x18] sm:$0xff]
      %v781 = vld [vmem:[%s776 + $0x20] sm:$0xff]
      %v782 = vld [vmem:[%s776 + $0x28] sm:$0xff]
      %v783 = vld [vmem:[%s776 + $0x30] sm:$0xff]
      %v784 = vld [vmem:[%s776 + $0x38] sm:$0xff]
      %v785 = vld [vmem:[%s776 + $0x40] sm:$0xff]
      %v786 = vld [vmem:[%s776 + $0x48] sm:$0xff]
      %v787 = vld [vmem:[%s776 + $0x50] sm:$0xff]
      %v788 = vld [vmem:[%s776 + $0x58] sm:$0xff]
      %v789 = vld [vmem:[%s776 + $0x60] sm:$0xff]
      %v790 = vld [vmem:[%s776 + $0x68] sm:$0xff]
      %v791 = vld [vmem:[%s776 + $0x70] sm:$0xff]
      %v792 = vld [vmem:[%s776 + $0x78] sm:$0xff]
      %v793 = vld [vmem:[#allocation2 + $0x107] sm:$0xff]
      %v794 = vld [vmem:[#allocation2 + $0x10f] sm:$0xff]
      %s795 = scalar_lea.vmem %s3, 384
      %v796 = vld [vmem:[%s795] sm:$0xff]
      %v797 = vld [vmem:[%s795 + $0x8] sm:$0xff]
      %v798 = vld [vmem:[%s795 + $0x10] sm:$0xff]
      %v799 = vld [vmem:[%s795 + $0x18] sm:$0xff]
      %v800 = vld [vmem:[%s795 + $0x20] sm:$0xff]
      %v801 = vld [vmem:[%s795 + $0x28] sm:$0xff]
      %v802 = vld [vmem:[%s795 + $0x30] sm:$0xff]
      %v803 = vld [vmem:[%s795 + $0x38] sm:$0xff]
      %v804 = vld [vmem:[%s795 + $0x40] sm:$0xff]
      %v805 = vld [vmem:[%s795 + $0x48] sm:$0xff]
      %v806 = vld [vmem:[%s795 + $0x50] sm:$0xff]
      %v807 = vld [vmem:[%s795 + $0x58] sm:$0xff]
      %v808 = vld [vmem:[%s795 + $0x60] sm:$0xff]
      %v809 = vld [vmem:[%s795 + $0x68] sm:$0xff]
      %v810 = vld [vmem:[%s795 + $0x70] sm:$0xff]
      %v811 = vld [vmem:[%s795 + $0x78] sm:$0xff]
      %812 = vmatprep.subr.mxu0 0.0
      %813 = vmatpush1.msra.mxu0 %v811
      %814 = vmatprep.subr.mxu0 0.0
      %815 = vmatpush1.msra.mxu0 %v810
      %816 = vmatprep.subr.mxu0 0.0
      %817 = vmatpush1.msra.mxu0 %v809
      %818 = vmatprep.subr.mxu0 0.0
      %819 = vmatpush1.msra.mxu0 %v808
      %820 = vmatprep.subr.mxu0 0.0
      %821 = vmatpush1.msra.mxu0 %v807
      %822 = vmatprep.subr.mxu0 0.0
      %823 = vmatpush1.msra.mxu0 %v806
      %824 = vmatprep.subr.mxu0 0.0
      %825 = vmatpush1.msra.mxu0 %v805
      %826 = vmatprep.subr.mxu0 0.0
      %827 = vmatpush1.msra.mxu0 %v804
      %828 = vmatprep.subr.mxu0 0.0
      %829 = vmatpush1.msra.mxu0 %v803
      %830 = vmatprep.subr.mxu0 0.0
      %831 = vmatpush1.msra.mxu0 %v802
      %832 = vmatprep.subr.mxu0 0.0
      %833 = vmatpush1.msra.mxu0 %v801
      %834 = vmatprep.subr.mxu0 0.0
      %835 = vmatpush1.msra.mxu0 %v800
      %836 = vmatprep.subr.mxu0 0.0
      %837 = vmatpush1.msra.mxu0 %v799
      %838 = vmatprep.subr.mxu0 0.0
      %839 = vmatpush1.msra.mxu0 %v798
      %840 = vmatprep.subr.mxu0 0.0
      %841 = vmatpush1.msra.mxu0 %v797
      %842 = vmatprep.subr.mxu0 0.0
      %843 = vmatpush1.msra.mxu0 %v796
      %844 = vmatprep.subr.mxu0 0.0
      %845 = vmatpush2.msra.mxu0 0.0
      %846 = vmatprep.subr.mxu0 0.0
      %847 = vmatpush2.msra.mxu0 0.0
      %848 = vmatprep.subr.mxu0 0.0
      %849 = vmatpush2.msra.mxu0 0.0
      %850 = vmatprep.subr.mxu0 0.0
      %851 = vmatpush2.msra.mxu0 0.0
      %852 = vmatprep.subr.mxu0 0.0
      %853 = vmatpush2.msra.mxu0 0.0
      %854 = vmatprep.subr.mxu0 0.0
      %855 = vmatpush2.msra.mxu0 0.0
      %856 = vmatprep.subr.mxu0 0.0
      %857 = vmatpush2.msra.mxu0 0.0
      %858 = vmatprep.subr.mxu0 0.0
      %859 = vmatpush2.msra.mxu0 0.0
      %860 = vmatprep.subr.mxu0 0.0
      %861 = vmatpush2.msra.mxu0 0.0
      %862 = vmatprep.subr.mxu0 0.0
      %863 = vmatpush2.msra.mxu0 0.0
      %864 = vmatprep.subr.mxu0 0.0
      %865 = vmatpush2.msra.mxu0 0.0
      %866 = vmatprep.subr.mxu0 0.0
      %867 = vmatpush2.msra.mxu0 0.0
      %868 = vmatprep.subr.mxu0 0.0
      %869 = vmatpush2.msra.mxu0 0.0
      %870 = vmatprep.subr.mxu0 0.0
      %871 = vmatpush2.msra.mxu0 0.0
      %872 = vmatprep.subr.mxu0 0.0
      %873 = vmatpush2.msra.mxu0 0.0
      %874 = vmatprep.subr.mxu0 0.0
      %875 = vmatpush2.msra.mxu0 0.0
      %876 = vmatprep.mubr.f32.mxu0 0.0
      %877 = vmatmul.mubr.f32.gmra.mxu0 %v649
      %v878 = vpop.f32.mrf.mxu0
      %v879 = vadd.f32 0.0, %v878
      %v880 = vpop.f32.mrf.mxu0
      %881 = vmatprep.mubr.f32.mxu0 0.0
      %882 = vmatmul.mubr.f32.gmra.mxu0 %v650
      %v883 = vpop.f32.mrf.mxu0
      %v884 = vadd.f32 0.0, %v883
      %v885 = vpop.f32.mrf.mxu0
      %886 = vmatprep.mubr.f32.mxu0 0.0
      %887 = vmatmul.mubr.f32.gmra.mxu0 %v651
      %v888 = vpop.f32.mrf.mxu0
      %v889 = vadd.f32 0.0, %v888
      %v890 = vpop.f32.mrf.mxu0
      %891 = vmatprep.mubr.f32.mxu0 0.0
      %892 = vmatmul.mubr.f32.gmra.mxu0 %v652
      %v893 = vpop.f32.mrf.mxu0
      %v894 = vadd.f32 0.0, %v893
      %v895 = vpop.f32.mrf.mxu0
      %896 = vmatprep.mubr.f32.mxu0 0.0
      %897 = vmatmul.mubr.f32.gmra.mxu0 %v653
      %v898 = vpop.f32.mrf.mxu0
      %v899 = vadd.f32 0.0, %v898
      %v900 = vpop.f32.mrf.mxu0
      %901 = vmatprep.mubr.f32.mxu0 0.0
      %902 = vmatmul.mubr.f32.gmra.mxu0 %v654
      %v903 = vpop.f32.mrf.mxu0
      %v904 = vadd.f32 0.0, %v903
      %v905 = vpop.f32.mrf.mxu0
      %906 = vmatprep.mubr.f32.mxu0 0.0
      %907 = vmatmul.mubr.f32.gmra.mxu0 %v655
      %v908 = vpop.f32.mrf.mxu0
      %v909 = vadd.f32 0.0, %v908
      %v910 = vpop.f32.mrf.mxu0
      %911 = vmatprep.mubr.f32.mxu0 0.0
      %912 = vmatmul.mubr.f32.gmra.mxu0 %v656
      %v913 = vpop.f32.mrf.mxu0
      %v914 = vadd.f32 0.0, %v913
      %v915 = vpop.f32.mrf.mxu0
      %916 = vmatprep.mubr.f32.mxu0 0.0
      %917 = vmatmul.mubr.f32.gmra.mxu0 %v657
      %v918 = vpop.f32.mrf.mxu0
      %v919 = vadd.f32 0.0, %v918
      %v920 = vpop.f32.mrf.mxu0
      %921 = vmatprep.mubr.f32.mxu0 0.0
      %922 = vmatmul.mubr.f32.gmra.mxu0 %v658
      %v923 = vpop.f32.mrf.mxu0
      %v924 = vadd.f32 0.0, %v923
      %v925 = vpop.f32.mrf.mxu0
      %926 = vmatprep.mubr.f32.mxu0 0.0
      %927 = vmatmul.mubr.f32.gmra.mxu0 %v659
      %v928 = vpop.f32.mrf.mxu0
      %v929 = vadd.f32 0.0, %v928
      %v930 = vpop.f32.mrf.mxu0
      %931 = vmatprep.mubr.f32.mxu0 0.0
      %932 = vmatmul.mubr.f32.gmra.mxu0 %v660
      %v933 = vpop.f32.mrf.mxu0
      %v934 = vadd.f32 0.0, %v933
      %v935 = vpop.f32.mrf.mxu0
      %936 = vmatprep.mubr.f32.mxu0 0.0
      %937 = vmatmul.mubr.f32.gmra.mxu0 %v661
      %v938 = vpop.f32.mrf.mxu0
      %v939 = vadd.f32 0.0, %v938
      %v940 = vpop.f32.mrf.mxu0
      %941 = vmatprep.mubr.f32.mxu0 0.0
      %942 = vmatmul.mubr.f32.gmra.mxu0 %v662
      %v943 = vpop.f32.mrf.mxu0
      %v944 = vadd.f32 0.0, %v943
      %v945 = vpop.f32.mrf.mxu0
      %946 = vmatprep.mubr.f32.mxu0 0.0
      %947 = vmatmul.mubr.f32.gmra.mxu0 %v663
      %v948 = vpop.f32.mrf.mxu0
      %v949 = vadd.f32 0.0, %v948
      %v950 = vpop.f32.mrf.mxu0
      %951 = vmatprep.mubr.f32.mxu0 0.0
      %952 = vmatmul.mubr.f32.gmra.mxu0 %v664
      %v953 = vpop.f32.mrf.mxu0
      %v954 = vadd.f32 0.0, %v953
      %v955 = vpop.f32.mrf.mxu0
      %956 = vmatprep.mubr.f32.mxu0 0.0
      %957 = vmatmul.mubr.f32.gmra.mxu0 %v665
      %v958 = vpop.f32.mrf.mxu0
      %v959 = vadd.f32 0.0, %v958
      %v960 = vpop.f32.mrf.mxu0
      %961 = vmatprep.mubr.f32.mxu0 0.0
      %962 = vmatmul.mubr.f32.gmra.mxu0 %v666
      %v963 = vpop.f32.mrf.mxu0
      %v964 = vadd.f32 0.0, %v963
      %v965 = vpop.f32.mrf.mxu0
      %966 = vmatprep.mubr.f32.mxu0 0.0
      %967 = vmatmul.mubr.f32.gmra.mxu0 %v667
      %v968 = vpop.f32.mrf.mxu0
      %v969 = vadd.f32 0.0, %v968
      %v970 = vpop.f32.mrf.mxu0
      %971 = vmatprep.mubr.f32.mxu0 0.0
      %972 = vmatmul.mubr.f32.gmra.mxu0 %v668
      %v973 = vpop.f32.mrf.mxu0
      %v974 = vadd.f32 0.0, %v973
      %v975 = vpop.f32.mrf.mxu0
      %976 = vmatprep.mubr.f32.mxu0 0.0
      %977 = vmatmul.mubr.f32.gmra.mxu0 %v669
      %v978 = vpop.f32.mrf.mxu0
      %v979 = vadd.f32 0.0, %v978
      %v980 = vpop.f32.mrf.mxu0
      %981 = vmatprep.mubr.f32.mxu0 0.0
      %982 = vmatmul.mubr.f32.gmra.mxu0 %v670
      %v983 = vpop.f32.mrf.mxu0
      %v984 = vadd.f32 0.0, %v983
      %v985 = vpop.f32.mrf.mxu0
      %986 = vmatprep.mubr.f32.mxu0 0.0
      %987 = vmatmul.mubr.f32.gmra.mxu0 %v671
      %v988 = vpop.f32.mrf.mxu0
      %v989 = vadd.f32 0.0, %v988
      %v990 = vpop.f32.mrf.mxu0
      %991 = vmatprep.mubr.f32.mxu0 0.0
      %992 = vmatmul.mubr.f32.gmra.mxu0 %v672
      %v993 = vpop.f32.mrf.mxu0
      %v994 = vadd.f32 0.0, %v993
      %v995 = vpop.f32.mrf.mxu0
      %996 = vmatprep.mubr.f32.mxu0 0.0
      %997 = vmatmul.mubr.f32.gmra.mxu0 %v673
      %v998 = vpop.f32.mrf.mxu0
      %v999 = vadd.f32 0.0, %v998
      %v1000 = vpop.f32.mrf.mxu0
      %1001 = vmatprep.mubr.f32.mxu0 0.0
      %1002 = vmatmul.mubr.f32.gmra.mxu0 %v674
      %v1003 = vpop.f32.mrf.mxu0
      %v1004 = vadd.f32 0.0, %v1003
      %v1005 = vpop.f32.mrf.mxu0
      %1006 = vmatprep.mubr.f32.mxu0 0.0
      %1007 = vmatmul.mubr.f32.gmra.mxu0 %v675
      %v1008 = vpop.f32.mrf.mxu0
      %v1009 = vadd.f32 0.0, %v1008
      %v1010 = vpop.f32.mrf.mxu0
      %1011 = vmatprep.mubr.f32.mxu0 0.0
      %1012 = vmatmul.mubr.f32.gmra.mxu0 %v676
      %v1013 = vpop.f32.mrf.mxu0
      %v1014 = vadd.f32 0.0, %v1013
      %v1015 = vpop.f32.mrf.mxu0
      %1016 = vmatprep.mubr.f32.mxu0 0.0
      %1017 = vmatmul.mubr.f32.gmra.mxu0 %v677
      %v1018 = vpop.f32.mrf.mxu0
      %v1019 = vadd.f32 0.0, %v1018
      %v1020 = vpop.f32.mrf.mxu0
      %1021 = vmatprep.mubr.f32.mxu0 0.0
      %1022 = vmatmul.mubr.f32.gmra.mxu0 %v678
      %v1023 = vpop.f32.mrf.mxu0
      %v1024 = vadd.f32 0.0, %v1023
      %v1025 = vpop.f32.mrf.mxu0
      %1026 = vmatprep.mubr.f32.mxu0 0.0
      %1027 = vmatmul.mubr.f32.gmra.mxu0 %v793
      %v1028 = vpop.f32.mrf.mxu0
      %v1029 = vadd.f32 0.0, %v1028
      %v1030 = vpop.f32.mrf.mxu0
      %1031 = vmatprep.mubr.f32.mxu0 0.0
      %1032 = vmatmul.mubr.f32.gmra.mxu0 %v794
      %v1033 = vpop.f32.mrf.mxu0
      %v1034 = vadd.f32 0.0, %v1033
      %v1035 = vpop.f32.mrf.mxu0
      %1036 = vdwg.mxu0
      %1037 = vmatprep.subr.mxu0 0.0
      %1038 = vmatpush1.msra.mxu0 %v694
      %1039 = vmatprep.subr.mxu0 0.0
      %1040 = vmatpush1.msra.mxu0 %v693
      %1041 = vmatprep.subr.mxu0 0.0
      %1042 = vmatpush1.msra.mxu0 %v692
      %1043 = vmatprep.subr.mxu0 0.0
      %1044 = vmatpush1.msra.mxu0 %v691
      %1045 = vmatprep.subr.mxu0 0.0
      %1046 = vmatpush1.msra.mxu0 %v690
      %1047 = vmatprep.subr.mxu0 0.0
      %1048 = vmatpush1.msra.mxu0 %v689
      %1049 = vmatprep.subr.mxu0 0.0
      %1050 = vmatpush1.msra.mxu0 %v688
      %1051 = vmatprep.subr.mxu0 0.0
      %1052 = vmatpush1.msra.mxu0 %v687
      %1053 = vmatprep.subr.mxu0 0.0
      %1054 = vmatpush1.msra.mxu0 %v686
      %1055 = vmatprep.subr.mxu0 0.0
      %1056 = vmatpush1.msra.mxu0 %v685
      %1057 = vmatprep.subr.mxu0 0.0
      %1058 = vmatpush1.msra.mxu0 %v684
      %1059 = vmatprep.subr.mxu0 0.0
      %1060 = vmatpush1.msra.mxu0 %v683
      %1061 = vmatprep.subr.mxu0 0.0
      %1062 = vmatpush1.msra.mxu0 %v682
      %1063 = vmatprep.subr.mxu0 0.0
      %1064 = vmatpush1.msra.mxu0 %v681
      %1065 = vmatprep.subr.mxu0 0.0
      %1066 = vmatpush1.msra.mxu0 %v680
      %1067 = vmatprep.subr.mxu0 0.0
      %1068 = vmatpush1.msra.mxu0 %v679
      %1069 = vmatprep.subr.mxu0 0.0
      %1070 = vmatpush2.msra.mxu0 0.0
      %1071 = vmatprep.subr.mxu0 0.0
      %1072 = vmatpush2.msra.mxu0 0.0
      %1073 = vmatprep.subr.mxu0 0.0
      %1074 = vmatpush2.msra.mxu0 0.0
      %1075 = vmatprep.subr.mxu0 0.0
      %1076 = vmatpush2.msra.mxu0 0.0
      %1077 = vmatprep.subr.mxu0 0.0
      %1078 = vmatpush2.msra.mxu0 0.0
      %1079 = vmatprep.subr.mxu0 0.0
      %1080 = vmatpush2.msra.mxu0 0.0
      %1081 = vmatprep.subr.mxu0 0.0
      %1082 = vmatpush2.msra.mxu0 0.0
      %1083 = vmatprep.subr.mxu0 0.0
      %1084 = vmatpush2.msra.mxu0 0.0
      %1085 = vmatprep.subr.mxu0 0.0
      %1086 = vmatpush2.msra.mxu0 0.0
      %1087 = vmatprep.subr.mxu0 0.0
      %1088 = vmatpush2.msra.mxu0 0.0
      %1089 = vmatprep.subr.mxu0 0.0
      %1090 = vmatpush2.msra.mxu0 0.0
      %1091 = vmatprep.subr.mxu0 0.0
      %1092 = vmatpush2.msra.mxu0 0.0
      %1093 = vmatprep.subr.mxu0 0.0
      %1094 = vmatpush2.msra.mxu0 0.0
      %1095 = vmatprep.subr.mxu0 0.0
      %1096 = vmatpush2.msra.mxu0 0.0
      %1097 = vmatprep.subr.mxu0 0.0
      %1098 = vmatpush2.msra.mxu0 0.0
      %1099 = vmatprep.subr.mxu0 0.0
      %1100 = vmatpush2.msra.mxu0 0.0
      %1101 = vmatprep.mubr.f32.mxu0 0.0
      %1102 = vmatmul.mubr.f32.gmra.mxu0 %v647
      %v1103 = vpop.f32.mrf.mxu0
      %v1104 = vadd.f32 %v879, %v1103
      %v1105 = vpop.f32.mrf.mxu0
      %1106 = vmatprep.mubr.f32.mxu0 0.0
      %1107 = vmatmul.mubr.f32.gmra.mxu0 %v648
      %v1108 = vpop.f32.mrf.mxu0
      %v1109 = vadd.f32 %v884, %v1108
      %v1110 = vpop.f32.mrf.mxu0
      %1111 = vmatprep.mubr.f32.mxu0 0.0
      %1112 = vmatmul.mubr.f32.gmra.mxu0 %v649
      %v1113 = vpop.f32.mrf.mxu0
      %v1114 = vadd.f32 %v889, %v1113
      %v1115 = vpop.f32.mrf.mxu0
      %1116 = vmatprep.mubr.f32.mxu0 0.0
      %1117 = vmatmul.mubr.f32.gmra.mxu0 %v650
      %v1118 = vpop.f32.mrf.mxu0
      %v1119 = vadd.f32 %v894, %v1118
      %v1120 = vpop.f32.mrf.mxu0
      %1121 = vmatprep.mubr.f32.mxu0 0.0
      %1122 = vmatmul.mubr.f32.gmra.mxu0 %v651
      %v1123 = vpop.f32.mrf.mxu0
      %v1124 = vadd.f32 %v899, %v1123
      %v1125 = vpop.f32.mrf.mxu0
      %1126 = vmatprep.mubr.f32.mxu0 0.0
      %1127 = vmatmul.mubr.f32.gmra.mxu0 %v652
      %v1128 = vpop.f32.mrf.mxu0
      %v1129 = vadd.f32 %v904, %v1128
      %v1130 = vpop.f32.mrf.mxu0
      %1131 = vmatprep.mubr.f32.mxu0 0.0
      %1132 = vmatmul.mubr.f32.gmra.mxu0 %v653
      %v1133 = vpop.f32.mrf.mxu0
      %v1134 = vadd.f32 %v909, %v1133
      %v1135 = vpop.f32.mrf.mxu0
      %1136 = vmatprep.mubr.f32.mxu0 0.0
      %1137 = vmatmul.mubr.f32.gmra.mxu0 %v654
      %v1138 = vpop.f32.mrf.mxu0
      %v1139 = vadd.f32 %v914, %v1138
      %v1140 = vpop.f32.mrf.mxu0
      %1141 = vmatprep.mubr.f32.mxu0 0.0
      %1142 = vmatmul.mubr.f32.gmra.mxu0 %v655
      %v1143 = vpop.f32.mrf.mxu0
      %v1144 = vadd.f32 %v919, %v1143
      %v1145 = vpop.f32.mrf.mxu0
      %1146 = vmatprep.mubr.f32.mxu0 0.0
      %1147 = vmatmul.mubr.f32.gmra.mxu0 %v656
      %v1148 = vpop.f32.mrf.mxu0
      %v1149 = vadd.f32 %v924, %v1148
      %v1150 = vpop.f32.mrf.mxu0
      %1151 = vmatprep.mubr.f32.mxu0 0.0
      %1152 = vmatmul.mubr.f32.gmra.mxu0 %v657
      %v1153 = vpop.f32.mrf.mxu0
      %v1154 = vadd.f32 %v929, %v1153
      %v1155 = vpop.f32.mrf.mxu0
      %1156 = vmatprep.mubr.f32.mxu0 0.0
      %1157 = vmatmul.mubr.f32.gmra.mxu0 %v658
      %v1158 = vpop.f32.mrf.mxu0
      %v1159 = vadd.f32 %v934, %v1158
      %v1160 = vpop.f32.mrf.mxu0
      %1161 = vmatprep.mubr.f32.mxu0 0.0
      %1162 = vmatmul.mubr.f32.gmra.mxu0 %v659
      %v1163 = vpop.f32.mrf.mxu0
      %v1164 = vadd.f32 %v939, %v1163
      %v1165 = vpop.f32.mrf.mxu0
      %1166 = vmatprep.mubr.f32.mxu0 0.0
      %1167 = vmatmul.mubr.f32.gmra.mxu0 %v660
      %v1168 = vpop.f32.mrf.mxu0
      %v1169 = vadd.f32 %v944, %v1168
      %v1170 = vpop.f32.mrf.mxu0
      %1171 = vmatprep.mubr.f32.mxu0 0.0
      %1172 = vmatmul.mubr.f32.gmra.mxu0 %v661
      %v1173 = vpop.f32.mrf.mxu0
      %v1174 = vadd.f32 %v949, %v1173
      %v1175 = vpop.f32.mrf.mxu0
      %1176 = vmatprep.mubr.f32.mxu0 0.0
      %1177 = vmatmul.mubr.f32.gmra.mxu0 %v662
      %v1178 = vpop.f32.mrf.mxu0
      %v1179 = vadd.f32 %v954, %v1178
      %v1180 = vpop.f32.mrf.mxu0
      %1181 = vmatprep.mubr.f32.mxu0 0.0
      %1182 = vmatmul.mubr.f32.gmra.mxu0 %v663
      %v1183 = vpop.f32.mrf.mxu0
      %v1184 = vadd.f32 %v959, %v1183
      %v1185 = vpop.f32.mrf.mxu0
      %1186 = vmatprep.mubr.f32.mxu0 0.0
      %1187 = vmatmul.mubr.f32.gmra.mxu0 %v664
      %v1188 = vpop.f32.mrf.mxu0
      %v1189 = vadd.f32 %v964, %v1188
      %v1190 = vpop.f32.mrf.mxu0
      %1191 = vmatprep.mubr.f32.mxu0 0.0
      %1192 = vmatmul.mubr.f32.gmra.mxu0 %v665
      %v1193 = vpop.f32.mrf.mxu0
      %v1194 = vadd.f32 %v969, %v1193
      %v1195 = vpop.f32.mrf.mxu0
      %1196 = vmatprep.mubr.f32.mxu0 0.0
      %1197 = vmatmul.mubr.f32.gmra.mxu0 %v666
      %v1198 = vpop.f32.mrf.mxu0
      %v1199 = vadd.f32 %v974, %v1198
      %v1200 = vpop.f32.mrf.mxu0
      %1201 = vmatprep.mubr.f32.mxu0 0.0
      %1202 = vmatmul.mubr.f32.gmra.mxu0 %v667
      %v1203 = vpop.f32.mrf.mxu0
      %v1204 = vadd.f32 %v979, %v1203
      %v1205 = vpop.f32.mrf.mxu0
      %1206 = vmatprep.mubr.f32.mxu0 0.0
      %1207 = vmatmul.mubr.f32.gmra.mxu0 %v668
      %v1208 = vpop.f32.mrf.mxu0
      %v1209 = vadd.f32 %v984, %v1208
      %v1210 = vpop.f32.mrf.mxu0
      %1211 = vmatprep.mubr.f32.mxu0 0.0
      %1212 = vmatmul.mubr.f32.gmra.mxu0 %v669
      %v1213 = vpop.f32.mrf.mxu0
      %v1214 = vadd.f32 %v989, %v1213
      %v1215 = vpop.f32.mrf.mxu0
      %1216 = vmatprep.mubr.f32.mxu0 0.0
      %1217 = vmatmul.mubr.f32.gmra.mxu0 %v670
      %v1218 = vpop.f32.mrf.mxu0
      %v1219 = vadd.f32 %v994, %v1218
      %v1220 = vpop.f32.mrf.mxu0
      %1221 = vmatprep.mubr.f32.mxu0 0.0
      %1222 = vmatmul.mubr.f32.gmra.mxu0 %v671
      %v1223 = vpop.f32.mrf.mxu0
      %v1224 = vadd.f32 %v999, %v1223
      %v1225 = vpop.f32.mrf.mxu0
      %1226 = vmatprep.mubr.f32.mxu0 0.0
      %1227 = vmatmul.mubr.f32.gmra.mxu0 %v672
      %v1228 = vpop.f32.mrf.mxu0
      %v1229 = vadd.f32 %v1004, %v1228
      %v1230 = vpop.f32.mrf.mxu0
      %1231 = vmatprep.mubr.f32.mxu0 0.0
      %1232 = vmatmul.mubr.f32.gmra.mxu0 %v673
      %v1233 = vpop.f32.mrf.mxu0
      %v1234 = vadd.f32 %v1009, %v1233
      %v1235 = vpop.f32.mrf.mxu0
      %1236 = vmatprep.mubr.f32.mxu0 0.0
      %1237 = vmatmul.mubr.f32.gmra.mxu0 %v674
      %v1238 = vpop.f32.mrf.mxu0
      %v1239 = vadd.f32 %v1014, %v1238
      %v1240 = vpop.f32.mrf.mxu0
      %1241 = vmatprep.mubr.f32.mxu0 0.0
      %1242 = vmatmul.mubr.f32.gmra.mxu0 %v675
      %v1243 = vpop.f32.mrf.mxu0
      %v1244 = vadd.f32 %v1019, %v1243
      %v1245 = vpop.f32.mrf.mxu0
      %1246 = vmatprep.mubr.f32.mxu0 0.0
      %1247 = vmatmul.mubr.f32.gmra.mxu0 %v676
      %v1248 = vpop.f32.mrf.mxu0
      %v1249 = vadd.f32 %v1024, %v1248
      %v1250 = vpop.f32.mrf.mxu0
      %1251 = vmatprep.mubr.f32.mxu0 0.0
      %1252 = vmatmul.mubr.f32.gmra.mxu0 %v677
      %v1253 = vpop.f32.mrf.mxu0
      %v1254 = vadd.f32 %v1029, %v1253
      %v1255 = vpop.f32.mrf.mxu0
      %1256 = vmatprep.mubr.f32.mxu0 0.0
      %1257 = vmatmul.mubr.f32.gmra.mxu0 %v678
      %v1258 = vpop.f32.mrf.mxu0
      %v1259 = vadd.f32 %v1034, %v1258
      %v1260 = vpop.f32.mrf.mxu0
      %1261 = vdwg.mxu0
      %v1262 = vld [vmem:[#allocation2 + $0x18] sm:$0xff]
      %v1263 = vld [vmem:[#allocation2 + $0x20] sm:$0xff]
      %v1264 = vld [vmem:[#allocation2 + $0x28] sm:$0xff]
      %v1265 = vld [vmem:[#allocation2 + $0x30] sm:$0xff]
      %v1266 = vld [vmem:[#allocation2 + $0x38] sm:$0xff]
      %v1267 = vld [vmem:[#allocation2 + $0x40] sm:$0xff]
      %v1268 = vld [vmem:[#allocation2 + $0x48] sm:$0xff]
      %v1269 = vld [vmem:[#allocation2 + $0x50] sm:$0xff]
      %v1270 = vld [vmem:[#allocation2 + $0x58] sm:$0xff]
      %v1271 = vld [vmem:[#allocation2 + $0x60] sm:$0xff]
      %v1272 = vld [vmem:[#allocation2 + $0x68] sm:$0xff]
      %v1273 = vld [vmem:[#allocation2 + $0x70] sm:$0xff]
      %v1274 = vld [vmem:[#allocation2 + $0x78] sm:$0xff]
      %v1275 = vld [vmem:[#allocation2 + $0x80] sm:$0xff]
      %v1276 = vld [vmem:[#allocation2 + $0x88] sm:$0xff]
      %v1277 = vld [vmem:[#allocation2 + $0x90] sm:$0xff]
      %v1278 = vld [vmem:[#allocation2 + $0x98] sm:$0xff]
      %v1279 = vld [vmem:[#allocation2 + $0xa0] sm:$0xff]
      %v1280 = vld [vmem:[#allocation2 + $0xa8] sm:$0xff]
      %v1281 = vld [vmem:[#allocation2 + $0xb0] sm:$0xff]
      %v1282 = vld [vmem:[#allocation2 + $0xb8] sm:$0xff]
      %v1283 = vld [vmem:[#allocation2 + $0xc0] sm:$0xff]
      %v1284 = vld [vmem:[#allocation2 + $0xc8] sm:$0xff]
      %v1285 = vld [vmem:[#allocation2 + $0xd0] sm:$0xff]
      %v1286 = vld [vmem:[#allocation2 + $0xd8] sm:$0xff]
      %v1287 = vld [vmem:[#allocation2 + $0xe0] sm:$0xff]
      %v1288 = vld [vmem:[#allocation2 + $0xe8] sm:$0xff]
      %v1289 = vld [vmem:[#allocation2 + $0xf0] sm:$0xff]
      %v1290 = vld [vmem:[#allocation2 + $0xf8] sm:$0xff]
      %v1291 = vld [vmem:[#allocation2 + $0x100] sm:$0xff]
      %v1292 = vld [vmem:[#allocation2 + $0x108] sm:$0xff]
      %v1293 = vld [vmem:[#allocation2 + $0x110] sm:$0xff]
      %s1294 = scalar_lea.vmem %s3, 512
      %v1295 = vld [vmem:[%s1294] sm:$0xff]
      %v1296 = vld [vmem:[%s1294 + $0x8] sm:$0xff]
      %v1297 = vld [vmem:[%s1294 + $0x10] sm:$0xff]
      %v1298 = vld [vmem:[%s1294 + $0x18] sm:$0xff]
      %v1299 = vld [vmem:[%s1294 + $0x20] sm:$0xff]
      %v1300 = vld [vmem:[%s1294 + $0x28] sm:$0xff]
      %v1301 = vld [vmem:[%s1294 + $0x30] sm:$0xff]
      %v1302 = vld [vmem:[%s1294 + $0x38] sm:$0xff]
      %v1303 = vld [vmem:[%s1294 + $0x40] sm:$0xff]
      %v1304 = vld [vmem:[%s1294 + $0x48] sm:$0xff]
      %v1305 = vld [vmem:[%s1294 + $0x50] sm:$0xff]
      %v1306 = vld [vmem:[%s1294 + $0x58] sm:$0xff]
      %v1307 = vld [vmem:[%s1294 + $0x60] sm:$0xff]
      %v1308 = vld [vmem:[%s1294 + $0x68] sm:$0xff]
      %v1309 = vld [vmem:[%s1294 + $0x70] sm:$0xff]
      %v1310 = vld [vmem:[%s1294 + $0x78] sm:$0xff]
      %1311 = vmatprep.subr.mxu0 0.0
      %1312 = vmatpush1.msra.mxu0 %v1310
      %1313 = vmatprep.subr.mxu0 0.0
      %1314 = vmatpush1.msra.mxu0 %v1309
      %1315 = vmatprep.subr.mxu0 0.0
      %1316 = vmatpush1.msra.mxu0 %v1308
      %1317 = vmatprep.subr.mxu0 0.0
      %1318 = vmatpush1.msra.mxu0 %v1307
      %1319 = vmatprep.subr.mxu0 0.0
      %1320 = vmatpush1.msra.mxu0 %v1306
      %1321 = vmatprep.subr.mxu0 0.0
      %1322 = vmatpush1.msra.mxu0 %v1305
      %1323 = vmatprep.subr.mxu0 0.0
      %1324 = vmatpush1.msra.mxu0 %v1304
      %1325 = vmatprep.subr.mxu0 0.0
      %1326 = vmatpush1.msra.mxu0 %v1303
      %1327 = vmatprep.subr.mxu0 0.0
      %1328 = vmatpush1.msra.mxu0 %v1302
      %1329 = vmatprep.subr.mxu0 0.0
      %1330 = vmatpush1.msra.mxu0 %v1301
      %1331 = vmatprep.subr.mxu0 0.0
      %1332 = vmatpush1.msra.mxu0 %v1300
      %1333 = vmatprep.subr.mxu0 0.0
      %1334 = vmatpush1.msra.mxu0 %v1299
      %1335 = vmatprep.subr.mxu0 0.0
      %1336 = vmatpush1.msra.mxu0 %v1298
      %1337 = vmatprep.subr.mxu0 0.0
      %1338 = vmatpush1.msra.mxu0 %v1297
      %1339 = vmatprep.subr.mxu0 0.0
      %1340 = vmatpush1.msra.mxu0 %v1296
      %1341 = vmatprep.subr.mxu0 0.0
      %1342 = vmatpush1.msra.mxu0 %v1295
      %1343 = vmatprep.subr.mxu0 0.0
      %1344 = vmatpush2.msra.mxu0 0.0
      %1345 = vmatprep.subr.mxu0 0.0
      %1346 = vmatpush2.msra.mxu0 0.0
      %1347 = vmatprep.subr.mxu0 0.0
      %1348 = vmatpush2.msra.mxu0 0.0
      %1349 = vmatprep.subr.mxu0 0.0
      %1350 = vmatpush2.msra.mxu0 0.0
      %1351 = vmatprep.subr.mxu0 0.0
      %1352 = vmatpush2.msra.mxu0 0.0
      %1353 = vmatprep.subr.mxu0 0.0
      %1354 = vmatpush2.msra.mxu0 0.0
      %1355 = vmatprep.subr.mxu0 0.0
      %1356 = vmatpush2.msra.mxu0 0.0
      %1357 = vmatprep.subr.mxu0 0.0
      %1358 = vmatpush2.msra.mxu0 0.0
      %1359 = vmatprep.subr.mxu0 0.0
      %1360 = vmatpush2.msra.mxu0 0.0
      %1361 = vmatprep.subr.mxu0 0.0
      %1362 = vmatpush2.msra.mxu0 0.0
      %1363 = vmatprep.subr.mxu0 0.0
      %1364 = vmatpush2.msra.mxu0 0.0
      %1365 = vmatprep.subr.mxu0 0.0
      %1366 = vmatpush2.msra.mxu0 0.0
      %1367 = vmatprep.subr.mxu0 0.0
      %1368 = vmatpush2.msra.mxu0 0.0
      %1369 = vmatprep.subr.mxu0 0.0
      %1370 = vmatpush2.msra.mxu0 0.0
      %1371 = vmatprep.subr.mxu0 0.0
      %1372 = vmatpush2.msra.mxu0 0.0
      %1373 = vmatprep.subr.mxu0 0.0
      %1374 = vmatpush2.msra.mxu0 0.0
      %1375 = vmatprep.mubr.f32.mxu0 0.0
      %1376 = vmatmul.mubr.f32.gmra.mxu0 %v1262
      %v1377 = vpop.f32.mrf.mxu0
      %v1378 = vadd.f32 0.0, %v1377
      %v1379 = vpop.f32.mrf.mxu0
      %1380 = vmatprep.mubr.f32.mxu0 0.0
      %1381 = vmatmul.mubr.f32.gmra.mxu0 %v1263
      %v1382 = vpop.f32.mrf.mxu0
      %v1383 = vadd.f32 0.0, %v1382
      %v1384 = vpop.f32.mrf.mxu0
      %1385 = vmatprep.mubr.f32.mxu0 0.0
      %1386 = vmatmul.mubr.f32.gmra.mxu0 %v1264
      %v1387 = vpop.f32.mrf.mxu0
      %v1388 = vadd.f32 0.0, %v1387
      %v1389 = vpop.f32.mrf.mxu0
      %1390 = vmatprep.mubr.f32.mxu0 0.0
      %1391 = vmatmul.mubr.f32.gmra.mxu0 %v1265
      %v1392 = vpop.f32.mrf.mxu0
      %v1393 = vadd.f32 0.0, %v1392
      %v1394 = vpop.f32.mrf.mxu0
      %1395 = vmatprep.mubr.f32.mxu0 0.0
      %1396 = vmatmul.mubr.f32.gmra.mxu0 %v1266
      %v1397 = vpop.f32.mrf.mxu0
      %v1398 = vadd.f32 0.0, %v1397
      %v1399 = vpop.f32.mrf.mxu0
      %1400 = vmatprep.mubr.f32.mxu0 0.0
      %1401 = vmatmul.mubr.f32.gmra.mxu0 %v1267
      %v1402 = vpop.f32.mrf.mxu0
      %v1403 = vadd.f32 0.0, %v1402
      %v1404 = vpop.f32.mrf.mxu0
      %1405 = vmatprep.mubr.f32.mxu0 0.0
      %1406 = vmatmul.mubr.f32.gmra.mxu0 %v1268
      %v1407 = vpop.f32.mrf.mxu0
      %v1408 = vadd.f32 0.0, %v1407
      %v1409 = vpop.f32.mrf.mxu0
      %1410 = vmatprep.mubr.f32.mxu0 0.0
      %1411 = vmatmul.mubr.f32.gmra.mxu0 %v1269
      %v1412 = vpop.f32.mrf.mxu0
      %v1413 = vadd.f32 0.0, %v1412
      %v1414 = vpop.f32.mrf.mxu0
      %1415 = vmatprep.mubr.f32.mxu0 0.0
      %1416 = vmatmul.mubr.f32.gmra.mxu0 %v1270
      %v1417 = vpop.f32.mrf.mxu0
      %v1418 = vadd.f32 0.0, %v1417
      %v1419 = vpop.f32.mrf.mxu0
      %1420 = vmatprep.mubr.f32.mxu0 0.0
      %1421 = vmatmul.mubr.f32.gmra.mxu0 %v1271
      %v1422 = vpop.f32.mrf.mxu0
      %v1423 = vadd.f32 0.0, %v1422
      %v1424 = vpop.f32.mrf.mxu0
      %1425 = vmatprep.mubr.f32.mxu0 0.0
      %1426 = vmatmul.mubr.f32.gmra.mxu0 %v1272
      %v1427 = vpop.f32.mrf.mxu0
      %v1428 = vadd.f32 0.0, %v1427
      %v1429 = vpop.f32.mrf.mxu0
      %1430 = vmatprep.mubr.f32.mxu0 0.0
      %1431 = vmatmul.mubr.f32.gmra.mxu0 %v1273
      %v1432 = vpop.f32.mrf.mxu0
      %v1433 = vadd.f32 0.0, %v1432
      %v1434 = vpop.f32.mrf.mxu0
      %1435 = vmatprep.mubr.f32.mxu0 0.0
      %1436 = vmatmul.mubr.f32.gmra.mxu0 %v1274
      %v1437 = vpop.f32.mrf.mxu0
      %v1438 = vadd.f32 0.0, %v1437
      %v1439 = vpop.f32.mrf.mxu0
      %1440 = vmatprep.mubr.f32.mxu0 0.0
      %1441 = vmatmul.mubr.f32.gmra.mxu0 %v1275
      %v1442 = vpop.f32.mrf.mxu0
      %v1443 = vadd.f32 0.0, %v1442
      %v1444 = vpop.f32.mrf.mxu0
      %1445 = vmatprep.mubr.f32.mxu0 0.0
      %1446 = vmatmul.mubr.f32.gmra.mxu0 %v1276
      %v1447 = vpop.f32.mrf.mxu0
      %v1448 = vadd.f32 0.0, %v1447
      %v1449 = vpop.f32.mrf.mxu0
      %1450 = vmatprep.mubr.f32.mxu0 0.0
      %1451 = vmatmul.mubr.f32.gmra.mxu0 %v1277
      %v1452 = vpop.f32.mrf.mxu0
      %v1453 = vadd.f32 0.0, %v1452
      %v1454 = vpop.f32.mrf.mxu0
      %1455 = vmatprep.mubr.f32.mxu0 0.0
      %1456 = vmatmul.mubr.f32.gmra.mxu0 %v1278
      %v1457 = vpop.f32.mrf.mxu0
      %v1458 = vadd.f32 0.0, %v1457
      %v1459 = vpop.f32.mrf.mxu0
      %1460 = vmatprep.mubr.f32.mxu0 0.0
      %1461 = vmatmul.mubr.f32.gmra.mxu0 %v1279
      %v1462 = vpop.f32.mrf.mxu0
      %v1463 = vadd.f32 0.0, %v1462
      %v1464 = vpop.f32.mrf.mxu0
      %1465 = vmatprep.mubr.f32.mxu0 0.0
      %1466 = vmatmul.mubr.f32.gmra.mxu0 %v1280
      %v1467 = vpop.f32.mrf.mxu0
      %v1468 = vadd.f32 0.0, %v1467
      %v1469 = vpop.f32.mrf.mxu0
      %1470 = vmatprep.mubr.f32.mxu0 0.0
      %1471 = vmatmul.mubr.f32.gmra.mxu0 %v1281
      %v1472 = vpop.f32.mrf.mxu0
      %v1473 = vadd.f32 0.0, %v1472
      %v1474 = vpop.f32.mrf.mxu0
      %1475 = vmatprep.mubr.f32.mxu0 0.0
      %1476 = vmatmul.mubr.f32.gmra.mxu0 %v1282
      %v1477 = vpop.f32.mrf.mxu0
      %v1478 = vadd.f32 0.0, %v1477
      %v1479 = vpop.f32.mrf.mxu0
      %1480 = vmatprep.mubr.f32.mxu0 0.0
      %1481 = vmatmul.mubr.f32.gmra.mxu0 %v1283
      %v1482 = vpop.f32.mrf.mxu0
      %v1483 = vadd.f32 0.0, %v1482
      %v1484 = vpop.f32.mrf.mxu0
      %1485 = vmatprep.mubr.f32.mxu0 0.0
      %1486 = vmatmul.mubr.f32.gmra.mxu0 %v1284
      %v1487 = vpop.f32.mrf.mxu0
      %v1488 = vadd.f32 0.0, %v1487
      %v1489 = vpop.f32.mrf.mxu0
      %1490 = vmatprep.mubr.f32.mxu0 0.0
      %1491 = vmatmul.mubr.f32.gmra.mxu0 %v1285
      %v1492 = vpop.f32.mrf.mxu0
      %v1493 = vadd.f32 0.0, %v1492
      %v1494 = vpop.f32.mrf.mxu0
      %1495 = vmatprep.mubr.f32.mxu0 0.0
      %1496 = vmatmul.mubr.f32.gmra.mxu0 %v1286
      %v1497 = vpop.f32.mrf.mxu0
      %v1498 = vadd.f32 0.0, %v1497
      %v1499 = vpop.f32.mrf.mxu0
      %1500 = vmatprep.mubr.f32.mxu0 0.0
      %1501 = vmatmul.mubr.f32.gmra.mxu0 %v1287
      %v1502 = vpop.f32.mrf.mxu0
      %v1503 = vadd.f32 0.0, %v1502
      %v1504 = vpop.f32.mrf.mxu0
      %1505 = vmatprep.mubr.f32.mxu0 0.0
      %1506 = vmatmul.mubr.f32.gmra.mxu0 %v1288
      %v1507 = vpop.f32.mrf.mxu0
      %v1508 = vadd.f32 0.0, %v1507
      %v1509 = vpop.f32.mrf.mxu0
      %1510 = vmatprep.mubr.f32.mxu0 0.0
      %1511 = vmatmul.mubr.f32.gmra.mxu0 %v1289
      %v1512 = vpop.f32.mrf.mxu0
      %v1513 = vadd.f32 0.0, %v1512
      %v1514 = vpop.f32.mrf.mxu0
      %1515 = vmatprep.mubr.f32.mxu0 0.0
      %1516 = vmatmul.mubr.f32.gmra.mxu0 %v1290
      %v1517 = vpop.f32.mrf.mxu0
      %v1518 = vadd.f32 0.0, %v1517
      %v1519 = vpop.f32.mrf.mxu0
      %1520 = vmatprep.mubr.f32.mxu0 0.0
      %1521 = vmatmul.mubr.f32.gmra.mxu0 %v1291
      %v1522 = vpop.f32.mrf.mxu0
      %v1523 = vadd.f32 0.0, %v1522
      %v1524 = vpop.f32.mrf.mxu0
      %1525 = vmatprep.mubr.f32.mxu0 0.0
      %1526 = vmatmul.mubr.f32.gmra.mxu0 %v1292
      %v1527 = vpop.f32.mrf.mxu0
      %v1528 = vadd.f32 0.0, %v1527
      %v1529 = vpop.f32.mrf.mxu0
      %1530 = vmatprep.mubr.f32.mxu0 0.0
      %1531 = vmatmul.mubr.f32.gmra.mxu0 %v1293
      %v1532 = vpop.f32.mrf.mxu0
      %v1533 = vadd.f32 0.0, %v1532
      %v1534 = vpop.f32.mrf.mxu0
      %1535 = vdwg.mxu0
      %1536 = vmatprep.subr.mxu0 0.0
      %1537 = vmatpush1.msra.mxu0 %v743
      %1538 = vmatprep.subr.mxu0 0.0
      %1539 = vmatpush1.msra.mxu0 %v742
      %1540 = vmatprep.subr.mxu0 0.0
      %1541 = vmatpush1.msra.mxu0 %v741
      %1542 = vmatprep.subr.mxu0 0.0
      %1543 = vmatpush1.msra.mxu0 %v740
      %1544 = vmatprep.subr.mxu0 0.0
      %1545 = vmatpush1.msra.mxu0 %v739
      %1546 = vmatprep.subr.mxu0 0.0
      %1547 = vmatpush1.msra.mxu0 %v738
      %1548 = vmatprep.subr.mxu0 0.0
      %1549 = vmatpush1.msra.mxu0 %v737
      %1550 = vmatprep.subr.mxu0 0.0
      %1551 = vmatpush1.msra.mxu0 %v736
      %1552 = vmatprep.subr.mxu0 0.0
      %1553 = vmatpush1.msra.mxu0 %v735
      %1554 = vmatprep.subr.mxu0 0.0
      %1555 = vmatpush1.msra.mxu0 %v734
      %1556 = vmatprep.subr.mxu0 0.0
      %1557 = vmatpush1.msra.mxu0 %v733
      %1558 = vmatprep.subr.mxu0 0.0
      %1559 = vmatpush1.msra.mxu0 %v732
      %1560 = vmatprep.subr.mxu0 0.0
      %1561 = vmatpush1.msra.mxu0 %v731
      %1562 = vmatprep.subr.mxu0 0.0
      %1563 = vmatpush1.msra.mxu0 %v730
      %1564 = vmatprep.subr.mxu0 0.0
      %1565 = vmatpush1.msra.mxu0 %v729
      %1566 = vmatprep.subr.mxu0 0.0
      %1567 = vmatpush1.msra.mxu0 %v728
      %1568 = vmatprep.subr.mxu0 0.0
      %1569 = vmatpush2.msra.mxu0 0.0
      %1570 = vmatprep.subr.mxu0 0.0
      %1571 = vmatpush2.msra.mxu0 0.0
      %1572 = vmatprep.subr.mxu0 0.0
      %1573 = vmatpush2.msra.mxu0 0.0
      %1574 = vmatprep.subr.mxu0 0.0
      %1575 = vmatpush2.msra.mxu0 0.0
      %1576 = vmatprep.subr.mxu0 0.0
      %1577 = vmatpush2.msra.mxu0 0.0
      %1578 = vmatprep.subr.mxu0 0.0
      %1579 = vmatpush2.msra.mxu0 0.0
      %1580 = vmatprep.subr.mxu0 0.0
      %1581 = vmatpush2.msra.mxu0 0.0
      %1582 = vmatprep.subr.mxu0 0.0
      %1583 = vmatpush2.msra.mxu0 0.0
      %1584 = vmatprep.subr.mxu0 0.0
      %1585 = vmatpush2.msra.mxu0 0.0
      %1586 = vmatprep.subr.mxu0 0.0
      %1587 = vmatpush2.msra.mxu0 0.0
      %1588 = vmatprep.subr.mxu0 0.0
      %1589 = vmatpush2.msra.mxu0 0.0
      %1590 = vmatprep.subr.mxu0 0.0
      %1591 = vmatpush2.msra.mxu0 0.0
      %1592 = vmatprep.subr.mxu0 0.0
      %1593 = vmatpush2.msra.mxu0 0.0
      %1594 = vmatprep.subr.mxu0 0.0
      %1595 = vmatpush2.msra.mxu0 0.0
      %1596 = vmatprep.subr.mxu0 0.0
      %1597 = vmatpush2.msra.mxu0 0.0
      %1598 = vmatprep.subr.mxu0 0.0
      %1599 = vmatpush2.msra.mxu0 0.0
      %1600 = vmatprep.mubr.f32.mxu0 0.0
      %1601 = vmatmul.mubr.f32.gmra.mxu0 %v695
      %v1602 = vpop.f32.mrf.mxu0
      %v1603 = vadd.f32 %v1378, %v1602
      %v1604 = vpop.f32.mrf.mxu0
      %1605 = vmatprep.mubr.f32.mxu0 0.0
      %1606 = vmatmul.mubr.f32.gmra.mxu0 %v696
      %v1607 = vpop.f32.mrf.mxu0
      %v1608 = vadd.f32 %v1383, %v1607
      %v1609 = vpop.f32.mrf.mxu0
      %1610 = vmatprep.mubr.f32.mxu0 0.0
      %1611 = vmatmul.mubr.f32.gmra.mxu0 %v697
      %v1612 = vpop.f32.mrf.mxu0
      %v1613 = vadd.f32 %v1388, %v1612
      %v1614 = vpop.f32.mrf.mxu0
      %1615 = vmatprep.mubr.f32.mxu0 0.0
      %1616 = vmatmul.mubr.f32.gmra.mxu0 %v698
      %v1617 = vpop.f32.mrf.mxu0
      %v1618 = vadd.f32 %v1393, %v1617
      %v1619 = vpop.f32.mrf.mxu0
      %1620 = vmatprep.mubr.f32.mxu0 0.0
      %1621 = vmatmul.mubr.f32.gmra.mxu0 %v699
      %v1622 = vpop.f32.mrf.mxu0
      %v1623 = vadd.f32 %v1398, %v1622
      %v1624 = vpop.f32.mrf.mxu0
      %1625 = vmatprep.mubr.f32.mxu0 0.0
      %1626 = vmatmul.mubr.f32.gmra.mxu0 %v700
      %v1627 = vpop.f32.mrf.mxu0
      %v1628 = vadd.f32 %v1403, %v1627
      %v1629 = vpop.f32.mrf.mxu0
      %1630 = vmatprep.mubr.f32.mxu0 0.0
      %1631 = vmatmul.mubr.f32.gmra.mxu0 %v701
      %v1632 = vpop.f32.mrf.mxu0
      %v1633 = vadd.f32 %v1408, %v1632
      %v1634 = vpop.f32.mrf.mxu0
      %1635 = vmatprep.mubr.f32.mxu0 0.0
      %1636 = vmatmul.mubr.f32.gmra.mxu0 %v702
      %v1637 = vpop.f32.mrf.mxu0
      %v1638 = vadd.f32 %v1413, %v1637
      %v1639 = vpop.f32.mrf.mxu0
      %1640 = vmatprep.mubr.f32.mxu0 0.0
      %1641 = vmatmul.mubr.f32.gmra.mxu0 %v703
      %v1642 = vpop.f32.mrf.mxu0
      %v1643 = vadd.f32 %v1418, %v1642
      %v1644 = vpop.f32.mrf.mxu0
      %1645 = vmatprep.mubr.f32.mxu0 0.0
      %1646 = vmatmul.mubr.f32.gmra.mxu0 %v704
      %v1647 = vpop.f32.mrf.mxu0
      %v1648 = vadd.f32 %v1423, %v1647
      %v1649 = vpop.f32.mrf.mxu0
      %1650 = vmatprep.mubr.f32.mxu0 0.0
      %1651 = vmatmul.mubr.f32.gmra.mxu0 %v705
      %v1652 = vpop.f32.mrf.mxu0
      %v1653 = vadd.f32 %v1428, %v1652
      %v1654 = vpop.f32.mrf.mxu0
      %1655 = vmatprep.mubr.f32.mxu0 0.0
      %1656 = vmatmul.mubr.f32.gmra.mxu0 %v706
      %v1657 = vpop.f32.mrf.mxu0
      %v1658 = vadd.f32 %v1433, %v1657
      %v1659 = vpop.f32.mrf.mxu0
      %1660 = vmatprep.mubr.f32.mxu0 0.0
      %1661 = vmatmul.mubr.f32.gmra.mxu0 %v707
      %v1662 = vpop.f32.mrf.mxu0
      %v1663 = vadd.f32 %v1438, %v1662
      %v1664 = vpop.f32.mrf.mxu0
      %1665 = vmatprep.mubr.f32.mxu0 0.0
      %1666 = vmatmul.mubr.f32.gmra.mxu0 %v708
      %v1667 = vpop.f32.mrf.mxu0
      %v1668 = vadd.f32 %v1443, %v1667
      %v1669 = vpop.f32.mrf.mxu0
      %1670 = vmatprep.mubr.f32.mxu0 0.0
      %1671 = vmatmul.mubr.f32.gmra.mxu0 %v709
      %v1672 = vpop.f32.mrf.mxu0
      %v1673 = vadd.f32 %v1448, %v1672
      %v1674 = vpop.f32.mrf.mxu0
      %1675 = vmatprep.mubr.f32.mxu0 0.0
      %1676 = vmatmul.mubr.f32.gmra.mxu0 %v710
      %v1677 = vpop.f32.mrf.mxu0
      %v1678 = vadd.f32 %v1453, %v1677
      %v1679 = vpop.f32.mrf.mxu0
      %1680 = vmatprep.mubr.f32.mxu0 0.0
      %1681 = vmatmul.mubr.f32.gmra.mxu0 %v711
      %v1682 = vpop.f32.mrf.mxu0
      %v1683 = vadd.f32 %v1458, %v1682
      %v1684 = vpop.f32.mrf.mxu0
      %1685 = vmatprep.mubr.f32.mxu0 0.0
      %1686 = vmatmul.mubr.f32.gmra.mxu0 %v712
      %v1687 = vpop.f32.mrf.mxu0
      %v1688 = vadd.f32 %v1463, %v1687
      %v1689 = vpop.f32.mrf.mxu0
      %1690 = vmatprep.mubr.f32.mxu0 0.0
      %1691 = vmatmul.mubr.f32.gmra.mxu0 %v713
      %v1692 = vpop.f32.mrf.mxu0
      %v1693 = vadd.f32 %v1468, %v1692
      %v1694 = vpop.f32.mrf.mxu0
      %1695 = vmatprep.mubr.f32.mxu0 0.0
      %1696 = vmatmul.mubr.f32.gmra.mxu0 %v714
      %v1697 = vpop.f32.mrf.mxu0
      %v1698 = vadd.f32 %v1473, %v1697
      %v1699 = vpop.f32.mrf.mxu0
      %1700 = vmatprep.mubr.f32.mxu0 0.0
      %1701 = vmatmul.mubr.f32.gmra.mxu0 %v715
      %v1702 = vpop.f32.mrf.mxu0
      %v1703 = vadd.f32 %v1478, %v1702
      %v1704 = vpop.f32.mrf.mxu0
      %1705 = vmatprep.mubr.f32.mxu0 0.0
      %1706 = vmatmul.mubr.f32.gmra.mxu0 %v716
      %v1707 = vpop.f32.mrf.mxu0
      %v1708 = vadd.f32 %v1483, %v1707
      %v1709 = vpop.f32.mrf.mxu0
      %1710 = vmatprep.mubr.f32.mxu0 0.0
      %1711 = vmatmul.mubr.f32.gmra.mxu0 %v717
      %v1712 = vpop.f32.mrf.mxu0
      %v1713 = vadd.f32 %v1488, %v1712
      %v1714 = vpop.f32.mrf.mxu0
      %1715 = vmatprep.mubr.f32.mxu0 0.0
      %1716 = vmatmul.mubr.f32.gmra.mxu0 %v718
      %v1717 = vpop.f32.mrf.mxu0
      %v1718 = vadd.f32 %v1493, %v1717
      %v1719 = vpop.f32.mrf.mxu0
      %1720 = vmatprep.mubr.f32.mxu0 0.0
      %1721 = vmatmul.mubr.f32.gmra.mxu0 %v719
      %v1722 = vpop.f32.mrf.mxu0
      %v1723 = vadd.f32 %v1498, %v1722
      %v1724 = vpop.f32.mrf.mxu0
      %1725 = vmatprep.mubr.f32.mxu0 0.0
      %1726 = vmatmul.mubr.f32.gmra.mxu0 %v720
      %v1727 = vpop.f32.mrf.mxu0
      %v1728 = vadd.f32 %v1503, %v1727
      %v1729 = vpop.f32.mrf.mxu0
      %1730 = vmatprep.mubr.f32.mxu0 0.0
      %1731 = vmatmul.mubr.f32.gmra.mxu0 %v721
      %v1732 = vpop.f32.mrf.mxu0
      %v1733 = vadd.f32 %v1508, %v1732
      %v1734 = vpop.f32.mrf.mxu0
      %1735 = vmatprep.mubr.f32.mxu0 0.0
      %1736 = vmatmul.mubr.f32.gmra.mxu0 %v722
      %v1737 = vpop.f32.mrf.mxu0
      %v1738 = vadd.f32 %v1513, %v1737
      %v1739 = vpop.f32.mrf.mxu0
      %1740 = vmatprep.mubr.f32.mxu0 0.0
      %1741 = vmatmul.mubr.f32.gmra.mxu0 %v723
      %v1742 = vpop.f32.mrf.mxu0
      %v1743 = vadd.f32 %v1518, %v1742
      %v1744 = vpop.f32.mrf.mxu0
      %1745 = vmatprep.mubr.f32.mxu0 0.0
      %1746 = vmatmul.mubr.f32.gmra.mxu0 %v724
      %v1747 = vpop.f32.mrf.mxu0
      %v1748 = vadd.f32 %v1523, %v1747
      %v1749 = vpop.f32.mrf.mxu0
      %1750 = vmatprep.mubr.f32.mxu0 0.0
      %1751 = vmatmul.mubr.f32.gmra.mxu0 %v725
      %v1752 = vpop.f32.mrf.mxu0
      %v1753 = vadd.f32 %v1528, %v1752
      %v1754 = vpop.f32.mrf.mxu0
      %1755 = vmatprep.mubr.f32.mxu0 0.0
      %1756 = vmatmul.mubr.f32.gmra.mxu0 %v726
      %v1757 = vpop.f32.mrf.mxu0
      %v1758 = vadd.f32 %v1533, %v1757
      %v1759 = vpop.f32.mrf.mxu0
      %1760 = vdwg.mxu0
      %v1761 = vld [vmem:[#allocation2 + $0x19] sm:$0xff]
      %v1762 = vld [vmem:[#allocation2 + $0x21] sm:$0xff]
      %v1763 = vld [vmem:[#allocation2 + $0x29] sm:$0xff]
      %v1764 = vld [vmem:[#allocation2 + $0x31] sm:$0xff]
      %v1765 = vld [vmem:[#allocation2 + $0x39] sm:$0xff]
      %v1766 = vld [vmem:[#allocation2 + $0x41] sm:$0xff]
      %v1767 = vld [vmem:[#allocation2 + $0x49] sm:$0xff]
      %v1768 = vld [vmem:[#allocation2 + $0x51] sm:$0xff]
      %v1769 = vld [vmem:[#allocation2 + $0x59] sm:$0xff]
      %v1770 = vld [vmem:[#allocation2 + $0x61] sm:$0xff]
      %v1771 = vld [vmem:[#allocation2 + $0x69] sm:$0xff]
      %v1772 = vld [vmem:[#allocation2 + $0x71] sm:$0xff]
      %v1773 = vld [vmem:[#allocation2 + $0x79] sm:$0xff]
      %v1774 = vld [vmem:[#allocation2 + $0x81] sm:$0xff]
      %v1775 = vld [vmem:[#allocation2 + $0x89] sm:$0xff]
      %v1776 = vld [vmem:[#allocation2 + $0x91] sm:$0xff]
      %v1777 = vld [vmem:[#allocation2 + $0x99] sm:$0xff]
      %v1778 = vld [vmem:[#allocation2 + $0xa1] sm:$0xff]
      %v1779 = vld [vmem:[#allocation2 + $0xa9] sm:$0xff]
      %v1780 = vld [vmem:[#allocation2 + $0xb1] sm:$0xff]
      %v1781 = vld [vmem:[#allocation2 + $0xb9] sm:$0xff]
      %v1782 = vld [vmem:[#allocation2 + $0xc1] sm:$0xff]
      %v1783 = vld [vmem:[#allocation2 + $0xc9] sm:$0xff]
      %v1784 = vld [vmem:[#allocation2 + $0xd1] sm:$0xff]
      %v1785 = vld [vmem:[#allocation2 + $0xd9] sm:$0xff]
      %v1786 = vld [vmem:[#allocation2 + $0xe1] sm:$0xff]
      %v1787 = vld [vmem:[#allocation2 + $0xe9] sm:$0xff]
      %v1788 = vld [vmem:[#allocation2 + $0xf1] sm:$0xff]
      %v1789 = vld [vmem:[#allocation2 + $0xf9] sm:$0xff]
      %v1790 = vld [vmem:[#allocation2 + $0x101] sm:$0xff]
      %v1791 = vld [vmem:[#allocation2 + $0x109] sm:$0xff]
      %v1792 = vld [vmem:[#allocation2 + $0x111] sm:$0xff]
      %s1793 = scalar_lea.vmem %s3, 640
      %v1794 = vld [vmem:[%s1793] sm:$0xff]
      %v1795 = vld [vmem:[%s1793 + $0x8] sm:$0xff]
      %v1796 = vld [vmem:[%s1793 + $0x10] sm:$0xff]
      %v1797 = vld [vmem:[%s1793 + $0x18] sm:$0xff]
      %v1798 = vld [vmem:[%s1793 + $0x20] sm:$0xff]
      %v1799 = vld [vmem:[%s1793 + $0x28] sm:$0xff]
      %v1800 = vld [vmem:[%s1793 + $0x30] sm:$0xff]
      %v1801 = vld [vmem:[%s1793 + $0x38] sm:$0xff]
      %v1802 = vld [vmem:[%s1793 + $0x40] sm:$0xff]
      %v1803 = vld [vmem:[%s1793 + $0x48] sm:$0xff]
      %v1804 = vld [vmem:[%s1793 + $0x50] sm:$0xff]
      %v1805 = vld [vmem:[%s1793 + $0x58] sm:$0xff]
      %v1806 = vld [vmem:[%s1793 + $0x60] sm:$0xff]
      %v1807 = vld [vmem:[%s1793 + $0x68] sm:$0xff]
      %v1808 = vld [vmem:[%s1793 + $0x70] sm:$0xff]
      %v1809 = vld [vmem:[%s1793 + $0x78] sm:$0xff]
      %1810 = vmatprep.subr.mxu0 0.0
      %1811 = vmatpush1.msra.mxu0 %v1809
      %1812 = vmatprep.subr.mxu0 0.0
      %1813 = vmatpush1.msra.mxu0 %v1808
      %1814 = vmatprep.subr.mxu0 0.0
      %1815 = vmatpush1.msra.mxu0 %v1807
      %1816 = vmatprep.subr.mxu0 0.0
      %1817 = vmatpush1.msra.mxu0 %v1806
      %1818 = vmatprep.subr.mxu0 0.0
      %1819 = vmatpush1.msra.mxu0 %v1805
      %1820 = vmatprep.subr.mxu0 0.0
      %1821 = vmatpush1.msra.mxu0 %v1804
      %1822 = vmatprep.subr.mxu0 0.0
      %1823 = vmatpush1.msra.mxu0 %v1803
      %1824 = vmatprep.subr.mxu0 0.0
      %1825 = vmatpush1.msra.mxu0 %v1802
      %1826 = vmatprep.subr.mxu0 0.0
      %1827 = vmatpush1.msra.mxu0 %v1801
      %1828 = vmatprep.subr.mxu0 0.0
      %1829 = vmatpush1.msra.mxu0 %v1800
      %1830 = vmatprep.subr.mxu0 0.0
      %1831 = vmatpush1.msra.mxu0 %v1799
      %1832 = vmatprep.subr.mxu0 0.0
      %1833 = vmatpush1.msra.mxu0 %v1798
      %1834 = vmatprep.subr.mxu0 0.0
      %1835 = vmatpush1.msra.mxu0 %v1797
      %1836 = vmatprep.subr.mxu0 0.0
      %1837 = vmatpush1.msra.mxu0 %v1796
      %1838 = vmatprep.subr.mxu0 0.0
      %1839 = vmatpush1.msra.mxu0 %v1795
      %1840 = vmatprep.subr.mxu0 0.0
      %1841 = vmatpush1.msra.mxu0 %v1794
      %1842 = vmatprep.subr.mxu0 0.0
      %1843 = vmatpush2.msra.mxu0 0.0
      %1844 = vmatprep.subr.mxu0 0.0
      %1845 = vmatpush2.msra.mxu0 0.0
      %1846 = vmatprep.subr.mxu0 0.0
      %1847 = vmatpush2.msra.mxu0 0.0
      %1848 = vmatprep.subr.mxu0 0.0
      %1849 = vmatpush2.msra.mxu0 0.0
      %1850 = vmatprep.subr.mxu0 0.0
      %1851 = vmatpush2.msra.mxu0 0.0
      %1852 = vmatprep.subr.mxu0 0.0
      %1853 = vmatpush2.msra.mxu0 0.0
      %1854 = vmatprep.subr.mxu0 0.0
      %1855 = vmatpush2.msra.mxu0 0.0
      %1856 = vmatprep.subr.mxu0 0.0
      %1857 = vmatpush2.msra.mxu0 0.0
      %1858 = vmatprep.subr.mxu0 0.0
      %1859 = vmatpush2.msra.mxu0 0.0
      %1860 = vmatprep.subr.mxu0 0.0
      %1861 = vmatpush2.msra.mxu0 0.0
      %1862 = vmatprep.subr.mxu0 0.0
      %1863 = vmatpush2.msra.mxu0 0.0
      %1864 = vmatprep.subr.mxu0 0.0
      %1865 = vmatpush2.msra.mxu0 0.0
      %1866 = vmatprep.subr.mxu0 0.0
      %1867 = vmatpush2.msra.mxu0 0.0
      %1868 = vmatprep.subr.mxu0 0.0
      %1869 = vmatpush2.msra.mxu0 0.0
      %1870 = vmatprep.subr.mxu0 0.0
      %1871 = vmatpush2.msra.mxu0 0.0
      %1872 = vmatprep.subr.mxu0 0.0
      %1873 = vmatpush2.msra.mxu0 0.0
      %1874 = vmatprep.mubr.f32.mxu0 0.0
      %1875 = vmatmul.mubr.f32.gmra.mxu0 %v1761
      %v1876 = vpop.f32.mrf.mxu0
      %v1877 = vadd.f32 0.0, %v1876
      %v1878 = vpop.f32.mrf.mxu0
      %1879 = vmatprep.mubr.f32.mxu0 0.0
      %1880 = vmatmul.mubr.f32.gmra.mxu0 %v1762
      %v1881 = vpop.f32.mrf.mxu0
      %v1882 = vadd.f32 0.0, %v1881
      %v1883 = vpop.f32.mrf.mxu0
      %1884 = vmatprep.mubr.f32.mxu0 0.0
      %1885 = vmatmul.mubr.f32.gmra.mxu0 %v1763
      %v1886 = vpop.f32.mrf.mxu0
      %v1887 = vadd.f32 0.0, %v1886
      %v1888 = vpop.f32.mrf.mxu0
      %1889 = vmatprep.mubr.f32.mxu0 0.0
      %1890 = vmatmul.mubr.f32.gmra.mxu0 %v1764
      %v1891 = vpop.f32.mrf.mxu0
      %v1892 = vadd.f32 0.0, %v1891
      %v1893 = vpop.f32.mrf.mxu0
      %1894 = vmatprep.mubr.f32.mxu0 0.0
      %1895 = vmatmul.mubr.f32.gmra.mxu0 %v1765
      %v1896 = vpop.f32.mrf.mxu0
      %v1897 = vadd.f32 0.0, %v1896
      %v1898 = vpop.f32.mrf.mxu0
      %1899 = vmatprep.mubr.f32.mxu0 0.0
      %1900 = vmatmul.mubr.f32.gmra.mxu0 %v1766
      %v1901 = vpop.f32.mrf.mxu0
      %v1902 = vadd.f32 0.0, %v1901
      %v1903 = vpop.f32.mrf.mxu0
      %1904 = vmatprep.mubr.f32.mxu0 0.0
      %1905 = vmatmul.mubr.f32.gmra.mxu0 %v1767
      %v1906 = vpop.f32.mrf.mxu0
      %v1907 = vadd.f32 0.0, %v1906
      %v1908 = vpop.f32.mrf.mxu0
      %1909 = vmatprep.mubr.f32.mxu0 0.0
      %1910 = vmatmul.mubr.f32.gmra.mxu0 %v1768
      %v1911 = vpop.f32.mrf.mxu0
      %v1912 = vadd.f32 0.0, %v1911
      %v1913 = vpop.f32.mrf.mxu0
      %1914 = vmatprep.mubr.f32.mxu0 0.0
      %1915 = vmatmul.mubr.f32.gmra.mxu0 %v1769
      %v1916 = vpop.f32.mrf.mxu0
      %v1917 = vadd.f32 0.0, %v1916
      %v1918 = vpop.f32.mrf.mxu0
      %1919 = vmatprep.mubr.f32.mxu0 0.0
      %1920 = vmatmul.mubr.f32.gmra.mxu0 %v1770
      %v1921 = vpop.f32.mrf.mxu0
      %v1922 = vadd.f32 0.0, %v1921
      %v1923 = vpop.f32.mrf.mxu0
      %1924 = vmatprep.mubr.f32.mxu0 0.0
      %1925 = vmatmul.mubr.f32.gmra.mxu0 %v1771
      %v1926 = vpop.f32.mrf.mxu0
      %v1927 = vadd.f32 0.0, %v1926
      %v1928 = vpop.f32.mrf.mxu0
      %1929 = vmatprep.mubr.f32.mxu0 0.0
      %1930 = vmatmul.mubr.f32.gmra.mxu0 %v1772
      %v1931 = vpop.f32.mrf.mxu0
      %v1932 = vadd.f32 0.0, %v1931
      %v1933 = vpop.f32.mrf.mxu0
      %1934 = vmatprep.mubr.f32.mxu0 0.0
      %1935 = vmatmul.mubr.f32.gmra.mxu0 %v1773
      %v1936 = vpop.f32.mrf.mxu0
      %v1937 = vadd.f32 0.0, %v1936
      %v1938 = vpop.f32.mrf.mxu0
      %1939 = vmatprep.mubr.f32.mxu0 0.0
      %1940 = vmatmul.mubr.f32.gmra.mxu0 %v1774
      %v1941 = vpop.f32.mrf.mxu0
      %v1942 = vadd.f32 0.0, %v1941
      %v1943 = vpop.f32.mrf.mxu0
      %1944 = vmatprep.mubr.f32.mxu0 0.0
      %1945 = vmatmul.mubr.f32.gmra.mxu0 %v1775
      %v1946 = vpop.f32.mrf.mxu0
      %v1947 = vadd.f32 0.0, %v1946
      %v1948 = vpop.f32.mrf.mxu0
      %1949 = vmatprep.mubr.f32.mxu0 0.0
      %1950 = vmatmul.mubr.f32.gmra.mxu0 %v1776
      %v1951 = vpop.f32.mrf.mxu0
      %v1952 = vadd.f32 0.0, %v1951
      %v1953 = vpop.f32.mrf.mxu0
      %1954 = vmatprep.mubr.f32.mxu0 0.0
      %1955 = vmatmul.mubr.f32.gmra.mxu0 %v1777
      %v1956 = vpop.f32.mrf.mxu0
      %v1957 = vadd.f32 0.0, %v1956
      %v1958 = vpop.f32.mrf.mxu0
      %1959 = vmatprep.mubr.f32.mxu0 0.0
      %1960 = vmatmul.mubr.f32.gmra.mxu0 %v1778
      %v1961 = vpop.f32.mrf.mxu0
      %v1962 = vadd.f32 0.0, %v1961
      %v1963 = vpop.f32.mrf.mxu0
      %1964 = vmatprep.mubr.f32.mxu0 0.0
      %1965 = vmatmul.mubr.f32.gmra.mxu0 %v1779
      %v1966 = vpop.f32.mrf.mxu0
      %v1967 = vadd.f32 0.0, %v1966
      %v1968 = vpop.f32.mrf.mxu0
      %1969 = vmatprep.mubr.f32.mxu0 0.0
      %1970 = vmatmul.mubr.f32.gmra.mxu0 %v1780
      %v1971 = vpop.f32.mrf.mxu0
      %v1972 = vadd.f32 0.0, %v1971
      %v1973 = vpop.f32.mrf.mxu0
      %1974 = vmatprep.mubr.f32.mxu0 0.0
      %1975 = vmatmul.mubr.f32.gmra.mxu0 %v1781
      %v1976 = vpop.f32.mrf.mxu0
      %v1977 = vadd.f32 0.0, %v1976
      %v1978 = vpop.f32.mrf.mxu0
      %1979 = vmatprep.mubr.f32.mxu0 0.0
      %1980 = vmatmul.mubr.f32.gmra.mxu0 %v1782
      %v1981 = vpop.f32.mrf.mxu0
      %v1982 = vadd.f32 0.0, %v1981
      %v1983 = vpop.f32.mrf.mxu0
      %1984 = vmatprep.mubr.f32.mxu0 0.0
      %1985 = vmatmul.mubr.f32.gmra.mxu0 %v1783
      %v1986 = vpop.f32.mrf.mxu0
      %v1987 = vadd.f32 0.0, %v1986
      %v1988 = vpop.f32.mrf.mxu0
      %1989 = vmatprep.mubr.f32.mxu0 0.0
      %1990 = vmatmul.mubr.f32.gmra.mxu0 %v1784
      %v1991 = vpop.f32.mrf.mxu0
      %v1992 = vadd.f32 0.0, %v1991
      %v1993 = vpop.f32.mrf.mxu0
      %1994 = vmatprep.mubr.f32.mxu0 0.0
      %1995 = vmatmul.mubr.f32.gmra.mxu0 %v1785
      %v1996 = vpop.f32.mrf.mxu0
      %v1997 = vadd.f32 0.0, %v1996
      %v1998 = vpop.f32.mrf.mxu0
      %1999 = vmatprep.mubr.f32.mxu0 0.0
      %2000 = vmatmul.mubr.f32.gmra.mxu0 %v1786
      %v2001 = vpop.f32.mrf.mxu0
      %v2002 = vadd.f32 0.0, %v2001
      %v2003 = vpop.f32.mrf.mxu0
      %2004 = vmatprep.mubr.f32.mxu0 0.0
      %2005 = vmatmul.mubr.f32.gmra.mxu0 %v1787
      %v2006 = vpop.f32.mrf.mxu0
      %v2007 = vadd.f32 0.0, %v2006
      %v2008 = vpop.f32.mrf.mxu0
      %2009 = vmatprep.mubr.f32.mxu0 0.0
      %2010 = vmatmul.mubr.f32.gmra.mxu0 %v1788
      %v2011 = vpop.f32.mrf.mxu0
      %v2012 = vadd.f32 0.0, %v2011
      %v2013 = vpop.f32.mrf.mxu0
      %2014 = vmatprep.mubr.f32.mxu0 0.0
      %2015 = vmatmul.mubr.f32.gmra.mxu0 %v1789
      %v2016 = vpop.f32.mrf.mxu0
      %v2017 = vadd.f32 0.0, %v2016
      %v2018 = vpop.f32.mrf.mxu0
      %2019 = vmatprep.mubr.f32.mxu0 0.0
      %2020 = vmatmul.mubr.f32.gmra.mxu0 %v1790
      %v2021 = vpop.f32.mrf.mxu0
      %v2022 = vadd.f32 0.0, %v2021
      %v2023 = vpop.f32.mrf.mxu0
      %2024 = vmatprep.mubr.f32.mxu0 0.0
      %2025 = vmatmul.mubr.f32.gmra.mxu0 %v1791
      %v2026 = vpop.f32.mrf.mxu0
      %v2027 = vadd.f32 0.0, %v2026
      %v2028 = vpop.f32.mrf.mxu0
      %2029 = vmatprep.mubr.f32.mxu0 0.0
      %2030 = vmatmul.mubr.f32.gmra.mxu0 %v1792
      %v2031 = vpop.f32.mrf.mxu0
      %v2032 = vadd.f32 0.0, %v2031
      %v2033 = vpop.f32.mrf.mxu0
      %2034 = vdwg.mxu0
      %2035 = vmatprep.subr.mxu0 0.0
      %2036 = vmatpush1.msra.mxu0 %v792
      %2037 = vmatprep.subr.mxu0 0.0
      %2038 = vmatpush1.msra.mxu0 %v791
      %2039 = vmatprep.subr.mxu0 0.0
      %2040 = vmatpush1.msra.mxu0 %v790
      %2041 = vmatprep.subr.mxu0 0.0
      %2042 = vmatpush1.msra.mxu0 %v789
      %2043 = vmatprep.subr.mxu0 0.0
      %2044 = vmatpush1.msra.mxu0 %v788
      %2045 = vmatprep.subr.mxu0 0.0
      %2046 = vmatpush1.msra.mxu0 %v787
      %2047 = vmatprep.subr.mxu0 0.0
      %2048 = vmatpush1.msra.mxu0 %v786
      %2049 = vmatprep.subr.mxu0 0.0
      %2050 = vmatpush1.msra.mxu0 %v785
      %2051 = vmatprep.subr.mxu0 0.0
      %2052 = vmatpush1.msra.mxu0 %v784
      %2053 = vmatprep.subr.mxu0 0.0
      %2054 = vmatpush1.msra.mxu0 %v783
      %2055 = vmatprep.subr.mxu0 0.0
      %2056 = vmatpush1.msra.mxu0 %v782
      %2057 = vmatprep.subr.mxu0 0.0
      %2058 = vmatpush1.msra.mxu0 %v781
      %2059 = vmatprep.subr.mxu0 0.0
      %2060 = vmatpush1.msra.mxu0 %v780
      %2061 = vmatprep.subr.mxu0 0.0
      %2062 = vmatpush1.msra.mxu0 %v779
      %2063 = vmatprep.subr.mxu0 0.0
      %2064 = vmatpush1.msra.mxu0 %v778
      %2065 = vmatprep.subr.mxu0 0.0
      %2066 = vmatpush1.msra.mxu0 %v777
      %2067 = vmatprep.subr.mxu0 0.0
      %2068 = vmatpush2.msra.mxu0 0.0
      %2069 = vmatprep.subr.mxu0 0.0
      %2070 = vmatpush2.msra.mxu0 0.0
      %2071 = vmatprep.subr.mxu0 0.0
      %2072 = vmatpush2.msra.mxu0 0.0
      %2073 = vmatprep.subr.mxu0 0.0
      %2074 = vmatpush2.msra.mxu0 0.0
      %2075 = vmatprep.subr.mxu0 0.0
      %2076 = vmatpush2.msra.mxu0 0.0
      %2077 = vmatprep.subr.mxu0 0.0
      %2078 = vmatpush2.msra.mxu0 0.0
      %2079 = vmatprep.subr.mxu0 0.0
      %2080 = vmatpush2.msra.mxu0 0.0
      %2081 = vmatprep.subr.mxu0 0.0
      %2082 = vmatpush2.msra.mxu0 0.0
      %2083 = vmatprep.subr.mxu0 0.0
      %2084 = vmatpush2.msra.mxu0 0.0
      %2085 = vmatprep.subr.mxu0 0.0
      %2086 = vmatpush2.msra.mxu0 0.0
      %2087 = vmatprep.subr.mxu0 0.0
      %2088 = vmatpush2.msra.mxu0 0.0
      %2089 = vmatprep.subr.mxu0 0.0
      %2090 = vmatpush2.msra.mxu0 0.0
      %2091 = vmatprep.subr.mxu0 0.0
      %2092 = vmatpush2.msra.mxu0 0.0
      %2093 = vmatprep.subr.mxu0 0.0
      %2094 = vmatpush2.msra.mxu0 0.0
      %2095 = vmatprep.subr.mxu0 0.0
      %2096 = vmatpush2.msra.mxu0 0.0
      %2097 = vmatprep.subr.mxu0 0.0
      %2098 = vmatpush2.msra.mxu0 0.0
      %2099 = vmatprep.mubr.f32.mxu0 0.0
      %2100 = vmatmul.mubr.f32.gmra.mxu0 %v744
      %v2101 = vpop.f32.mrf.mxu0
      %v2102 = vadd.f32 %v1877, %v2101
      %v2103 = vpop.f32.mrf.mxu0
      %2104 = vmatprep.mubr.f32.mxu0 0.0
      %2105 = vmatmul.mubr.f32.gmra.mxu0 %v745
      %v2106 = vpop.f32.mrf.mxu0
      %v2107 = vadd.f32 %v1882, %v2106
      %v2108 = vpop.f32.mrf.mxu0
      %2109 = vmatprep.mubr.f32.mxu0 0.0
      %2110 = vmatmul.mubr.f32.gmra.mxu0 %v746
      %v2111 = vpop.f32.mrf.mxu0
      %v2112 = vadd.f32 %v1887, %v2111
      %v2113 = vpop.f32.mrf.mxu0
      %2114 = vmatprep.mubr.f32.mxu0 0.0
      %2115 = vmatmul.mubr.f32.gmra.mxu0 %v747
      %v2116 = vpop.f32.mrf.mxu0
      %v2117 = vadd.f32 %v1892, %v2116
      %v2118 = vpop.f32.mrf.mxu0
      %2119 = vmatprep.mubr.f32.mxu0 0.0
      %2120 = vmatmul.mubr.f32.gmra.mxu0 %v748
      %v2121 = vpop.f32.mrf.mxu0
      %v2122 = vadd.f32 %v1897, %v2121
      %v2123 = vpop.f32.mrf.mxu0
      %2124 = vmatprep.mubr.f32.mxu0 0.0
      %2125 = vmatmul.mubr.f32.gmra.mxu0 %v749
      %v2126 = vpop.f32.mrf.mxu0
      %v2127 = vadd.f32 %v1902, %v2126
      %v2128 = vpop.f32.mrf.mxu0
      %2129 = vmatprep.mubr.f32.mxu0 0.0
      %2130 = vmatmul.mubr.f32.gmra.mxu0 %v750
      %v2131 = vpop.f32.mrf.mxu0
      %v2132 = vadd.f32 %v1907, %v2131
      %v2133 = vpop.f32.mrf.mxu0
      %2134 = vmatprep.mubr.f32.mxu0 0.0
      %2135 = vmatmul.mubr.f32.gmra.mxu0 %v751
      %v2136 = vpop.f32.mrf.mxu0
      %v2137 = vadd.f32 %v1912, %v2136
      %v2138 = vpop.f32.mrf.mxu0
      %2139 = vmatprep.mubr.f32.mxu0 0.0
      %2140 = vmatmul.mubr.f32.gmra.mxu0 %v752
      %v2141 = vpop.f32.mrf.mxu0
      %v2142 = vadd.f32 %v1917, %v2141
      %v2143 = vpop.f32.mrf.mxu0
      %2144 = vmatprep.mubr.f32.mxu0 0.0
      %2145 = vmatmul.mubr.f32.gmra.mxu0 %v753
      %v2146 = vpop.f32.mrf.mxu0
      %v2147 = vadd.f32 %v1922, %v2146
      %v2148 = vpop.f32.mrf.mxu0
      %2149 = vmatprep.mubr.f32.mxu0 0.0
      %2150 = vmatmul.mubr.f32.gmra.mxu0 %v754
      %v2151 = vpop.f32.mrf.mxu0
      %v2152 = vadd.f32 %v1927, %v2151
      %v2153 = vpop.f32.mrf.mxu0
      %2154 = vmatprep.mubr.f32.mxu0 0.0
      %2155 = vmatmul.mubr.f32.gmra.mxu0 %v755
      %v2156 = vpop.f32.mrf.mxu0
      %v2157 = vadd.f32 %v1932, %v2156
      %v2158 = vpop.f32.mrf.mxu0
      %2159 = vmatprep.mubr.f32.mxu0 0.0
      %2160 = vmatmul.mubr.f32.gmra.mxu0 %v756
      %v2161 = vpop.f32.mrf.mxu0
      %v2162 = vadd.f32 %v1937, %v2161
      %v2163 = vpop.f32.mrf.mxu0
      %2164 = vmatprep.mubr.f32.mxu0 0.0
      %2165 = vmatmul.mubr.f32.gmra.mxu0 %v757
      %v2166 = vpop.f32.mrf.mxu0
      %v2167 = vadd.f32 %v1942, %v2166
      %v2168 = vpop.f32.mrf.mxu0
      %2169 = vmatprep.mubr.f32.mxu0 0.0
      %2170 = vmatmul.mubr.f32.gmra.mxu0 %v758
      %v2171 = vpop.f32.mrf.mxu0
      %v2172 = vadd.f32 %v1947, %v2171
      %v2173 = vpop.f32.mrf.mxu0
      %2174 = vmatprep.mubr.f32.mxu0 0.0
      %2175 = vmatmul.mubr.f32.gmra.mxu0 %v759
      %v2176 = vpop.f32.mrf.mxu0
      %v2177 = vadd.f32 %v1952, %v2176
      %v2178 = vpop.f32.mrf.mxu0
      %2179 = vmatprep.mubr.f32.mxu0 0.0
      %2180 = vmatmul.mubr.f32.gmra.mxu0 %v760
      %v2181 = vpop.f32.mrf.mxu0
      %v2182 = vadd.f32 %v1957, %v2181
      %v2183 = vpop.f32.mrf.mxu0
      %2184 = vmatprep.mubr.f32.mxu0 0.0
      %2185 = vmatmul.mubr.f32.gmra.mxu0 %v761
      %v2186 = vpop.f32.mrf.mxu0
      %v2187 = vadd.f32 %v1962, %v2186
      %v2188 = vpop.f32.mrf.mxu0
      %2189 = vmatprep.mubr.f32.mxu0 0.0
      %2190 = vmatmul.mubr.f32.gmra.mxu0 %v762
      %v2191 = vpop.f32.mrf.mxu0
      %v2192 = vadd.f32 %v1967, %v2191
      %v2193 = vpop.f32.mrf.mxu0
      %2194 = vmatprep.mubr.f32.mxu0 0.0
      %2195 = vmatmul.mubr.f32.gmra.mxu0 %v763
      %v2196 = vpop.f32.mrf.mxu0
      %v2197 = vadd.f32 %v1972, %v2196
      %v2198 = vpop.f32.mrf.mxu0
      %2199 = vmatprep.mubr.f32.mxu0 0.0
      %2200 = vmatmul.mubr.f32.gmra.mxu0 %v764
      %v2201 = vpop.f32.mrf.mxu0
      %v2202 = vadd.f32 %v1977, %v2201
      %v2203 = vpop.f32.mrf.mxu0
      %2204 = vmatprep.mubr.f32.mxu0 0.0
      %2205 = vmatmul.mubr.f32.gmra.mxu0 %v765
      %v2206 = vpop.f32.mrf.mxu0
      %v2207 = vadd.f32 %v1982, %v2206
      %v2208 = vpop.f32.mrf.mxu0
      %2209 = vmatprep.mubr.f32.mxu0 0.0
      %2210 = vmatmul.mubr.f32.gmra.mxu0 %v766
      %v2211 = vpop.f32.mrf.mxu0
      %v2212 = vadd.f32 %v1987, %v2211
      %v2213 = vpop.f32.mrf.mxu0
      %2214 = vmatprep.mubr.f32.mxu0 0.0
      %2215 = vmatmul.mubr.f32.gmra.mxu0 %v767
      %v2216 = vpop.f32.mrf.mxu0
      %v2217 = vadd.f32 %v1992, %v2216
      %v2218 = vpop.f32.mrf.mxu0
      %2219 = vmatprep.mubr.f32.mxu0 0.0
      %2220 = vmatmul.mubr.f32.gmra.mxu0 %v768
      %v2221 = vpop.f32.mrf.mxu0
      %v2222 = vadd.f32 %v1997, %v2221
      %v2223 = vpop.f32.mrf.mxu0
      %2224 = vmatprep.mubr.f32.mxu0 0.0
      %2225 = vmatmul.mubr.f32.gmra.mxu0 %v769
      %v2226 = vpop.f32.mrf.mxu0
      %v2227 = vadd.f32 %v2002, %v2226
      %v2228 = vpop.f32.mrf.mxu0
      %2229 = vmatprep.mubr.f32.mxu0 0.0
      %2230 = vmatmul.mubr.f32.gmra.mxu0 %v770
      %v2231 = vpop.f32.mrf.mxu0
      %v2232 = vadd.f32 %v2007, %v2231
      %v2233 = vpop.f32.mrf.mxu0
      %2234 = vmatprep.mubr.f32.mxu0 0.0
      %2235 = vmatmul.mubr.f32.gmra.mxu0 %v771
      %v2236 = vpop.f32.mrf.mxu0
      %v2237 = vadd.f32 %v2012, %v2236
      %v2238 = vpop.f32.mrf.mxu0
      %2239 = vmatprep.mubr.f32.mxu0 0.0
      %2240 = vmatmul.mubr.f32.gmra.mxu0 %v772
      %v2241 = vpop.f32.mrf.mxu0
      %v2242 = vadd.f32 %v2017, %v2241
      %v2243 = vpop.f32.mrf.mxu0
      %2244 = vmatprep.mubr.f32.mxu0 0.0
      %2245 = vmatmul.mubr.f32.gmra.mxu0 %v773
      %v2246 = vpop.f32.mrf.mxu0
      %v2247 = vadd.f32 %v2022, %v2246
      %v2248 = vpop.f32.mrf.mxu0
      %2249 = vmatprep.mubr.f32.mxu0 0.0
      %2250 = vmatmul.mubr.f32.gmra.mxu0 %v774
      %v2251 = vpop.f32.mrf.mxu0
      %v2252 = vadd.f32 %v2027, %v2251
      %v2253 = vpop.f32.mrf.mxu0
      %2254 = vmatprep.mubr.f32.mxu0 0.0
      %2255 = vmatmul.mubr.f32.gmra.mxu0 %v775
      %v2256 = vpop.f32.mrf.mxu0
      %v2257 = vadd.f32 %v2032, %v2256
      %v2258 = vpop.f32.mrf.mxu0
      %2259 = vdwg.mxu0
      %v2260 = vld [vmem:[#allocation2 + $0x27] sm:$0xff]
      %v2261 = vld [vmem:[#allocation2 + $0x2f] sm:$0xff]
      %v2262 = vld [vmem:[#allocation2 + $0x37] sm:$0xff]
      %v2263 = vld [vmem:[#allocation2 + $0x3f] sm:$0xff]
      %v2264 = vld [vmem:[#allocation2 + $0x47] sm:$0xff]
      %v2265 = vld [vmem:[#allocation2 + $0x4f] sm:$0xff]
      %v2266 = vld [vmem:[#allocation2 + $0x57] sm:$0xff]
      %v2267 = vld [vmem:[#allocation2 + $0x5f] sm:$0xff]
      %v2268 = vld [vmem:[#allocation2 + $0x67] sm:$0xff]
      %v2269 = vld [vmem:[#allocation2 + $0x6f] sm:$0xff]
      %v2270 = vld [vmem:[#allocation2 + $0x77] sm:$0xff]
      %v2271 = vld [vmem:[#allocation2 + $0x7f] sm:$0xff]
      %v2272 = vld [vmem:[#allocation2 + $0x87] sm:$0xff]
      %v2273 = vld [vmem:[#allocation2 + $0x8f] sm:$0xff]
      %v2274 = vld [vmem:[#allocation2 + $0x97] sm:$0xff]
      %v2275 = vld [vmem:[#allocation2 + $0x9f] sm:$0xff]
      %v2276 = vld [vmem:[#allocation2 + $0xa7] sm:$0xff]
      %v2277 = vld [vmem:[#allocation2 + $0xaf] sm:$0xff]
      %v2278 = vld [vmem:[#allocation2 + $0xb7] sm:$0xff]
      %v2279 = vld [vmem:[#allocation2 + $0xbf] sm:$0xff]
      %v2280 = vld [vmem:[#allocation2 + $0xc7] sm:$0xff]
      %v2281 = vld [vmem:[#allocation2 + $0xcf] sm:$0xff]
      %v2282 = vld [vmem:[#allocation2 + $0xd7] sm:$0xff]
      %v2283 = vld [vmem:[#allocation2 + $0xdf] sm:$0xff]
      %v2284 = vld [vmem:[#allocation2 + $0xe7] sm:$0xff]
      %v2285 = vld [vmem:[#allocation2 + $0xef] sm:$0xff]
      %v2286 = vld [vmem:[#allocation2 + $0xf7] sm:$0xff]
      %v2287 = vld [vmem:[#allocation2 + $0xff] sm:$0xff]
      %v2288 = vld [vmem:[#allocation2 + $0x107] sm:$0xff]
      %v2289 = vld [vmem:[#allocation2 + $0x10f] sm:$0xff]
      %v2290 = vld [vmem:[#allocation2 + $0x117] sm:$0xff]
      %v2291 = vld [vmem:[#allocation2 + $0x11f] sm:$0xff]
      %s2292 = scalar_lea.vmem %s3, 768
      %v2293 = vld [vmem:[%s2292] sm:$0xff]
      %v2294 = vld [vmem:[%s2292 + $0x8] sm:$0xff]
      %v2295 = vld [vmem:[%s2292 + $0x10] sm:$0xff]
      %v2296 = vld [vmem:[%s2292 + $0x18] sm:$0xff]
      %v2297 = vld [vmem:[%s2292 + $0x20] sm:$0xff]
      %v2298 = vld [vmem:[%s2292 + $0x28] sm:$0xff]
      %v2299 = vld [vmem:[%s2292 + $0x30] sm:$0xff]
      %v2300 = vld [vmem:[%s2292 + $0x38] sm:$0xff]
      %v2301 = vld [vmem:[%s2292 + $0x40] sm:$0xff]
      %v2302 = vld [vmem:[%s2292 + $0x48] sm:$0xff]
      %v2303 = vld [vmem:[%s2292 + $0x50] sm:$0xff]
      %v2304 = vld [vmem:[%s2292 + $0x58] sm:$0xff]
      %v2305 = vld [vmem:[%s2292 + $0x60] sm:$0xff]
      %v2306 = vld [vmem:[%s2292 + $0x68] sm:$0xff]
      %v2307 = vld [vmem:[%s2292 + $0x70] sm:$0xff]
      %v2308 = vld [vmem:[%s2292 + $0x78] sm:$0xff]
      %2309 = vmatprep.subr.mxu0 0.0
      %2310 = vmatpush1.msra.mxu0 %v2308
      %2311 = vmatprep.subr.mxu0 0.0
      %2312 = vmatpush1.msra.mxu0 %v2307
      %2313 = vmatprep.subr.mxu0 0.0
      %2314 = vmatpush1.msra.mxu0 %v2306
      %2315 = vmatprep.subr.mxu0 0.0
      %2316 = vmatpush1.msra.mxu0 %v2305
      %2317 = vmatprep.subr.mxu0 0.0
      %2318 = vmatpush1.msra.mxu0 %v2304
      %2319 = vmatprep.subr.mxu0 0.0
      %2320 = vmatpush1.msra.mxu0 %v2303
      %2321 = vmatprep.subr.mxu0 0.0
      %2322 = vmatpush1.msra.mxu0 %v2302
      %2323 = vmatprep.subr.mxu0 0.0
      %2324 = vmatpush1.msra.mxu0 %v2301
      %2325 = vmatprep.subr.mxu0 0.0
      %2326 = vmatpush1.msra.mxu0 %v2300
      %2327 = vmatprep.subr.mxu0 0.0
      %2328 = vmatpush1.msra.mxu0 %v2299
      %2329 = vmatprep.subr.mxu0 0.0
      %2330 = vmatpush1.msra.mxu0 %v2298
      %2331 = vmatprep.subr.mxu0 0.0
      %2332 = vmatpush1.msra.mxu0 %v2297
      %2333 = vmatprep.subr.mxu0 0.0
      %2334 = vmatpush1.msra.mxu0 %v2296
      %2335 = vmatprep.subr.mxu0 0.0
      %2336 = vmatpush1.msra.mxu0 %v2295
      %2337 = vmatprep.subr.mxu0 0.0
      %2338 = vmatpush1.msra.mxu0 %v2294
      %2339 = vmatprep.subr.mxu0 0.0
      %2340 = vmatpush1.msra.mxu0 %v2293
      %2341 = vmatprep.subr.mxu0 0.0
      %2342 = vmatpush2.msra.mxu0 0.0
      %2343 = vmatprep.subr.mxu0 0.0
      %2344 = vmatpush2.msra.mxu0 0.0
      %2345 = vmatprep.subr.mxu0 0.0
      %2346 = vmatpush2.msra.mxu0 0.0
      %2347 = vmatprep.subr.mxu0 0.0
      %2348 = vmatpush2.msra.mxu0 0.0
      %2349 = vmatprep.subr.mxu0 0.0
      %2350 = vmatpush2.msra.mxu0 0.0
      %2351 = vmatprep.subr.mxu0 0.0
      %2352 = vmatpush2.msra.mxu0 0.0
      %2353 = vmatprep.subr.mxu0 0.0
      %2354 = vmatpush2.msra.mxu0 0.0
      %2355 = vmatprep.subr.mxu0 0.0
      %2356 = vmatpush2.msra.mxu0 0.0
      %2357 = vmatprep.subr.mxu0 0.0
      %2358 = vmatpush2.msra.mxu0 0.0
      %2359 = vmatprep.subr.mxu0 0.0
      %2360 = vmatpush2.msra.mxu0 0.0
      %2361 = vmatprep.subr.mxu0 0.0
      %2362 = vmatpush2.msra.mxu0 0.0
      %2363 = vmatprep.subr.mxu0 0.0
      %2364 = vmatpush2.msra.mxu0 0.0
      %2365 = vmatprep.subr.mxu0 0.0
      %2366 = vmatpush2.msra.mxu0 0.0
      %2367 = vmatprep.subr.mxu0 0.0
      %2368 = vmatpush2.msra.mxu0 0.0
      %2369 = vmatprep.subr.mxu0 0.0
      %2370 = vmatpush2.msra.mxu0 0.0
      %2371 = vmatprep.subr.mxu0 0.0
      %2372 = vmatpush2.msra.mxu0 0.0
      %2373 = vmatprep.mubr.f32.mxu0 0.0
      %2374 = vmatmul.mubr.f32.gmra.mxu0 %v2260
      %v2375 = vpop.f32.mrf.mxu0
      %v2376 = vadd.f32 0.0, %v2375
      %v2377 = vpop.f32.mrf.mxu0
      %2378 = vmatprep.mubr.f32.mxu0 0.0
      %2379 = vmatmul.mubr.f32.gmra.mxu0 %v2261
      %v2380 = vpop.f32.mrf.mxu0
      %v2381 = vadd.f32 0.0, %v2380
      %v2382 = vpop.f32.mrf.mxu0
      %2383 = vmatprep.mubr.f32.mxu0 0.0
      %2384 = vmatmul.mubr.f32.gmra.mxu0 %v2262
      %v2385 = vpop.f32.mrf.mxu0
      %v2386 = vadd.f32 0.0, %v2385
      %v2387 = vpop.f32.mrf.mxu0
      %2388 = vmatprep.mubr.f32.mxu0 0.0
      %2389 = vmatmul.mubr.f32.gmra.mxu0 %v2263
      %v2390 = vpop.f32.mrf.mxu0
      %v2391 = vadd.f32 0.0, %v2390
      %v2392 = vpop.f32.mrf.mxu0
      %2393 = vmatprep.mubr.f32.mxu0 0.0
      %2394 = vmatmul.mubr.f32.gmra.mxu0 %v2264
      %v2395 = vpop.f32.mrf.mxu0
      %v2396 = vadd.f32 0.0, %v2395
      %v2397 = vpop.f32.mrf.mxu0
      %2398 = vmatprep.mubr.f32.mxu0 0.0
      %2399 = vmatmul.mubr.f32.gmra.mxu0 %v2265
      %v2400 = vpop.f32.mrf.mxu0
      %v2401 = vadd.f32 0.0, %v2400
      %v2402 = vpop.f32.mrf.mxu0
      %2403 = vmatprep.mubr.f32.mxu0 0.0
      %2404 = vmatmul.mubr.f32.gmra.mxu0 %v2266
      %v2405 = vpop.f32.mrf.mxu0
      %v2406 = vadd.f32 0.0, %v2405
      %v2407 = vpop.f32.mrf.mxu0
      %2408 = vmatprep.mubr.f32.mxu0 0.0
      %2409 = vmatmul.mubr.f32.gmra.mxu0 %v2267
      %v2410 = vpop.f32.mrf.mxu0
      %v2411 = vadd.f32 0.0, %v2410
      %v2412 = vpop.f32.mrf.mxu0
      %2413 = vmatprep.mubr.f32.mxu0 0.0
      %2414 = vmatmul.mubr.f32.gmra.mxu0 %v2268
      %v2415 = vpop.f32.mrf.mxu0
      %v2416 = vadd.f32 0.0, %v2415
      %v2417 = vpop.f32.mrf.mxu0
      %2418 = vmatprep.mubr.f32.mxu0 0.0
      %2419 = vmatmul.mubr.f32.gmra.mxu0 %v2269
      %v2420 = vpop.f32.mrf.mxu0
      %v2421 = vadd.f32 0.0, %v2420
      %v2422 = vpop.f32.mrf.mxu0
      %2423 = vmatprep.mubr.f32.mxu0 0.0
      %2424 = vmatmul.mubr.f32.gmra.mxu0 %v2270
      %v2425 = vpop.f32.mrf.mxu0
      %v2426 = vadd.f32 0.0, %v2425
      %v2427 = vpop.f32.mrf.mxu0
      %2428 = vmatprep.mubr.f32.mxu0 0.0
      %2429 = vmatmul.mubr.f32.gmra.mxu0 %v2271
      %v2430 = vpop.f32.mrf.mxu0
      %v2431 = vadd.f32 0.0, %v2430
      %v2432 = vpop.f32.mrf.mxu0
      %2433 = vmatprep.mubr.f32.mxu0 0.0
      %2434 = vmatmul.mubr.f32.gmra.mxu0 %v2272
      %v2435 = vpop.f32.mrf.mxu0
      %v2436 = vadd.f32 0.0, %v2435
      %v2437 = vpop.f32.mrf.mxu0
      %2438 = vmatprep.mubr.f32.mxu0 0.0
      %2439 = vmatmul.mubr.f32.gmra.mxu0 %v2273
      %v2440 = vpop.f32.mrf.mxu0
      %v2441 = vadd.f32 0.0, %v2440
      %v2442 = vpop.f32.mrf.mxu0
      %2443 = vmatprep.mubr.f32.mxu0 0.0
      %2444 = vmatmul.mubr.f32.gmra.mxu0 %v2274
      %v2445 = vpop.f32.mrf.mxu0
      %v2446 = vadd.f32 0.0, %v2445
      %v2447 = vpop.f32.mrf.mxu0
      %2448 = vmatprep.mubr.f32.mxu0 0.0
      %2449 = vmatmul.mubr.f32.gmra.mxu0 %v2275
      %v2450 = vpop.f32.mrf.mxu0
      %v2451 = vadd.f32 0.0, %v2450
      %v2452 = vpop.f32.mrf.mxu0
      %2453 = vmatprep.mubr.f32.mxu0 0.0
      %2454 = vmatmul.mubr.f32.gmra.mxu0 %v2276
      %v2455 = vpop.f32.mrf.mxu0
      %v2456 = vadd.f32 0.0, %v2455
      %v2457 = vpop.f32.mrf.mxu0
      %2458 = vmatprep.mubr.f32.mxu0 0.0
      %2459 = vmatmul.mubr.f32.gmra.mxu0 %v2277
      %v2460 = vpop.f32.mrf.mxu0
      %v2461 = vadd.f32 0.0, %v2460
      %v2462 = vpop.f32.mrf.mxu0
      %2463 = vmatprep.mubr.f32.mxu0 0.0
      %2464 = vmatmul.mubr.f32.gmra.mxu0 %v2278
      %v2465 = vpop.f32.mrf.mxu0
      %v2466 = vadd.f32 0.0, %v2465
      %v2467 = vpop.f32.mrf.mxu0
      %2468 = vmatprep.mubr.f32.mxu0 0.0
      %2469 = vmatmul.mubr.f32.gmra.mxu0 %v2279
      %v2470 = vpop.f32.mrf.mxu0
      %v2471 = vadd.f32 0.0, %v2470
      %v2472 = vpop.f32.mrf.mxu0
      %2473 = vmatprep.mubr.f32.mxu0 0.0
      %2474 = vmatmul.mubr.f32.gmra.mxu0 %v2280
      %v2475 = vpop.f32.mrf.mxu0
      %v2476 = vadd.f32 0.0, %v2475
      %v2477 = vpop.f32.mrf.mxu0
      %2478 = vmatprep.mubr.f32.mxu0 0.0
      %2479 = vmatmul.mubr.f32.gmra.mxu0 %v2281
      %v2480 = vpop.f32.mrf.mxu0
      %v2481 = vadd.f32 0.0, %v2480
      %v2482 = vpop.f32.mrf.mxu0
      %2483 = vmatprep.mubr.f32.mxu0 0.0
      %2484 = vmatmul.mubr.f32.gmra.mxu0 %v2282
      %v2485 = vpop.f32.mrf.mxu0
      %v2486 = vadd.f32 0.0, %v2485
      %v2487 = vpop.f32.mrf.mxu0
      %2488 = vmatprep.mubr.f32.mxu0 0.0
      %2489 = vmatmul.mubr.f32.gmra.mxu0 %v2283
      %v2490 = vpop.f32.mrf.mxu0
      %v2491 = vadd.f32 0.0, %v2490
      %v2492 = vpop.f32.mrf.mxu0
      %2493 = vmatprep.mubr.f32.mxu0 0.0
      %2494 = vmatmul.mubr.f32.gmra.mxu0 %v2284
      %v2495 = vpop.f32.mrf.mxu0
      %v2496 = vadd.f32 0.0, %v2495
      %v2497 = vpop.f32.mrf.mxu0
      %2498 = vmatprep.mubr.f32.mxu0 0.0
      %2499 = vmatmul.mubr.f32.gmra.mxu0 %v2285
      %v2500 = vpop.f32.mrf.mxu0
      %v2501 = vadd.f32 0.0, %v2500
      %v2502 = vpop.f32.mrf.mxu0
      %2503 = vmatprep.mubr.f32.mxu0 0.0
      %2504 = vmatmul.mubr.f32.gmra.mxu0 %v2286
      %v2505 = vpop.f32.mrf.mxu0
      %v2506 = vadd.f32 0.0, %v2505
      %v2507 = vpop.f32.mrf.mxu0
      %2508 = vmatprep.mubr.f32.mxu0 0.0
      %2509 = vmatmul.mubr.f32.gmra.mxu0 %v2287
      %v2510 = vpop.f32.mrf.mxu0
      %v2511 = vadd.f32 0.0, %v2510
      %v2512 = vpop.f32.mrf.mxu0
      %2513 = vmatprep.mubr.f32.mxu0 0.0
      %2514 = vmatmul.mubr.f32.gmra.mxu0 %v2288
      %v2515 = vpop.f32.mrf.mxu0
      %v2516 = vadd.f32 0.0, %v2515
      %v2517 = vpop.f32.mrf.mxu0
      %2518 = vmatprep.mubr.f32.mxu0 0.0
      %2519 = vmatmul.mubr.f32.gmra.mxu0 %v2289
      %v2520 = vpop.f32.mrf.mxu0
      %v2521 = vadd.f32 0.0, %v2520
      %v2522 = vpop.f32.mrf.mxu0
      %2523 = vmatprep.mubr.f32.mxu0 0.0
      %2524 = vmatmul.mubr.f32.gmra.mxu0 %v2290
      %v2525 = vpop.f32.mrf.mxu0
      %v2526 = vadd.f32 0.0, %v2525
      %v2527 = vpop.f32.mrf.mxu0
      %2528 = vmatprep.mubr.f32.mxu0 0.0
      %2529 = vmatmul.mubr.f32.gmra.mxu0 %v2291
      %v2530 = vpop.f32.mrf.mxu0
      %v2531 = vadd.f32 0.0, %v2530
      %v2532 = vpop.f32.mrf.mxu0
      %2533 = vdwg.mxu0
      %v2534 = vadd.f32 %v1104, %v2376
      %v2535 = vadd.f32 %v1109, %v2381
      %v2536 = vadd.f32 %v1114, %v2386
      %v2537 = vadd.f32 %v1119, %v2391
      %v2538 = vadd.f32 %v1124, %v2396
      %v2539 = vadd.f32 %v1129, %v2401
      %v2540 = vadd.f32 %v1134, %v2406
      %v2541 = vadd.f32 %v1139, %v2411
      %v2542 = vadd.f32 %v1144, %v2416
      %v2543 = vadd.f32 %v1149, %v2421
      %v2544 = vadd.f32 %v1154, %v2426
      %v2545 = vadd.f32 %v1159, %v2431
      %v2546 = vadd.f32 %v1164, %v2436
      %v2547 = vadd.f32 %v1169, %v2441
      %v2548 = vadd.f32 %v1174, %v2446
      %v2549 = vadd.f32 %v1179, %v2451
      %v2550 = vadd.f32 %v1184, %v2456
      %v2551 = vadd.f32 %v1189, %v2461
      %v2552 = vadd.f32 %v1194, %v2466
      %v2553 = vadd.f32 %v1199, %v2471
      %v2554 = vadd.f32 %v1204, %v2476
      %v2555 = vadd.f32 %v1209, %v2481
      %v2556 = vadd.f32 %v1214, %v2486
      %v2557 = vadd.f32 %v1219, %v2491
      %v2558 = vadd.f32 %v1224, %v2496
      %v2559 = vadd.f32 %v1229, %v2501
      %v2560 = vadd.f32 %v1234, %v2506
      %v2561 = vadd.f32 %v1239, %v2511
      %v2562 = vadd.f32 %v1244, %v2516
      %v2563 = vadd.f32 %v1249, %v2521
      %v2564 = vadd.f32 %v1254, %v2526
      %v2565 = vadd.f32 %v1259, %v2531
      %v2566 = vld [vmem:[#allocation2 + $0x28] sm:$0xff]
      %v2567 = vld [vmem:[#allocation2 + $0x30] sm:$0xff]
      %v2568 = vld [vmem:[#allocation2 + $0x38] sm:$0xff]
      %v2569 = vld [vmem:[#allocation2 + $0x40] sm:$0xff]
      %v2570 = vld [vmem:[#allocation2 + $0x48] sm:$0xff]
      %v2571 = vld [vmem:[#allocation2 + $0x50] sm:$0xff]
      %v2572 = vld [vmem:[#allocation2 + $0x58] sm:$0xff]
      %v2573 = vld [vmem:[#allocation2 + $0x60] sm:$0xff]
      %v2574 = vld [vmem:[#allocation2 + $0x68] sm:$0xff]
      %v2575 = vld [vmem:[#allocation2 + $0x70] sm:$0xff]
      %v2576 = vld [vmem:[#allocation2 + $0x78] sm:$0xff]
      %v2577 = vld [vmem:[#allocation2 + $0x80] sm:$0xff]
      %v2578 = vld [vmem:[#allocation2 + $0x88] sm:$0xff]
      %v2579 = vld [vmem:[#allocation2 + $0x90] sm:$0xff]
      %v2580 = vld [vmem:[#allocation2 + $0x98] sm:$0xff]
      %v2581 = vld [vmem:[#allocation2 + $0xa0] sm:$0xff]
      %v2582 = vld [vmem:[#allocation2 + $0xa8] sm:$0xff]
      %v2583 = vld [vmem:[#allocation2 + $0xb0] sm:$0xff]
      %v2584 = vld [vmem:[#allocation2 + $0xb8] sm:$0xff]
      %v2585 = vld [vmem:[#allocation2 + $0xc0] sm:$0xff]
      %v2586 = vld [vmem:[#allocation2 + $0xc8] sm:$0xff]
      %v2587 = vld [vmem:[#allocation2 + $0xd0] sm:$0xff]
      %v2588 = vld [vmem:[#allocation2 + $0xd8] sm:$0xff]
      %v2589 = vld [vmem:[#allocation2 + $0xe0] sm:$0xff]
      %v2590 = vld [vmem:[#allocation2 + $0xe8] sm:$0xff]
      %v2591 = vld [vmem:[#allocation2 + $0xf0] sm:$0xff]
      %v2592 = vld [vmem:[#allocation2 + $0xf8] sm:$0xff]
      %v2593 = vld [vmem:[#allocation2 + $0x100] sm:$0xff]
      %v2594 = vld [vmem:[#allocation2 + $0x108] sm:$0xff]
      %v2595 = vld [vmem:[#allocation2 + $0x110] sm:$0xff]
      %v2596 = vld [vmem:[#allocation2 + $0x118] sm:$0xff]
      %v2597 = vld [vmem:[#allocation2 + $0x120] sm:$0xff]
      %s2598 = scalar_lea.vmem %s3, 896
      %v2599 = vld [vmem:[%s2598] sm:$0xff]
      %v2600 = vld [vmem:[%s2598 + $0x8] sm:$0xff]
      %v2601 = vld [vmem:[%s2598 + $0x10] sm:$0xff]
      %v2602 = vld [vmem:[%s2598 + $0x18] sm:$0xff]
      %v2603 = vld [vmem:[%s2598 + $0x20] sm:$0xff]
      %v2604 = vld [vmem:[%s2598 + $0x28] sm:$0xff]
      %v2605 = vld [vmem:[%s2598 + $0x30] sm:$0xff]
      %v2606 = vld [vmem:[%s2598 + $0x38] sm:$0xff]
      %v2607 = vld [vmem:[%s2598 + $0x40] sm:$0xff]
      %v2608 = vld [vmem:[%s2598 + $0x48] sm:$0xff]
      %v2609 = vld [vmem:[%s2598 + $0x50] sm:$0xff]
      %v2610 = vld [vmem:[%s2598 + $0x58] sm:$0xff]
      %v2611 = vld [vmem:[%s2598 + $0x60] sm:$0xff]
      %v2612 = vld [vmem:[%s2598 + $0x68] sm:$0xff]
      %v2613 = vld [vmem:[%s2598 + $0x70] sm:$0xff]
      %v2614 = vld [vmem:[%s2598 + $0x78] sm:$0xff]
      %2615 = vmatprep.subr.mxu0 0.0
      %2616 = vmatpush1.msra.mxu0 %v2614
      %2617 = vmatprep.subr.mxu0 0.0
      %2618 = vmatpush1.msra.mxu0 %v2613
      %2619 = vmatprep.subr.mxu0 0.0
      %2620 = vmatpush1.msra.mxu0 %v2612
      %2621 = vmatprep.subr.mxu0 0.0
      %2622 = vmatpush1.msra.mxu0 %v2611
      %2623 = vmatprep.subr.mxu0 0.0
      %2624 = vmatpush1.msra.mxu0 %v2610
      %2625 = vmatprep.subr.mxu0 0.0
      %2626 = vmatpush1.msra.mxu0 %v2609
      %2627 = vmatprep.subr.mxu0 0.0
      %2628 = vmatpush1.msra.mxu0 %v2608
      %2629 = vmatprep.subr.mxu0 0.0
      %2630 = vmatpush1.msra.mxu0 %v2607
      %2631 = vmatprep.subr.mxu0 0.0
      %2632 = vmatpush1.msra.mxu0 %v2606
      %2633 = vmatprep.subr.mxu0 0.0
      %2634 = vmatpush1.msra.mxu0 %v2605
      %2635 = vmatprep.subr.mxu0 0.0
      %2636 = vmatpush1.msra.mxu0 %v2604
      %2637 = vmatprep.subr.mxu0 0.0
      %2638 = vmatpush1.msra.mxu0 %v2603
      %2639 = vmatprep.subr.mxu0 0.0
      %2640 = vmatpush1.msra.mxu0 %v2602
      %2641 = vmatprep.subr.mxu0 0.0
      %2642 = vmatpush1.msra.mxu0 %v2601
      %2643 = vmatprep.subr.mxu0 0.0
      %2644 = vmatpush1.msra.mxu0 %v2600
      %2645 = vmatprep.subr.mxu0 0.0
      %2646 = vmatpush1.msra.mxu0 %v2599
      %2647 = vmatprep.subr.mxu0 0.0
      %2648 = vmatpush2.msra.mxu0 0.0
      %2649 = vmatprep.subr.mxu0 0.0
      %2650 = vmatpush2.msra.mxu0 0.0
      %2651 = vmatprep.subr.mxu0 0.0
      %2652 = vmatpush2.msra.mxu0 0.0
      %2653 = vmatprep.subr.mxu0 0.0
      %2654 = vmatpush2.msra.mxu0 0.0
      %2655 = vmatprep.subr.mxu0 0.0
      %2656 = vmatpush2.msra.mxu0 0.0
      %2657 = vmatprep.subr.mxu0 0.0
      %2658 = vmatpush2.msra.mxu0 0.0
      %2659 = vmatprep.subr.mxu0 0.0
      %2660 = vmatpush2.msra.mxu0 0.0
      %2661 = vmatprep.subr.mxu0 0.0
      %2662 = vmatpush2.msra.mxu0 0.0
      %2663 = vmatprep.subr.mxu0 0.0
      %2664 = vmatpush2.msra.mxu0 0.0
      %2665 = vmatprep.subr.mxu0 0.0
      %2666 = vmatpush2.msra.mxu0 0.0
      %2667 = vmatprep.subr.mxu0 0.0
      %2668 = vmatpush2.msra.mxu0 0.0
      %2669 = vmatprep.subr.mxu0 0.0
      %2670 = vmatpush2.msra.mxu0 0.0
      %2671 = vmatprep.subr.mxu0 0.0
      %2672 = vmatpush2.msra.mxu0 0.0
      %2673 = vmatprep.subr.mxu0 0.0
      %2674 = vmatpush2.msra.mxu0 0.0
      %2675 = vmatprep.subr.mxu0 0.0
      %2676 = vmatpush2.msra.mxu0 0.0
      %2677 = vmatprep.subr.mxu0 0.0
      %2678 = vmatpush2.msra.mxu0 0.0
      %2679 = vmatprep.mubr.f32.mxu0 0.0
      %2680 = vmatmul.mubr.f32.gmra.mxu0 %v2566
      %v2681 = vpop.f32.mrf.mxu0
      %v2682 = vadd.f32 0.0, %v2681
      %v2683 = vpop.f32.mrf.mxu0
      %2684 = vmatprep.mubr.f32.mxu0 0.0
      %2685 = vmatmul.mubr.f32.gmra.mxu0 %v2567
      %v2686 = vpop.f32.mrf.mxu0
      %v2687 = vadd.f32 0.0, %v2686
      %v2688 = vpop.f32.mrf.mxu0
      %2689 = vmatprep.mubr.f32.mxu0 0.0
      %2690 = vmatmul.mubr.f32.gmra.mxu0 %v2568
      %v2691 = vpop.f32.mrf.mxu0
      %v2692 = vadd.f32 0.0, %v2691
      %v2693 = vpop.f32.mrf.mxu0
      %2694 = vmatprep.mubr.f32.mxu0 0.0
      %2695 = vmatmul.mubr.f32.gmra.mxu0 %v2569
      %v2696 = vpop.f32.mrf.mxu0
      %v2697 = vadd.f32 0.0, %v2696
      %v2698 = vpop.f32.mrf.mxu0
      %2699 = vmatprep.mubr.f32.mxu0 0.0
      %2700 = vmatmul.mubr.f32.gmra.mxu0 %v2570
      %v2701 = vpop.f32.mrf.mxu0
      %v2702 = vadd.f32 0.0, %v2701
      %v2703 = vpop.f32.mrf.mxu0
      %2704 = vmatprep.mubr.f32.mxu0 0.0
      %2705 = vmatmul.mubr.f32.gmra.mxu0 %v2571
      %v2706 = vpop.f32.mrf.mxu0
      %v2707 = vadd.f32 0.0, %v2706
      %v2708 = vpop.f32.mrf.mxu0
      %2709 = vmatprep.mubr.f32.mxu0 0.0
      %2710 = vmatmul.mubr.f32.gmra.mxu0 %v2572
      %v2711 = vpop.f32.mrf.mxu0
      %v2712 = vadd.f32 0.0, %v2711
      %v2713 = vpop.f32.mrf.mxu0
      %2714 = vmatprep.mubr.f32.mxu0 0.0
      %2715 = vmatmul.mubr.f32.gmra.mxu0 %v2573
      %v2716 = vpop.f32.mrf.mxu0
      %v2717 = vadd.f32 0.0, %v2716
      %v2718 = vpop.f32.mrf.mxu0
      %2719 = vmatprep.mubr.f32.mxu0 0.0
      %2720 = vmatmul.mubr.f32.gmra.mxu0 %v2574
      %v2721 = vpop.f32.mrf.mxu0
      %v2722 = vadd.f32 0.0, %v2721
      %v2723 = vpop.f32.mrf.mxu0
      %2724 = vmatprep.mubr.f32.mxu0 0.0
      %2725 = vmatmul.mubr.f32.gmra.mxu0 %v2575
      %v2726 = vpop.f32.mrf.mxu0
      %v2727 = vadd.f32 0.0, %v2726
      %v2728 = vpop.f32.mrf.mxu0
      %2729 = vmatprep.mubr.f32.mxu0 0.0
      %2730 = vmatmul.mubr.f32.gmra.mxu0 %v2576
      %v2731 = vpop.f32.mrf.mxu0
      %v2732 = vadd.f32 0.0, %v2731
      %v2733 = vpop.f32.mrf.mxu0
      %2734 = vmatprep.mubr.f32.mxu0 0.0
      %2735 = vmatmul.mubr.f32.gmra.mxu0 %v2577
      %v2736 = vpop.f32.mrf.mxu0
      %v2737 = vadd.f32 0.0, %v2736
      %v2738 = vpop.f32.mrf.mxu0
      %2739 = vmatprep.mubr.f32.mxu0 0.0
      %2740 = vmatmul.mubr.f32.gmra.mxu0 %v2578
      %v2741 = vpop.f32.mrf.mxu0
      %v2742 = vadd.f32 0.0, %v2741
      %v2743 = vpop.f32.mrf.mxu0
      %2744 = vmatprep.mubr.f32.mxu0 0.0
      %2745 = vmatmul.mubr.f32.gmra.mxu0 %v2579
      %v2746 = vpop.f32.mrf.mxu0
      %v2747 = vadd.f32 0.0, %v2746
      %v2748 = vpop.f32.mrf.mxu0
      %2749 = vmatprep.mubr.f32.mxu0 0.0
      %2750 = vmatmul.mubr.f32.gmra.mxu0 %v2580
      %v2751 = vpop.f32.mrf.mxu0
      %v2752 = vadd.f32 0.0, %v2751
      %v2753 = vpop.f32.mrf.mxu0
      %2754 = vmatprep.mubr.f32.mxu0 0.0
      %2755 = vmatmul.mubr.f32.gmra.mxu0 %v2581
      %v2756 = vpop.f32.mrf.mxu0
      %v2757 = vadd.f32 0.0, %v2756
      %v2758 = vpop.f32.mrf.mxu0
      %2759 = vmatprep.mubr.f32.mxu0 0.0
      %2760 = vmatmul.mubr.f32.gmra.mxu0 %v2582
      %v2761 = vpop.f32.mrf.mxu0
      %v2762 = vadd.f32 0.0, %v2761
      %v2763 = vpop.f32.mrf.mxu0
      %2764 = vmatprep.mubr.f32.mxu0 0.0
      %2765 = vmatmul.mubr.f32.gmra.mxu0 %v2583
      %v2766 = vpop.f32.mrf.mxu0
      %v2767 = vadd.f32 0.0, %v2766
      %v2768 = vpop.f32.mrf.mxu0
      %2769 = vmatprep.mubr.f32.mxu0 0.0
      %2770 = vmatmul.mubr.f32.gmra.mxu0 %v2584
      %v2771 = vpop.f32.mrf.mxu0
      %v2772 = vadd.f32 0.0, %v2771
      %v2773 = vpop.f32.mrf.mxu0
      %2774 = vmatprep.mubr.f32.mxu0 0.0
      %2775 = vmatmul.mubr.f32.gmra.mxu0 %v2585
      %v2776 = vpop.f32.mrf.mxu0
      %v2777 = vadd.f32 0.0, %v2776
      %v2778 = vpop.f32.mrf.mxu0
      %2779 = vmatprep.mubr.f32.mxu0 0.0
      %2780 = vmatmul.mubr.f32.gmra.mxu0 %v2586
      %v2781 = vpop.f32.mrf.mxu0
      %v2782 = vadd.f32 0.0, %v2781
      %v2783 = vpop.f32.mrf.mxu0
      %2784 = vmatprep.mubr.f32.mxu0 0.0
      %2785 = vmatmul.mubr.f32.gmra.mxu0 %v2587
      %v2786 = vpop.f32.mrf.mxu0
      %v2787 = vadd.f32 0.0, %v2786
      %v2788 = vpop.f32.mrf.mxu0
      %2789 = vmatprep.mubr.f32.mxu0 0.0
      %2790 = vmatmul.mubr.f32.gmra.mxu0 %v2588
      %v2791 = vpop.f32.mrf.mxu0
      %v2792 = vadd.f32 0.0, %v2791
      %v2793 = vpop.f32.mrf.mxu0
      %2794 = vmatprep.mubr.f32.mxu0 0.0
      %2795 = vmatmul.mubr.f32.gmra.mxu0 %v2589
      %v2796 = vpop.f32.mrf.mxu0
      %v2797 = vadd.f32 0.0, %v2796
      %v2798 = vpop.f32.mrf.mxu0
      %2799 = vmatprep.mubr.f32.mxu0 0.0
      %2800 = vmatmul.mubr.f32.gmra.mxu0 %v2590
      %v2801 = vpop.f32.mrf.mxu0
      %v2802 = vadd.f32 0.0, %v2801
      %v2803 = vpop.f32.mrf.mxu0
      %2804 = vmatprep.mubr.f32.mxu0 0.0
      %2805 = vmatmul.mubr.f32.gmra.mxu0 %v2591
      %v2806 = vpop.f32.mrf.mxu0
      %v2807 = vadd.f32 0.0, %v2806
      %v2808 = vpop.f32.mrf.mxu0
      %2809 = vmatprep.mubr.f32.mxu0 0.0
      %2810 = vmatmul.mubr.f32.gmra.mxu0 %v2592
      %v2811 = vpop.f32.mrf.mxu0
      %v2812 = vadd.f32 0.0, %v2811
      %v2813 = vpop.f32.mrf.mxu0
      %2814 = vmatprep.mubr.f32.mxu0 0.0
      %2815 = vmatmul.mubr.f32.gmra.mxu0 %v2593
      %v2816 = vpop.f32.mrf.mxu0
      %v2817 = vadd.f32 0.0, %v2816
      %v2818 = vpop.f32.mrf.mxu0
      %2819 = vmatprep.mubr.f32.mxu0 0.0
      %2820 = vmatmul.mubr.f32.gmra.mxu0 %v2594
      %v2821 = vpop.f32.mrf.mxu0
      %v2822 = vadd.f32 0.0, %v2821
      %v2823 = vpop.f32.mrf.mxu0
      %2824 = vmatprep.mubr.f32.mxu0 0.0
      %2825 = vmatmul.mubr.f32.gmra.mxu0 %v2595
      %v2826 = vpop.f32.mrf.mxu0
      %v2827 = vadd.f32 0.0, %v2826
      %v2828 = vpop.f32.mrf.mxu0
      %2829 = vmatprep.mubr.f32.mxu0 0.0
      %2830 = vmatmul.mubr.f32.gmra.mxu0 %v2596
      %v2831 = vpop.f32.mrf.mxu0
      %v2832 = vadd.f32 0.0, %v2831
      %v2833 = vpop.f32.mrf.mxu0
      %2834 = vmatprep.mubr.f32.mxu0 0.0
      %2835 = vmatmul.mubr.f32.gmra.mxu0 %v2597
      %v2836 = vpop.f32.mrf.mxu0
      %v2837 = vadd.f32 0.0, %v2836
      %v2838 = vpop.f32.mrf.mxu0
      %2839 = vdwg.mxu0
      %v2840 = vadd.f32 %v1603, %v2682
      %v2841 = vadd.f32 %v1608, %v2687
      %v2842 = vadd.f32 %v1613, %v2692
      %v2843 = vadd.f32 %v1618, %v2697
      %v2844 = vadd.f32 %v1623, %v2702
      %v2845 = vadd.f32 %v1628, %v2707
      %v2846 = vadd.f32 %v1633, %v2712
      %v2847 = vadd.f32 %v1638, %v2717
      %v2848 = vadd.f32 %v1643, %v2722
      %v2849 = vadd.f32 %v1648, %v2727
      %v2850 = vadd.f32 %v1653, %v2732
      %v2851 = vadd.f32 %v1658, %v2737
      %v2852 = vadd.f32 %v1663, %v2742
      %v2853 = vadd.f32 %v1668, %v2747
      %v2854 = vadd.f32 %v1673, %v2752
      %v2855 = vadd.f32 %v1678, %v2757
      %v2856 = vadd.f32 %v1683, %v2762
      %v2857 = vadd.f32 %v1688, %v2767
      %v2858 = vadd.f32 %v1693, %v2772
      %v2859 = vadd.f32 %v1698, %v2777
      %v2860 = vadd.f32 %v1703, %v2782
      %v2861 = vadd.f32 %v1708, %v2787
      %v2862 = vadd.f32 %v1713, %v2792
      %v2863 = vadd.f32 %v1718, %v2797
      %v2864 = vadd.f32 %v1723, %v2802
      %v2865 = vadd.f32 %v1728, %v2807
      %v2866 = vadd.f32 %v1733, %v2812
      %v2867 = vadd.f32 %v1738, %v2817
      %v2868 = vadd.f32 %v1743, %v2822
      %v2869 = vadd.f32 %v1748, %v2827
      %v2870 = vadd.f32 %v1753, %v2832
      %v2871 = vadd.f32 %v1758, %v2837
      %v2872 = vld [vmem:[#allocation2 + $0x29] sm:$0xff]
      %v2873 = vld [vmem:[#allocation2 + $0x31] sm:$0xff]
      %v2874 = vld [vmem:[#allocation2 + $0x39] sm:$0xff]
      %v2875 = vld [vmem:[#allocation2 + $0x41] sm:$0xff]
      %v2876 = vld [vmem:[#allocation2 + $0x49] sm:$0xff]
      %v2877 = vld [vmem:[#allocation2 + $0x51] sm:$0xff]
      %v2878 = vld [vmem:[#allocation2 + $0x59] sm:$0xff]
      %v2879 = vld [vmem:[#allocation2 + $0x61] sm:$0xff]
      %v2880 = vld [vmem:[#allocation2 + $0x69] sm:$0xff]
      %v2881 = vld [vmem:[#allocation2 + $0x71] sm:$0xff]
      %v2882 = vld [vmem:[#allocation2 + $0x79] sm:$0xff]
      %v2883 = vld [vmem:[#allocation2 + $0x81] sm:$0xff]
      %v2884 = vld [vmem:[#allocation2 + $0x89] sm:$0xff]
      %v2885 = vld [vmem:[#allocation2 + $0x91] sm:$0xff]
      %v2886 = vld [vmem:[#allocation2 + $0x99] sm:$0xff]
      %v2887 = vld [vmem:[#allocation2 + $0xa1] sm:$0xff]
      %v2888 = vld [vmem:[#allocation2 + $0xa9] sm:$0xff]
      %v2889 = vld [vmem:[#allocation2 + $0xb1] sm:$0xff]
      %v2890 = vld [vmem:[#allocation2 + $0xb9] sm:$0xff]
      %v2891 = vld [vmem:[#allocation2 + $0xc1] sm:$0xff]
      %v2892 = vld [vmem:[#allocation2 + $0xc9] sm:$0xff]
      %v2893 = vld [vmem:[#allocation2 + $0xd1] sm:$0xff]
      %v2894 = vld [vmem:[#allocation2 + $0xd9] sm:$0xff]
      %v2895 = vld [vmem:[#allocation2 + $0xe1] sm:$0xff]
      %v2896 = vld [vmem:[#allocation2 + $0xe9] sm:$0xff]
      %v2897 = vld [vmem:[#allocation2 + $0xf1] sm:$0xff]
      %v2898 = vld [vmem:[#allocation2 + $0xf9] sm:$0xff]
      %v2899 = vld [vmem:[#allocation2 + $0x101] sm:$0xff]
      %v2900 = vld [vmem:[#allocation2 + $0x109] sm:$0xff]
      %v2901 = vld [vmem:[#allocation2 + $0x111] sm:$0xff]
      %v2902 = vld [vmem:[#allocation2 + $0x119] sm:$0xff]
      %v2903 = vld [vmem:[#allocation2 + $0x121] sm:$0xff]
      %s2904 = scalar_lea.vmem %s3, 1024
      %v2905 = vld [vmem:[%s2904] sm:$0xff]
      %v2906 = vld [vmem:[%s2904 + $0x8] sm:$0xff]
      %v2907 = vld [vmem:[%s2904 + $0x10] sm:$0xff]
      %v2908 = vld [vmem:[%s2904 + $0x18] sm:$0xff]
      %v2909 = vld [vmem:[%s2904 + $0x20] sm:$0xff]
      %v2910 = vld [vmem:[%s2904 + $0x28] sm:$0xff]
      %v2911 = vld [vmem:[%s2904 + $0x30] sm:$0xff]
      %v2912 = vld [vmem:[%s2904 + $0x38] sm:$0xff]
      %v2913 = vld [vmem:[%s2904 + $0x40] sm:$0xff]
      %v2914 = vld [vmem:[%s2904 + $0x48] sm:$0xff]
      %v2915 = vld [vmem:[%s2904 + $0x50] sm:$0xff]
      %v2916 = vld [vmem:[%s2904 + $0x58] sm:$0xff]
      %v2917 = vld [vmem:[%s2904 + $0x60] sm:$0xff]
      %v2918 = vld [vmem:[%s2904 + $0x68] sm:$0xff]
      %v2919 = vld [vmem:[%s2904 + $0x70] sm:$0xff]
      %v2920 = vld [vmem:[%s2904 + $0x78] sm:$0xff]
      %2921 = vmatprep.subr.mxu0 0.0
      %2922 = vmatpush1.msra.mxu0 %v2920
      %2923 = vmatprep.subr.mxu0 0.0
      %2924 = vmatpush1.msra.mxu0 %v2919
      %2925 = vmatprep.subr.mxu0 0.0
      %2926 = vmatpush1.msra.mxu0 %v2918
      %2927 = vmatprep.subr.mxu0 0.0
      %2928 = vmatpush1.msra.mxu0 %v2917
      %2929 = vmatprep.subr.mxu0 0.0
      %2930 = vmatpush1.msra.mxu0 %v2916
      %2931 = vmatprep.subr.mxu0 0.0
      %2932 = vmatpush1.msra.mxu0 %v2915
      %2933 = vmatprep.subr.mxu0 0.0
      %2934 = vmatpush1.msra.mxu0 %v2914
      %2935 = vmatprep.subr.mxu0 0.0
      %2936 = vmatpush1.msra.mxu0 %v2913
      %2937 = vmatprep.subr.mxu0 0.0
      %2938 = vmatpush1.msra.mxu0 %v2912
      %2939 = vmatprep.subr.mxu0 0.0
      %2940 = vmatpush1.msra.mxu0 %v2911
      %2941 = vmatprep.subr.mxu0 0.0
      %2942 = vmatpush1.msra.mxu0 %v2910
      %2943 = vmatprep.subr.mxu0 0.0
      %2944 = vmatpush1.msra.mxu0 %v2909
      %2945 = vmatprep.subr.mxu0 0.0
      %2946 = vmatpush1.msra.mxu0 %v2908
      %2947 = vmatprep.subr.mxu0 0.0
      %2948 = vmatpush1.msra.mxu0 %v2907
      %2949 = vmatprep.subr.mxu0 0.0
      %2950 = vmatpush1.msra.mxu0 %v2906
      %2951 = vmatprep.subr.mxu0 0.0
      %2952 = vmatpush1.msra.mxu0 %v2905
      %2953 = vmatprep.subr.mxu0 0.0
      %2954 = vmatpush2.msra.mxu0 0.0
      %2955 = vmatprep.subr.mxu0 0.0
      %2956 = vmatpush2.msra.mxu0 0.0
      %2957 = vmatprep.subr.mxu0 0.0
      %2958 = vmatpush2.msra.mxu0 0.0
      %2959 = vmatprep.subr.mxu0 0.0
      %2960 = vmatpush2.msra.mxu0 0.0
      %2961 = vmatprep.subr.mxu0 0.0
      %2962 = vmatpush2.msra.mxu0 0.0
      %2963 = vmatprep.subr.mxu0 0.0
      %2964 = vmatpush2.msra.mxu0 0.0
      %2965 = vmatprep.subr.mxu0 0.0
      %2966 = vmatpush2.msra.mxu0 0.0
      %2967 = vmatprep.subr.mxu0 0.0
      %2968 = vmatpush2.msra.mxu0 0.0
      %2969 = vmatprep.subr.mxu0 0.0
      %2970 = vmatpush2.msra.mxu0 0.0
      %2971 = vmatprep.subr.mxu0 0.0
      %2972 = vmatpush2.msra.mxu0 0.0
      %2973 = vmatprep.subr.mxu0 0.0
      %2974 = vmatpush2.msra.mxu0 0.0
      %2975 = vmatprep.subr.mxu0 0.0
      %2976 = vmatpush2.msra.mxu0 0.0
      %2977 = vmatprep.subr.mxu0 0.0
      %2978 = vmatpush2.msra.mxu0 0.0
      %2979 = vmatprep.subr.mxu0 0.0
      %2980 = vmatpush2.msra.mxu0 0.0
      %2981 = vmatprep.subr.mxu0 0.0
      %2982 = vmatpush2.msra.mxu0 0.0
      %2983 = vmatprep.subr.mxu0 0.0
      %2984 = vmatpush2.msra.mxu0 0.0
      %2985 = vmatprep.mubr.f32.mxu0 0.0
      %2986 = vmatmul.mubr.f32.gmra.mxu0 %v2872
      %v2987 = vpop.f32.mrf.mxu0
      %v2988 = vadd.f32 0.0, %v2987
      %v2989 = vpop.f32.mrf.mxu0
      %2990 = vmatprep.mubr.f32.mxu0 0.0
      %2991 = vmatmul.mubr.f32.gmra.mxu0 %v2873
      %v2992 = vpop.f32.mrf.mxu0
      %v2993 = vadd.f32 0.0, %v2992
      %v2994 = vpop.f32.mrf.mxu0
      %2995 = vmatprep.mubr.f32.mxu0 0.0
      %2996 = vmatmul.mubr.f32.gmra.mxu0 %v2874
      %v2997 = vpop.f32.mrf.mxu0
      %v2998 = vadd.f32 0.0, %v2997
      %v2999 = vpop.f32.mrf.mxu0
      %3000 = vmatprep.mubr.f32.mxu0 0.0
      %3001 = vmatmul.mubr.f32.gmra.mxu0 %v2875
      %v3002 = vpop.f32.mrf.mxu0
      %v3003 = vadd.f32 0.0, %v3002
      %v3004 = vpop.f32.mrf.mxu0
      %3005 = vmatprep.mubr.f32.mxu0 0.0
      %3006 = vmatmul.mubr.f32.gmra.mxu0 %v2876
      %v3007 = vpop.f32.mrf.mxu0
      %v3008 = vadd.f32 0.0, %v3007
      %v3009 = vpop.f32.mrf.mxu0
      %3010 = vmatprep.mubr.f32.mxu0 0.0
      %3011 = vmatmul.mubr.f32.gmra.mxu0 %v2877
      %v3012 = vpop.f32.mrf.mxu0
      %v3013 = vadd.f32 0.0, %v3012
      %v3014 = vpop.f32.mrf.mxu0
      %3015 = vmatprep.mubr.f32.mxu0 0.0
      %3016 = vmatmul.mubr.f32.gmra.mxu0 %v2878
      %v3017 = vpop.f32.mrf.mxu0
      %v3018 = vadd.f32 0.0, %v3017
      %v3019 = vpop.f32.mrf.mxu0
      %3020 = vmatprep.mubr.f32.mxu0 0.0
      %3021 = vmatmul.mubr.f32.gmra.mxu0 %v2879
      %v3022 = vpop.f32.mrf.mxu0
      %v3023 = vadd.f32 0.0, %v3022
      %v3024 = vpop.f32.mrf.mxu0
      %3025 = vmatprep.mubr.f32.mxu0 0.0
      %3026 = vmatmul.mubr.f32.gmra.mxu0 %v2880
      %v3027 = vpop.f32.mrf.mxu0
      %v3028 = vadd.f32 0.0, %v3027
      %v3029 = vpop.f32.mrf.mxu0
      %3030 = vmatprep.mubr.f32.mxu0 0.0
      %3031 = vmatmul.mubr.f32.gmra.mxu0 %v2881
      %v3032 = vpop.f32.mrf.mxu0
      %v3033 = vadd.f32 0.0, %v3032
      %v3034 = vpop.f32.mrf.mxu0
      %3035 = vmatprep.mubr.f32.mxu0 0.0
      %3036 = vmatmul.mubr.f32.gmra.mxu0 %v2882
      %v3037 = vpop.f32.mrf.mxu0
      %v3038 = vadd.f32 0.0, %v3037
      %v3039 = vpop.f32.mrf.mxu0
      %3040 = vmatprep.mubr.f32.mxu0 0.0
      %3041 = vmatmul.mubr.f32.gmra.mxu0 %v2883
      %v3042 = vpop.f32.mrf.mxu0
      %v3043 = vadd.f32 0.0, %v3042
      %v3044 = vpop.f32.mrf.mxu0
      %3045 = vmatprep.mubr.f32.mxu0 0.0
      %3046 = vmatmul.mubr.f32.gmra.mxu0 %v2884
      %v3047 = vpop.f32.mrf.mxu0
      %v3048 = vadd.f32 0.0, %v3047
      %v3049 = vpop.f32.mrf.mxu0
      %3050 = vmatprep.mubr.f32.mxu0 0.0
      %3051 = vmatmul.mubr.f32.gmra.mxu0 %v2885
      %v3052 = vpop.f32.mrf.mxu0
      %v3053 = vadd.f32 0.0, %v3052
      %v3054 = vpop.f32.mrf.mxu0
      %3055 = vmatprep.mubr.f32.mxu0 0.0
      %3056 = vmatmul.mubr.f32.gmra.mxu0 %v2886
      %v3057 = vpop.f32.mrf.mxu0
      %v3058 = vadd.f32 0.0, %v3057
      %v3059 = vpop.f32.mrf.mxu0
      %3060 = vmatprep.mubr.f32.mxu0 0.0
      %3061 = vmatmul.mubr.f32.gmra.mxu0 %v2887
      %v3062 = vpop.f32.mrf.mxu0
      %v3063 = vadd.f32 0.0, %v3062
      %v3064 = vpop.f32.mrf.mxu0
      %3065 = vmatprep.mubr.f32.mxu0 0.0
      %3066 = vmatmul.mubr.f32.gmra.mxu0 %v2888
      %v3067 = vpop.f32.mrf.mxu0
      %v3068 = vadd.f32 0.0, %v3067
      %v3069 = vpop.f32.mrf.mxu0
      %3070 = vmatprep.mubr.f32.mxu0 0.0
      %3071 = vmatmul.mubr.f32.gmra.mxu0 %v2889
      %v3072 = vpop.f32.mrf.mxu0
      %v3073 = vadd.f32 0.0, %v3072
      %v3074 = vpop.f32.mrf.mxu0
      %3075 = vmatprep.mubr.f32.mxu0 0.0
      %3076 = vmatmul.mubr.f32.gmra.mxu0 %v2890
      %v3077 = vpop.f32.mrf.mxu0
      %v3078 = vadd.f32 0.0, %v3077
      %v3079 = vpop.f32.mrf.mxu0
      %3080 = vmatprep.mubr.f32.mxu0 0.0
      %3081 = vmatmul.mubr.f32.gmra.mxu0 %v2891
      %v3082 = vpop.f32.mrf.mxu0
      %v3083 = vadd.f32 0.0, %v3082
      %v3084 = vpop.f32.mrf.mxu0
      %3085 = vmatprep.mubr.f32.mxu0 0.0
      %3086 = vmatmul.mubr.f32.gmra.mxu0 %v2892
      %v3087 = vpop.f32.mrf.mxu0
      %v3088 = vadd.f32 0.0, %v3087
      %v3089 = vpop.f32.mrf.mxu0
      %3090 = vmatprep.mubr.f32.mxu0 0.0
      %3091 = vmatmul.mubr.f32.gmra.mxu0 %v2893
      %v3092 = vpop.f32.mrf.mxu0
      %v3093 = vadd.f32 0.0, %v3092
      %v3094 = vpop.f32.mrf.mxu0
      %3095 = vmatprep.mubr.f32.mxu0 0.0
      %3096 = vmatmul.mubr.f32.gmra.mxu0 %v2894
      %v3097 = vpop.f32.mrf.mxu0
      %v3098 = vadd.f32 0.0, %v3097
      %v3099 = vpop.f32.mrf.mxu0
      %3100 = vmatprep.mubr.f32.mxu0 0.0
      %3101 = vmatmul.mubr.f32.gmra.mxu0 %v2895
      %v3102 = vpop.f32.mrf.mxu0
      %v3103 = vadd.f32 0.0, %v3102
      %v3104 = vpop.f32.mrf.mxu0
      %3105 = vmatprep.mubr.f32.mxu0 0.0
      %3106 = vmatmul.mubr.f32.gmra.mxu0 %v2896
      %v3107 = vpop.f32.mrf.mxu0
      %v3108 = vadd.f32 0.0, %v3107
      %v3109 = vpop.f32.mrf.mxu0
      %3110 = vmatprep.mubr.f32.mxu0 0.0
      %3111 = vmatmul.mubr.f32.gmra.mxu0 %v2897
      %v3112 = vpop.f32.mrf.mxu0
      %v3113 = vadd.f32 0.0, %v3112
      %v3114 = vpop.f32.mrf.mxu0
      %3115 = vmatprep.mubr.f32.mxu0 0.0
      %3116 = vmatmul.mubr.f32.gmra.mxu0 %v2898
      %v3117 = vpop.f32.mrf.mxu0
      %v3118 = vadd.f32 0.0, %v3117
      %v3119 = vpop.f32.mrf.mxu0
      %3120 = vmatprep.mubr.f32.mxu0 0.0
      %3121 = vmatmul.mubr.f32.gmra.mxu0 %v2899
      %v3122 = vpop.f32.mrf.mxu0
      %v3123 = vadd.f32 0.0, %v3122
      %v3124 = vpop.f32.mrf.mxu0
      %3125 = vmatprep.mubr.f32.mxu0 0.0
      %3126 = vmatmul.mubr.f32.gmra.mxu0 %v2900
      %v3127 = vpop.f32.mrf.mxu0
      %v3128 = vadd.f32 0.0, %v3127
      %v3129 = vpop.f32.mrf.mxu0
      %3130 = vmatprep.mubr.f32.mxu0 0.0
      %3131 = vmatmul.mubr.f32.gmra.mxu0 %v2901
      %v3132 = vpop.f32.mrf.mxu0
      %v3133 = vadd.f32 0.0, %v3132
      %v3134 = vpop.f32.mrf.mxu0
      %3135 = vmatprep.mubr.f32.mxu0 0.0
      %3136 = vmatmul.mubr.f32.gmra.mxu0 %v2902
      %v3137 = vpop.f32.mrf.mxu0
      %v3138 = vadd.f32 0.0, %v3137
      %v3139 = vpop.f32.mrf.mxu0
      %3140 = vmatprep.mubr.f32.mxu0 0.0
      %3141 = vmatmul.mubr.f32.gmra.mxu0 %v2903
      %v3142 = vpop.f32.mrf.mxu0
      %v3143 = vadd.f32 0.0, %v3142
      %v3144 = vpop.f32.mrf.mxu0
      %3145 = vdwg.mxu0
      %v3146 = vadd.f32 %v2102, %v2988
      %v3147 = vadd.f32 %v2107, %v2993
      %v3148 = vadd.f32 %v2112, %v2998
      %v3149 = vadd.f32 %v2117, %v3003
      %v3150 = vadd.f32 %v2122, %v3008
      %v3151 = vadd.f32 %v2127, %v3013
      %v3152 = vadd.f32 %v2132, %v3018
      %v3153 = vadd.f32 %v2137, %v3023
      %v3154 = vadd.f32 %v2142, %v3028
      %v3155 = vadd.f32 %v2147, %v3033
      %v3156 = vadd.f32 %v2152, %v3038
      %v3157 = vadd.f32 %v2157, %v3043
      %v3158 = vadd.f32 %v2162, %v3048
      %v3159 = vadd.f32 %v2167, %v3053
      %v3160 = vadd.f32 %v2172, %v3058
      %v3161 = vadd.f32 %v2177, %v3063
      %v3162 = vadd.f32 %v2182, %v3068
      %v3163 = vadd.f32 %v2187, %v3073
      %v3164 = vadd.f32 %v2192, %v3078
      %v3165 = vadd.f32 %v2197, %v3083
      %v3166 = vadd.f32 %v2202, %v3088
      %v3167 = vadd.f32 %v2207, %v3093
      %v3168 = vadd.f32 %v2212, %v3098
      %v3169 = vadd.f32 %v2217, %v3103
      %v3170 = vadd.f32 %v2222, %v3108
      %v3171 = vadd.f32 %v2227, %v3113
      %v3172 = vadd.f32 %v2232, %v3118
      %v3173 = vadd.f32 %v2237, %v3123
      %v3174 = vadd.f32 %v2242, %v3128
      %v3175 = vadd.f32 %v2247, %v3133
      %v3176 = vadd.f32 %v2252, %v3138
      %v3177 = vadd.f32 %v2257, %v3143
      %v3178 = vlaneseq
      %v3179 = vshrl.u32 %v3178, 7
      %v3180 = vadd.s32 %v3179, 8
      %vm3181 = vcmp.ne.s32.totalorder %v3179, 0
      %vm3182 = vcmp.ne.s32.totalorder %v3180, 0
      %v3183 = vsel %vm3181, 1, 0
      %v3184 = vsel %vm3182, 1, 0
      %vm3185 = vcmp.eq.s32.totalorder %v3183, 1
      %vm3186 = vcmp.eq.s32.totalorder %v3184, 1
      %v3187 = vsel %vm3185, %v2534, 0.0
      %v3188 = vsel %vm3186, %v2535, 0.0
      %v3189 = vsel %vm3185, %v2536, 0.0
      %v3190 = vsel %vm3186, %v2537, 0.0
      %v3191 = vsel %vm3185, %v2538, 0.0
      %v3192 = vsel %vm3186, %v2539, 0.0
      %v3193 = vsel %vm3185, %v2540, 0.0
      %v3194 = vsel %vm3186, %v2541, 0.0
      %v3195 = vsel %vm3185, %v2542, 0.0
      %v3196 = vsel %vm3186, %v2543, 0.0
      %v3197 = vsel %vm3185, %v2544, 0.0
      %v3198 = vsel %vm3186, %v2545, 0.0
      %v3199 = vsel %vm3185, %v2546, 0.0
      %v3200 = vsel %vm3186, %v2547, 0.0
      %v3201 = vsel %vm3185, %v2548, 0.0
      %v3202 = vsel %vm3186, %v2549, 0.0
      %v3203 = vsel %vm3185, %v2550, 0.0
      %v3204 = vsel %vm3186, %v2551, 0.0
      %v3205 = vsel %vm3185, %v2552, 0.0
      %v3206 = vsel %vm3186, %v2553, 0.0
      %v3207 = vsel %vm3185, %v2554, 0.0
      %v3208 = vsel %vm3186, %v2555, 0.0
      %v3209 = vsel %vm3185, %v2556, 0.0
      %v3210 = vsel %vm3186, %v2557, 0.0
      %v3211 = vsel %vm3185, %v2558, 0.0
      %v3212 = vsel %vm3186, %v2559, 0.0
      %v3213 = vsel %vm3185, %v2560, 0.0
      %v3214 = vsel %vm3186, %v2561, 0.0
      %v3215 = vsel %vm3185, %v2562, 0.0
      %v3216 = vsel %vm3186, %v2563, 0.0
      %v3217 = vsel %vm3185, %v2564, 0.0
      %v3218 = vsel %vm3186, %v2565, 0.0
      %v3219 = vadd.f32 %v2840, %v3187
      %v3220 = vadd.f32 %v2841, %v3188
      %v3221 = vadd.f32 %v2842, %v3189
      %v3222 = vadd.f32 %v2843, %v3190
      %v3223 = vadd.f32 %v2844, %v3191
      %v3224 = vadd.f32 %v2845, %v3192
      %v3225 = vadd.f32 %v2846, %v3193
      %v3226 = vadd.f32 %v2847, %v3194
      %v3227 = vadd.f32 %v2848, %v3195
      %v3228 = vadd.f32 %v2849, %v3196
      %v3229 = vadd.f32 %v2850, %v3197
      %v3230 = vadd.f32 %v2851, %v3198
      %v3231 = vadd.f32 %v2852, %v3199
      %v3232 = vadd.f32 %v2853, %v3200
      %v3233 = vadd.f32 %v2854, %v3201
      %v3234 = vadd.f32 %v2855, %v3202
      %v3235 = vadd.f32 %v2856, %v3203
      %v3236 = vadd.f32 %v2857, %v3204
      %v3237 = vadd.f32 %v2858, %v3205
      %v3238 = vadd.f32 %v2859, %v3206
      %v3239 = vadd.f32 %v2860, %v3207
      %v3240 = vadd.f32 %v2861, %v3208
      %v3241 = vadd.f32 %v2862, %v3209
      %v3242 = vadd.f32 %v2863, %v3210
      %v3243 = vadd.f32 %v2864, %v3211
      %v3244 = vadd.f32 %v2865, %v3212
      %v3245 = vadd.f32 %v2866, %v3213
      %v3246 = vadd.f32 %v2867, %v3214
      %v3247 = vadd.f32 %v2868, %v3215
      %v3248 = vadd.f32 %v2869, %v3216
      %v3249 = vadd.f32 %v2870, %v3217
      %v3250 = vadd.f32 %v2871, %v3218
      %vm3251 = vcmp.ne.s32.totalorder %v3179, 15
      %vm3252 = vcmp.ne.s32.totalorder %v3180, 15
      %v3253 = vsel %vm3251, 1, 0
      %v3254 = vsel %vm3252, 1, 0
      %vm3255 = vcmp.eq.s32.totalorder %v3253, 1
      %vm3256 = vcmp.eq.s32.totalorder %v3254, 1
      %v3257 = vsel %vm3255, %v3146, 0.0
      %v3258 = vsel %vm3256, %v3147, 0.0
      %v3259 = vsel %vm3255, %v3148, 0.0
      %v3260 = vsel %vm3256, %v3149, 0.0
      %v3261 = vsel %vm3255, %v3150, 0.0
      %v3262 = vsel %vm3256, %v3151, 0.0
      %v3263 = vsel %vm3255, %v3152, 0.0
      %v3264 = vsel %vm3256, %v3153, 0.0
      %v3265 = vsel %vm3255, %v3154, 0.0
      %v3266 = vsel %vm3256, %v3155, 0.0
      %v3267 = vsel %vm3255, %v3156, 0.0
      %v3268 = vsel %vm3256, %v3157, 0.0
      %v3269 = vsel %vm3255, %v3158, 0.0
      %v3270 = vsel %vm3256, %v3159, 0.0
      %v3271 = vsel %vm3255, %v3160, 0.0
      %v3272 = vsel %vm3256, %v3161, 0.0
      %v3273 = vsel %vm3255, %v3162, 0.0
      %v3274 = vsel %vm3256, %v3163, 0.0
      %v3275 = vsel %vm3255, %v3164, 0.0
      %v3276 = vsel %vm3256, %v3165, 0.0
      %v3277 = vsel %vm3255, %v3166, 0.0
      %v3278 = vsel %vm3256, %v3167, 0.0
      %v3279 = vsel %vm3255, %v3168, 0.0
      %v3280 = vsel %vm3256, %v3169, 0.0
      %v3281 = vsel %vm3255, %v3170, 0.0
      %v3282 = vsel %vm3256, %v3171, 0.0
      %v3283 = vsel %vm3255, %v3172, 0.0
      %v3284 = vsel %vm3256, %v3173, 0.0
      %v3285 = vsel %vm3255, %v3174, 0.0
      %v3286 = vsel %vm3256, %v3175, 0.0
      %v3287 = vsel %vm3255, %v3176, 0.0
      %v3288 = vsel %vm3256, %v3177, 0.0
      %v3289 = vadd.f32 %v3219, %v3257
      %v3290 = vadd.f32 %v3220, %v3258
      %v3291 = vadd.f32 %v3221, %v3259
      %v3292 = vadd.f32 %v3222, %v3260
      %v3293 = vadd.f32 %v3223, %v3261
      %v3294 = vadd.f32 %v3224, %v3262
      %v3295 = vadd.f32 %v3225, %v3263
      %v3296 = vadd.f32 %v3226, %v3264
      %v3297 = vadd.f32 %v3227, %v3265
      %v3298 = vadd.f32 %v3228, %v3266
      %v3299 = vadd.f32 %v3229, %v3267
      %v3300 = vadd.f32 %v3230, %v3268
      %v3301 = vadd.f32 %v3231, %v3269
      %v3302 = vadd.f32 %v3232, %v3270
      %v3303 = vadd.f32 %v3233, %v3271
      %v3304 = vadd.f32 %v3234, %v3272
      %v3305 = vadd.f32 %v3235, %v3273
      %v3306 = vadd.f32 %v3236, %v3274
      %v3307 = vadd.f32 %v3237, %v3275
      %v3308 = vadd.f32 %v3238, %v3276
      %v3309 = vadd.f32 %v3239, %v3277
      %v3310 = vadd.f32 %v3240, %v3278
      %v3311 = vadd.f32 %v3241, %v3279
      %v3312 = vadd.f32 %v3242, %v3280
      %v3313 = vadd.f32 %v3243, %v3281
      %v3314 = vadd.f32 %v3244, %v3282
      %v3315 = vadd.f32 %v3245, %v3283
      %v3316 = vadd.f32 %v3246, %v3284
      %v3317 = vadd.f32 %v3247, %v3285
      %v3318 = vadd.f32 %v3248, %v3286
      %v3319 = vadd.f32 %v3249, %v3287
      %v3320 = vadd.f32 %v3250, %v3288
      %v3322 = vlaneseq
      %v3323 = vshrl.u32 %v3322, 7
      %v3324 = vsub.s32 0, %v3323
      %v3325 = vrot.slane %v312, %v3324
      %v3327 = vadd.f32 %v3289, %v3325
      %v3328 = vadd.f32 %v3290, %v3325
      %v3329 = vadd.f32 %v3291, %v3325
      %v3330 = vadd.f32 %v3292, %v3325
      %v3331 = vadd.f32 %v3293, %v3325
      %v3332 = vadd.f32 %v3294, %v3325
      %v3333 = vadd.f32 %v3295, %v3325
      %v3334 = vadd.f32 %v3296, %v3325
      %v3335 = vadd.f32 %v3297, %v3325
      %v3336 = vadd.f32 %v3298, %v3325
      %v3337 = vadd.f32 %v3299, %v3325
      %v3338 = vadd.f32 %v3300, %v3325
      %v3339 = vadd.f32 %v3301, %v3325
      %v3340 = vadd.f32 %v3302, %v3325
      %v3341 = vadd.f32 %v3303, %v3325
      %v3342 = vadd.f32 %v3304, %v3325
      %v3343 = vadd.f32 %v3305, %v3325
      %v3344 = vadd.f32 %v3306, %v3325
      %v3345 = vadd.f32 %v3307, %v3325
      %v3346 = vadd.f32 %v3308, %v3325
      %v3347 = vadd.f32 %v3309, %v3325
      %v3348 = vadd.f32 %v3310, %v3325
      %v3349 = vadd.f32 %v3311, %v3325
      %v3350 = vadd.f32 %v3312, %v3325
      %v3351 = vadd.f32 %v3313, %v3325
      %v3352 = vadd.f32 %v3314, %v3325
      %v3353 = vadd.f32 %v3315, %v3325
      %v3354 = vadd.f32 %v3316, %v3325
      %v3355 = vadd.f32 %v3317, %v3325
      %v3356 = vadd.f32 %v3318, %v3325
      %v3357 = vadd.f32 %v3319, %v3325
      %v3358 = vadd.f32 %v3320, %v3325
      %v3359 = vmax.f32 %v3327, 0.0
      %v3360 = vmax.f32 %v3328, 0.0
      %v3361 = vmax.f32 %v3329, 0.0
      %v3362 = vmax.f32 %v3330, 0.0
      %v3363 = vmax.f32 %v3331, 0.0
      %v3364 = vmax.f32 %v3332, 0.0
      %v3365 = vmax.f32 %v3333, 0.0
      %v3366 = vmax.f32 %v3334, 0.0
      %v3367 = vmax.f32 %v3335, 0.0
      %v3368 = vmax.f32 %v3336, 0.0
      %v3369 = vmax.f32 %v3337, 0.0
      %v3370 = vmax.f32 %v3338, 0.0
      %v3371 = vmax.f32 %v3339, 0.0
      %v3372 = vmax.f32 %v3340, 0.0
      %v3373 = vmax.f32 %v3341, 0.0
      %v3374 = vmax.f32 %v3342, 0.0
      %v3375 = vmax.f32 %v3343, 0.0
      %v3376 = vmax.f32 %v3344, 0.0
      %v3377 = vmax.f32 %v3345, 0.0
      %v3378 = vmax.f32 %v3346, 0.0
      %v3379 = vmax.f32 %v3347, 0.0
      %v3380 = vmax.f32 %v3348, 0.0
      %v3381 = vmax.f32 %v3349, 0.0
      %v3382 = vmax.f32 %v3350, 0.0
      %v3383 = vmax.f32 %v3351, 0.0
      %v3384 = vmax.f32 %v3352, 0.0
      %v3385 = vmax.f32 %v3353, 0.0
      %v3386 = vmax.f32 %v3354, 0.0
      %v3387 = vmax.f32 %v3355, 0.0
      %v3388 = vmax.f32 %v3356, 0.0
      %v3389 = vmax.f32 %v3357, 0.0
      %v3390 = vmax.f32 %v3358, 0.0
      %v3392 = vlaneseq
      %v3393 = vshrl.u32 %v3392, 7
      %v3394 = vsub.s32 0, %v3393
      %v3395 = vrot.slane %v313, %v3394
      %3397 = vmatprep.subr.mxu0 0.0
      %3398 = vmatpush1.msra.mxu0 %v310
      %3399 = vmatprep.subr.mxu0 0.0
      %3400 = vmatpush1.msra.mxu0 %v309
      %3401 = vmatprep.subr.mxu0 0.0
      %3402 = vmatpush1.msra.mxu0 %v308
      %3403 = vmatprep.subr.mxu0 0.0
      %3404 = vmatpush1.msra.mxu0 %v307
      %3405 = vmatprep.subr.mxu0 0.0
      %3406 = vmatpush1.msra.mxu0 %v306
      %3407 = vmatprep.subr.mxu0 0.0
      %3408 = vmatpush1.msra.mxu0 %v305
      %3409 = vmatprep.subr.mxu0 0.0
      %3410 = vmatpush1.msra.mxu0 %v304
      %3411 = vmatprep.subr.mxu0 0.0
      %3412 = vmatpush1.msra.mxu0 %v303
      %3413 = vmatprep.subr.mxu0 0.0
      %3414 = vmatpush1.msra.mxu0 %v302
      %3415 = vmatprep.subr.mxu0 0.0
      %3416 = vmatpush1.msra.mxu0 %v301
      %3417 = vmatprep.subr.mxu0 0.0
      %3418 = vmatpush1.msra.mxu0 %v300
      %3419 = vmatprep.subr.mxu0 0.0
      %3420 = vmatpush1.msra.mxu0 %v299
      %3421 = vmatprep.subr.mxu0 0.0
      %3422 = vmatpush1.msra.mxu0 %v298
      %3423 = vmatprep.subr.mxu0 0.0
      %3424 = vmatpush1.msra.mxu0 %v297
      %3425 = vmatprep.subr.mxu0 0.0
      %3426 = vmatpush1.msra.mxu0 %v296
      %3427 = vmatprep.subr.mxu0 0.0
      %3428 = vmatpush1.msra.mxu0 %v295
      %3429 = vmatprep.subr.mxu0 0.0
      %3430 = vmatpush2.msra.mxu0 0.0
      %3431 = vmatprep.subr.mxu0 0.0
      %3432 = vmatpush2.msra.mxu0 0.0
      %3433 = vmatprep.subr.mxu0 0.0
      %3434 = vmatpush2.msra.mxu0 0.0
      %3435 = vmatprep.subr.mxu0 0.0
      %3436 = vmatpush2.msra.mxu0 0.0
      %3437 = vmatprep.subr.mxu0 0.0
      %3438 = vmatpush2.msra.mxu0 0.0
      %3439 = vmatprep.subr.mxu0 0.0
      %3440 = vmatpush2.msra.mxu0 0.0
      %3441 = vmatprep.subr.mxu0 0.0
      %3442 = vmatpush2.msra.mxu0 0.0
      %3443 = vmatprep.subr.mxu0 0.0
      %3444 = vmatpush2.msra.mxu0 0.0
      %3445 = vmatprep.subr.mxu0 0.0
      %3446 = vmatpush2.msra.mxu0 0.0
      %3447 = vmatprep.subr.mxu0 0.0
      %3448 = vmatpush2.msra.mxu0 0.0
      %3449 = vmatprep.subr.mxu0 0.0
      %3450 = vmatpush2.msra.mxu0 0.0
      %3451 = vmatprep.subr.mxu0 0.0
      %3452 = vmatpush2.msra.mxu0 0.0
      %3453 = vmatprep.subr.mxu0 0.0
      %3454 = vmatpush2.msra.mxu0 0.0
      %3455 = vmatprep.subr.mxu0 0.0
      %3456 = vmatpush2.msra.mxu0 0.0
      %3457 = vmatprep.subr.mxu0 0.0
      %3458 = vmatpush2.msra.mxu0 0.0
      %3459 = vmatprep.subr.mxu0 0.0
      %3460 = vmatpush2.msra.mxu0 0.0
      %3461 = vmatprep.mubr.f32.mxu0 0.0
      %3462 = vmatmul.mubr.f32.gmra.mxu0 %v3359
      %v3463 = vpop.f32.mrf.mxu0
      %v3464 = vadd.f32 %v3395, %v3463
      %v3465 = vpop.f32.mrf.mxu0
      %3466 = vmatprep.mubr.f32.mxu0 0.0
      %3467 = vmatmul.mubr.f32.gmra.mxu0 %v3360
      %v3468 = vpop.f32.mrf.mxu0
      %v3469 = vadd.f32 %v3395, %v3468
      %v3470 = vpop.f32.mrf.mxu0
      %3471 = vmatprep.mubr.f32.mxu0 0.0
      %3472 = vmatmul.mubr.f32.gmra.mxu0 %v3361
      %v3473 = vpop.f32.mrf.mxu0
      %v3474 = vadd.f32 %v3395, %v3473
      %v3475 = vpop.f32.mrf.mxu0
      %3476 = vmatprep.mubr.f32.mxu0 0.0
      %3477 = vmatmul.mubr.f32.gmra.mxu0 %v3362
      %v3478 = vpop.f32.mrf.mxu0
      %v3479 = vadd.f32 %v3395, %v3478
      %v3480 = vpop.f32.mrf.mxu0
      %3481 = vmatprep.mubr.f32.mxu0 0.0
      %3482 = vmatmul.mubr.f32.gmra.mxu0 %v3363
      %v3483 = vpop.f32.mrf.mxu0
      %v3484 = vadd.f32 %v3395, %v3483
      %v3485 = vpop.f32.mrf.mxu0
      %3486 = vmatprep.mubr.f32.mxu0 0.0
      %3487 = vmatmul.mubr.f32.gmra.mxu0 %v3364
      %v3488 = vpop.f32.mrf.mxu0
      %v3489 = vadd.f32 %v3395, %v3488
      %v3490 = vpop.f32.mrf.mxu0
      %3491 = vmatprep.mubr.f32.mxu0 0.0
      %3492 = vmatmul.mubr.f32.gmra.mxu0 %v3365
      %v3493 = vpop.f32.mrf.mxu0
      %v3494 = vadd.f32 %v3395, %v3493
      %v3495 = vpop.f32.mrf.mxu0
      %3496 = vmatprep.mubr.f32.mxu0 0.0
      %3497 = vmatmul.mubr.f32.gmra.mxu0 %v3366
      %v3498 = vpop.f32.mrf.mxu0
      %v3499 = vadd.f32 %v3395, %v3498
      %v3500 = vpop.f32.mrf.mxu0
      %3501 = vmatprep.mubr.f32.mxu0 0.0
      %3502 = vmatmul.mubr.f32.gmra.mxu0 %v3367
      %v3503 = vpop.f32.mrf.mxu0
      %v3504 = vadd.f32 %v3395, %v3503
      %v3505 = vpop.f32.mrf.mxu0
      %3506 = vmatprep.mubr.f32.mxu0 0.0
      %3507 = vmatmul.mubr.f32.gmra.mxu0 %v3368
      %v3508 = vpop.f32.mrf.mxu0
      %v3509 = vadd.f32 %v3395, %v3508
      %v3510 = vpop.f32.mrf.mxu0
      %3511 = vmatprep.mubr.f32.mxu0 0.0
      %3512 = vmatmul.mubr.f32.gmra.mxu0 %v3369
      %v3513 = vpop.f32.mrf.mxu0
      %v3514 = vadd.f32 %v3395, %v3513
      %v3515 = vpop.f32.mrf.mxu0
      %3516 = vmatprep.mubr.f32.mxu0 0.0
      %3517 = vmatmul.mubr.f32.gmra.mxu0 %v3370
      %v3518 = vpop.f32.mrf.mxu0
      %v3519 = vadd.f32 %v3395, %v3518
      %v3520 = vpop.f32.mrf.mxu0
      %3521 = vmatprep.mubr.f32.mxu0 0.0
      %3522 = vmatmul.mubr.f32.gmra.mxu0 %v3371
      %v3523 = vpop.f32.mrf.mxu0
      %v3524 = vadd.f32 %v3395, %v3523
      %v3525 = vpop.f32.mrf.mxu0
      %3526 = vmatprep.mubr.f32.mxu0 0.0
      %3527 = vmatmul.mubr.f32.gmra.mxu0 %v3372
      %v3528 = vpop.f32.mrf.mxu0
      %v3529 = vadd.f32 %v3395, %v3528
      %v3530 = vpop.f32.mrf.mxu0
      %3531 = vmatprep.mubr.f32.mxu0 0.0
      %3532 = vmatmul.mubr.f32.gmra.mxu0 %v3373
      %v3533 = vpop.f32.mrf.mxu0
      %v3534 = vadd.f32 %v3395, %v3533
      %v3535 = vpop.f32.mrf.mxu0
      %3536 = vmatprep.mubr.f32.mxu0 0.0
      %3537 = vmatmul.mubr.f32.gmra.mxu0 %v3374
      %v3538 = vpop.f32.mrf.mxu0
      %v3539 = vadd.f32 %v3395, %v3538
      %v3540 = vpop.f32.mrf.mxu0
      %3541 = vmatprep.mubr.f32.mxu0 0.0
      %3542 = vmatmul.mubr.f32.gmra.mxu0 %v3375
      %v3543 = vpop.f32.mrf.mxu0
      %v3544 = vadd.f32 %v3395, %v3543
      %v3545 = vpop.f32.mrf.mxu0
      %3546 = vmatprep.mubr.f32.mxu0 0.0
      %3547 = vmatmul.mubr.f32.gmra.mxu0 %v3376
      %v3548 = vpop.f32.mrf.mxu0
      %v3549 = vadd.f32 %v3395, %v3548
      %v3550 = vpop.f32.mrf.mxu0
      %3551 = vmatprep.mubr.f32.mxu0 0.0
      %3552 = vmatmul.mubr.f32.gmra.mxu0 %v3377
      %v3553 = vpop.f32.mrf.mxu0
      %v3554 = vadd.f32 %v3395, %v3553
      %v3555 = vpop.f32.mrf.mxu0
      %3556 = vmatprep.mubr.f32.mxu0 0.0
      %3557 = vmatmul.mubr.f32.gmra.mxu0 %v3378
      %v3558 = vpop.f32.mrf.mxu0
      %v3559 = vadd.f32 %v3395, %v3558
      %v3560 = vpop.f32.mrf.mxu0
      %3561 = vmatprep.mubr.f32.mxu0 0.0
      %3562 = vmatmul.mubr.f32.gmra.mxu0 %v3379
      %v3563 = vpop.f32.mrf.mxu0
      %v3564 = vadd.f32 %v3395, %v3563
      %v3565 = vpop.f32.mrf.mxu0
      %3566 = vmatprep.mubr.f32.mxu0 0.0
      %3567 = vmatmul.mubr.f32.gmra.mxu0 %v3380
      %v3568 = vpop.f32.mrf.mxu0
      %v3569 = vadd.f32 %v3395, %v3568
      %v3570 = vpop.f32.mrf.mxu0
      %3571 = vmatprep.mubr.f32.mxu0 0.0
      %3572 = vmatmul.mubr.f32.gmra.mxu0 %v3381
      %v3573 = vpop.f32.mrf.mxu0
      %v3574 = vadd.f32 %v3395, %v3573
      %v3575 = vpop.f32.mrf.mxu0
      %3576 = vmatprep.mubr.f32.mxu0 0.0
      %3577 = vmatmul.mubr.f32.gmra.mxu0 %v3382
      %v3578 = vpop.f32.mrf.mxu0
      %v3579 = vadd.f32 %v3395, %v3578
      %v3580 = vpop.f32.mrf.mxu0
      %3581 = vmatprep.mubr.f32.mxu0 0.0
      %3582 = vmatmul.mubr.f32.gmra.mxu0 %v3383
      %v3583 = vpop.f32.mrf.mxu0
      %v3584 = vadd.f32 %v3395, %v3583
      %v3585 = vpop.f32.mrf.mxu0
      %3586 = vmatprep.mubr.f32.mxu0 0.0
      %3587 = vmatmul.mubr.f32.gmra.mxu0 %v3384
      %v3588 = vpop.f32.mrf.mxu0
      %v3589 = vadd.f32 %v3395, %v3588
      %v3590 = vpop.f32.mrf.mxu0
      %3591 = vmatprep.mubr.f32.mxu0 0.0
      %3592 = vmatmul.mubr.f32.gmra.mxu0 %v3385
      %v3593 = vpop.f32.mrf.mxu0
      %v3594 = vadd.f32 %v3395, %v3593
      %v3595 = vpop.f32.mrf.mxu0
      %3596 = vmatprep.mubr.f32.mxu0 0.0
      %3597 = vmatmul.mubr.f32.gmra.mxu0 %v3386
      %v3598 = vpop.f32.mrf.mxu0
      %v3599 = vadd.f32 %v3395, %v3598
      %v3600 = vpop.f32.mrf.mxu0
      %3601 = vmatprep.mubr.f32.mxu0 0.0
      %3602 = vmatmul.mubr.f32.gmra.mxu0 %v3387
      %v3603 = vpop.f32.mrf.mxu0
      %v3604 = vadd.f32 %v3395, %v3603
      %v3605 = vpop.f32.mrf.mxu0
      %3606 = vmatprep.mubr.f32.mxu0 0.0
      %3607 = vmatmul.mubr.f32.gmra.mxu0 %v3388
      %v3608 = vpop.f32.mrf.mxu0
      %v3609 = vadd.f32 %v3395, %v3608
      %v3610 = vpop.f32.mrf.mxu0
      %3611 = vmatprep.mubr.f32.mxu0 0.0
      %3612 = vmatmul.mubr.f32.gmra.mxu0 %v3389
      %v3613 = vpop.f32.mrf.mxu0
      %v3614 = vadd.f32 %v3395, %v3613
      %v3615 = vpop.f32.mrf.mxu0
      %3616 = vmatprep.mubr.f32.mxu0 0.0
      %3617 = vmatmul.mubr.f32.gmra.mxu0 %v3390
      %v3618 = vpop.f32.mrf.mxu0
      %v3619 = vadd.f32 %v3395, %v3618
      %v3620 = vpop.f32.mrf.mxu0
      %3621 = vdwg.mxu0
      %v3622 = vld [vmem:[%s273] sm:$0xff]
      %v3623 = vld [vmem:[%s273 + $0x8] sm:$0xff]
      %v3624 = vld [vmem:[%s273 + $0x10] sm:$0xff]
      %v3625 = vld [vmem:[%s273 + $0x18] sm:$0xff]
      %v3626 = vld [vmem:[%s273 + $0x20] sm:$0xff]
      %v3627 = vld [vmem:[%s273 + $0x28] sm:$0xff]
      %v3628 = vld [vmem:[%s273 + $0x30] sm:$0xff]
      %v3629 = vld [vmem:[%s273 + $0x38] sm:$0xff]
      %v3630 = vld [vmem:[%s273 + $0x40] sm:$0xff]
      %v3631 = vld [vmem:[%s273 + $0x48] sm:$0xff]
      %v3632 = vld [vmem:[%s273 + $0x50] sm:$0xff]
      %v3633 = vld [vmem:[%s273 + $0x58] sm:$0xff]
      %v3634 = vld [vmem:[%s273 + $0x60] sm:$0xff]
      %v3635 = vld [vmem:[%s273 + $0x68] sm:$0xff]
      %v3636 = vld [vmem:[%s273 + $0x70] sm:$0xff]
      %v3637 = vld [vmem:[%s273 + $0x78] sm:$0xff]
      %v3638 = vld [vmem:[%s273 + $0x80] sm:$0xff]
      %v3639 = vld [vmem:[%s273 + $0x88] sm:$0xff]
      %v3640 = vld [vmem:[%s273 + $0x90] sm:$0xff]
      %v3641 = vld [vmem:[%s273 + $0x98] sm:$0xff]
      %v3642 = vld [vmem:[%s273 + $0xa0] sm:$0xff]
      %v3643 = vld [vmem:[%s273 + $0xa8] sm:$0xff]
      %v3644 = vld [vmem:[%s273 + $0xb0] sm:$0xff]
      %v3645 = vld [vmem:[%s273 + $0xb8] sm:$0xff]
      %v3646 = vld [vmem:[%s273 + $0xc0] sm:$0xff]
      %v3647 = vld [vmem:[%s273 + $0xc8] sm:$0xff]
      %v3648 = vld [vmem:[%s273 + $0xd0] sm:$0xff]
      %v3649 = vld [vmem:[%s273 + $0xd8] sm:$0xff]
      %v3650 = vld [vmem:[%s273 + $0xe0] sm:$0xff]
      %v3651 = vld [vmem:[%s273 + $0xe8] sm:$0xff]
      %v3652 = vld [vmem:[%s273 + $0xf0] sm:$0xff]
      %v3653 = vld [vmem:[%s273 + $0xf8] sm:$0xff]
      %v3654 = vadd.f32 %v3464, %v3622
      %v3655 = vadd.f32 %v3469, %v3623
      %v3656 = vadd.f32 %v3474, %v3624
      %v3657 = vadd.f32 %v3479, %v3625
      %v3658 = vadd.f32 %v3484, %v3626
      %v3659 = vadd.f32 %v3489, %v3627
      %v3660 = vadd.f32 %v3494, %v3628
      %v3661 = vadd.f32 %v3499, %v3629
      %v3662 = vadd.f32 %v3504, %v3630
      %v3663 = vadd.f32 %v3509, %v3631
      %v3664 = vadd.f32 %v3514, %v3632
      %v3665 = vadd.f32 %v3519, %v3633
      %v3666 = vadd.f32 %v3524, %v3634
      %v3667 = vadd.f32 %v3529, %v3635
      %v3668 = vadd.f32 %v3534, %v3636
      %v3669 = vadd.f32 %v3539, %v3637
      %v3670 = vadd.f32 %v3544, %v3638
      %v3671 = vadd.f32 %v3549, %v3639
      %v3672 = vadd.f32 %v3554, %v3640
      %v3673 = vadd.f32 %v3559, %v3641
      %v3674 = vadd.f32 %v3564, %v3642
      %v3675 = vadd.f32 %v3569, %v3643
      %v3676 = vadd.f32 %v3574, %v3644
      %v3677 = vadd.f32 %v3579, %v3645
      %v3678 = vadd.f32 %v3584, %v3646
      %v3679 = vadd.f32 %v3589, %v3647
      %v3680 = vadd.f32 %v3594, %v3648
      %v3681 = vadd.f32 %v3599, %v3649
      %v3682 = vadd.f32 %v3604, %v3650
      %v3683 = vadd.f32 %v3609, %v3651
      %v3684 = vadd.f32 %v3614, %v3652
      %v3685 = vadd.f32 %v3619, %v3653
      %3686 = vst [vmem:[%s278] sm:$0xff] %v3654
      %3687 = vst [vmem:[%s278 + $0x8] sm:$0xff] %v3655
      %3688 = vst [vmem:[%s278 + $0x10] sm:$0xff] %v3656
      %3689 = vst [vmem:[%s278 + $0x18] sm:$0xff] %v3657
      %3690 = vst [vmem:[%s278 + $0x20] sm:$0xff] %v3658
      %3691 = vst [vmem:[%s278 + $0x28] sm:$0xff] %v3659
      %3692 = vst [vmem:[%s278 + $0x30] sm:$0xff] %v3660
      %3693 = vst [vmem:[%s278 + $0x38] sm:$0xff] %v3661
      %3694 = vst [vmem:[%s278 + $0x40] sm:$0xff] %v3662
      %3695 = vst [vmem:[%s278 + $0x48] sm:$0xff] %v3663
      %3696 = vst [vmem:[%s278 + $0x50] sm:$0xff] %v3664
      %3697 = vst [vmem:[%s278 + $0x58] sm:$0xff] %v3665
      %3698 = vst [vmem:[%s278 + $0x60] sm:$0xff] %v3666
      %3699 = vst [vmem:[%s278 + $0x68] sm:$0xff] %v3667
      %3700 = vst [vmem:[%s278 + $0x70] sm:$0xff] %v3668
      %3701 = vst [vmem:[%s278 + $0x78] sm:$0xff] %v3669
      %3702 = vst [vmem:[%s278 + $0x80] sm:$0xff] %v3670
      %3703 = vst [vmem:[%s278 + $0x88] sm:$0xff] %v3671
      %3704 = vst [vmem:[%s278 + $0x90] sm:$0xff] %v3672
      %3705 = vst [vmem:[%s278 + $0x98] sm:$0xff] %v3673
      %3706 = vst [vmem:[%s278 + $0xa0] sm:$0xff] %v3674
      %3707 = vst [vmem:[%s278 + $0xa8] sm:$0xff] %v3675
      %3708 = vst [vmem:[%s278 + $0xb0] sm:$0xff] %v3676
      %3709 = vst [vmem:[%s278 + $0xb8] sm:$0xff] %v3677
      %3710 = vst [vmem:[%s278 + $0xc0] sm:$0xff] %v3678
      %3711 = vst [vmem:[%s278 + $0xc8] sm:$0xff] %v3679
      %3712 = vst [vmem:[%s278 + $0xd0] sm:$0xff] %v3680
      %3713 = vst [vmem:[%s278 + $0xd8] sm:$0xff] %v3681
      %3714 = vst [vmem:[%s278 + $0xe0] sm:$0xff] %v3682
      %3715 = vst [vmem:[%s278 + $0xe8] sm:$0xff] %v3683
      %3716 = vst [vmem:[%s278 + $0xf0] sm:$0xff] %v3684
      %3717 = vst [vmem:[%s278 + $0xf8] sm:$0xff] %v3685
      %p3718 = scmp.lt.s32.totalorder %s18, 1
      %s3719 = scalar_select %p3718, %s18, 1
      %s3720 = smul.addr %s3719, 32
      %s3721 = smul.addr %s3720, 8
      %s3722 = scalar_lea.vmem %s7, %s3721
      // Predicated region
      $region49: #{_lambda_.1} parent=47 // pred_check
        %p3723 = pneg %p188
      $region50: #{_lambda_.1} parent=47 // pred_check_branch
        %3725 = sbr.rel (%p3723) target = $region52
      $region51: #{_lambda_.1} parent=47 // pred_region
        _
      $region52: #{_lambda_.1} parent=47 // pred_fallthru
        _
    $region48: #{_lambda_.1} parent=5 // pred_fallthru
      _
    %p3726 = scmp.le.s32.totalorder 2, %s13
    // Predicated region
    $region53: #{_lambda_.1} parent=5 // pred_check
      %p3727 = pneg %p3726
    $region54: #{_lambda_.1} parent=5 // pred_check_branch
      %3729 = sbr.rel (%p3727) target = $region56
    $region55: #{_lambda_.1} parent=5 // pred_region
      %s3730 = ssub.s32 %s13, 2
      // Predicated region
      $region57: #{_lambda_.1} parent=55 // pred_check
        %p3731 = pneg %p194
      $region58: #{_lambda_.1} parent=55 // pred_check_branch
        %3733 = sbr.rel (%p3731) target = $region60
      $region59: #{_lambda_.1} parent=55 // pred_region
        %p3734 = scmp.lt.s32.totalorder %s19, 1
        %s3735 = scalar_select %p3734, %s19, 1
        %s3736 = smul.addr %s3735, 32
        %s3737 = smul.addr %s3736, 8
        %s3738 = scalar_lea.vmem %s7, %s3737
      $region60: #{_lambda_.1} parent=55 // pred_fallthru
        _
    $region56: #{_lambda_.1} parent=5 // pred_fallthru
      _
  $region6: #{_lambda_.1} parent=0 // loop_footer
    %s17 = sadd.s32 1, %s13
  $region7: #{_lambda_.1} parent=0 // loop_footer_branch
    %12 = sbr.rel target = $region3
  $region8: #{_lambda_.1} parent=0 // loop_exit
    _

</llo_original>
